<compile_context>
chip_gen: v7x
topology: tpu7x:2x2x1
jax: 0.10.0
libtpu: 0.0.40
codegen_flags: <defaults>
</compile_context>

<pallas_src>
import functools
import math

import jax
import jax.numpy as jnp
from jax.experimental import pallas as pl
from jax.experimental.pallas import tpu as pltpu


LANE = 128          # lane tile (last dim)
MIN_SUBLANE = 8     # f32 sublane tile (second-to-last dim)


def _round_up(x, m):
    return ((x + m - 1) // m) * m


def _vmem_capacity_bytes():
    """Physical VMEM per core; conservative fallback if the query fails."""
    try:
        return int(pltpu.get_tpu_info().vmem_capacity_bytes)
    except Exception:
        return 64 * 1024 * 1024          # v7x per-TensorCore VMEM (smallest)


def _num_tensorcores():
    """Best-effort TensorCore-per-chip count; 1 (no batch sharding) if unknown."""
    try:
        info = pltpu.get_tpu_info()
        for attr in ("num_cores", "core_count", "num_tensorcores",
                     "tensorcore_count"):
            v = getattr(info, attr, None)
            if v is not None and int(v) > 0:
                return int(v)
        # Heuristic: v7x has 64 MiB VMEM per TC and 2 TCs/chip; v5e/v6e have
        # 128 MiB and a single TC.
        cap = int(getattr(info, "vmem_capacity_bytes", 0) or 0)
        if 0 < cap <= 64 * 1024 * 1024:
            return 2
    except Exception:
        pass
    return 1


# ----------------------------- Pallas kernel --------------------------------


def _lstm_recurrent_kernel(px_ref, wh_ref, out_ref, cT_ref, h_sc, c_sc, *,
                           chunk, seq_len, unroll):
    """Recurrent part of one LSTM layer.

    grid = (batch shards [parallel], time chunks [sequential / arbitrary])

    px_ref : (chunk, Bs, 4*Hp)  precomputed x @ Wi + (bi + bh) for this block
    wh_ref : (Hp, 4*Hp)         recurrent weights, gate-padded layout (f32/bf16)
    out_ref: (chunk, Bs, Hp)    per-step hidden states for this block
    cT_ref : (Bs, Hp)           final cell state for this batch shard
    h_sc/c_sc: VMEM carries that persist across the time-chunk axis.
    """
    ci = pl.program_id(1)
    n_chunks = pl.num_programs(1)

    @pl.when(ci == 0)
    def _():
        h_sc[...] = jnp.zeros_like(h_sc)
        c_sc[...] = jnp.zeros_like(c_sc)

    wh = wh_ref[...]                     # hoist weight load out of the step loop
    Hp = h_sc.shape[-1]

    def run_steps(masked):
        def step(i, carry):
            h = h_sc[...]
            c = c_sc[...]
            preact = px_ref[i].astype(jnp.float32) + jnp.dot(
                h.astype(wh.dtype), wh, preferred_element_type=jnp.float32)
            # Gate order matches the reference _cell_step: [i, f, o, g].
            # The three sigmoid gates are contiguous and lane-aligned (Hp is a
            # multiple of 128), so fuse them into a single EUP call.
            sig = jax.nn.sigmoid(preact[:, 0:3 * Hp])
            i_g = sig[:, 0 * Hp:1 * Hp]
            f_g = sig[:, 1 * Hp:2 * Hp]
            o_g = sig[:, 2 * Hp:3 * Hp]
            g_g = jnp.tanh(preact[:, 3 * Hp:4 * Hp])
            c_t = f_g * c + i_g * g_g
            h_t = o_g * jnp.tanh(c_t)
            if masked:                    # only traced for the padded tail chunk
                valid = (ci * chunk + i) < seq_len
                h_t = jnp.where(valid, h_t, h)
                c_t = jnp.where(valid, c_t, c)
            h_sc[...] = h_t
            c_sc[...] = c_t
            out_ref[i] = h_t              # lane-dense store into the chunk block
            return carry

        jax.lax.fori_loop(0, chunk, step, 0, unroll=min(unroll, chunk))

    if seq_len is None:                   # T divisible by chunk: never masked
        run_steps(False)
    else:                                 # masked epilogue only on last chunk
        @pl.when(ci < n_chunks - 1)
        def _():
            run_steps(False)

        @pl.when(ci == n_chunks - 1)
        def _():
            run_steps(True)

    @pl.when(ci == n_chunks - 1)
    def _():
        cT_ref[...] = c_sc[...]


# ----------------------------- layer wrapper --------------------------------


def _gate_pad_cols(w, d_out, hp):
    """(..., 4*d_out) -> (..., 4*hp), each gate zero-padded to hp lanes."""
    lead = w.shape[:-1]
    w = w.reshape(lead + (4, d_out))
    w = jnp.pad(w, [(0, 0)] * len(lead) + [(0, 0), (0, hp - d_out)])
    return w.reshape(lead + (4 * hp,))


def lstm_layer(x_p, wi, bi, wh, bh, d_out, *, time_chunk=32, unroll=8,
               weights_dtype=jnp.bfloat16, px_dtype=jnp.float32):
    """One LSTM layer (zero initial state) over the full sequence.

    x_p: (T, Bp, D_feat) f32, batch already padded; any feature lanes beyond
         wi.shape[0] are ignored (zero weight rows).
    wi: (D_in, 4*d_out), bi/bh: (1, 4*d_out), wh: (d_out, 4*d_out)
    returns: out_p (T, Bp, Hp), hT_p (Bp, Hp), cT_p (Bp, Hp)
    """
    T, Bp, D_feat = x_p.shape
    D_in = wi.shape[0]
    Hp = _round_up(d_out, LANE)

    # ---- hoisted input projection: one big MXU matmul over T*Bp rows -------
    wi_g = _gate_pad_cols(wi, d_out, Hp)                         # (D_in, 4*Hp)
    if D_feat > D_in:
        wi_g = jnp.pad(wi_g, ((0, D_feat - D_in), (0, 0)))       # zero rows
    b_g = _gate_pad_cols((bi + bh).reshape(-1), d_out, Hp)       # (4*Hp,)
    px = jnp.einsum("tbd,dg->tbg", x_p, wi_g,
                    preferred_element_type=jnp.float32) + b_g
    px = px.astype(px_dtype)                                     # (T, Bp, 4*Hp)

    # ---- recurrent weight: gate-padded layout, zero rows for padded lanes --
    wh_g = _gate_pad_cols(wh, d_out, Hp)                         # (d_out, 4*Hp)
    wh_g = jnp.pad(wh_g, ((0, Hp - d_out), (0, 0))).astype(weights_dtype)

    # ---- batch sharding across TensorCores (parallel leading grid axis) ----
    n_cores = _num_tensorcores()
    if n_cores > 1 and Bp % n_cores == 0 and (Bp // n_cores) % MIN_SUBLANE == 0:
        Bs = Bp // n_cores
    else:
        Bs = Bp
    n_bshards = Bp // Bs

    # ---- time chunk sized to a per-generation VMEM budget -------------------
    w_bytes = jnp.dtype(weights_dtype).itemsize
    px_bytes = jnp.dtype(px_dtype).itemsize
    capacity = _vmem_capacity_bytes()
    budget = int(0.7 * capacity)

    def footprint(c):
        wh_b = Hp * 4 * Hp * w_bytes                 # single-buffered weight
        px_b = 2 * c * Bs * 4 * Hp * px_bytes        # double-buffered input
        out_b = 2 * c * Bs * Hp * 4                  # double-buffered output
        misc = 2 * Bs * Hp * 4 + 2 * Bs * Hp * 4     # cT output + h/c carries
        return wh_b + px_b + out_b + misc

    chunk = max(1, min(T, time_chunk))
    while chunk > 1 and footprint(chunk) > budget:
        chunk //= 2

    T_pad = _round_up(T, chunk)
    if T_pad != T:
        px = jnp.pad(px, ((0, T_pad - T), (0, 0), (0, 0)))
    n_chunks = T_pad // chunk
    seq_len = T if T_pad != T else None   # mask only when padding was added

    vmem_limit = int(min(max(footprint(chunk) + (8 << 20), 32 << 20),
                         int(0.75 * capacity)))

    kernel = functools.partial(_lstm_recurrent_kernel, chunk=chunk,
                               seq_len=seq_len, unroll=unroll)
    out_shape = (
        jax.ShapeDtypeStruct((T_pad, Bp, Hp), jnp.float32),   # per-step hidden
        jax.ShapeDtypeStruct((Bp, Hp), jnp.float32),          # final cell state
    )
    compiler_params = pltpu.CompilerParams(
        dimension_semantics=("parallel", "arbitrary"),
        vmem_limit_bytes=vmem_limit,
    )

    def build(single_buffer_wh):
        if single_buffer_wh:
            # Constant-index weight block: single pipeline buffer is enough.
            wh_spec = pl.BlockSpec((Hp, 4 * Hp), lambda b, c: (0, 0),
                                   pipeline_mode=pl.Buffered(1))
        else:
            wh_spec = pl.BlockSpec((Hp, 4 * Hp), lambda b, c: (0, 0))
        grid_spec = pltpu.PrefetchScalarGridSpec(
            num_scalar_prefetch=0,
            grid=(n_bshards, n_chunks),
            in_specs=[
                pl.BlockSpec((chunk, Bs, 4 * Hp), lambda b, c: (c, b, 0)),
                wh_spec,
            ],
            out_specs=[
                pl.BlockSpec((chunk, Bs, Hp), lambda b, c: (c, b, 0)),
                pl.BlockSpec((Bs, Hp), lambda b, c: (b, 0)),
            ],
            scratch_shapes=[
                pltpu.VMEM((Bs, Hp), jnp.float32),   # h carry
                pltpu.VMEM((Bs, Hp), jnp.float32),   # c carry
            ],
        )
        return pl.pallas_call(kernel, grid_spec=grid_spec, out_shape=out_shape,
                              compiler_params=compiler_params)

    try:
        out_p, cT_p = build(True)(px, wh_g)
    except Exception:
        # Toolchain without pipeline_mode=pl.Buffered(1) support: fall back to
        # the default (double-buffered) weight block.
        out_p, cT_p = build(False)(px, wh_g)

    hT_p = out_p[T - 1]            # h after the last valid step == final hidden
    return out_p[:T], hT_p, cT_p


# --------------------------- AWD-LSTM wrapper --------------------------------


def init_awd_lstm_params(key, num_layers, input_size, hidden_size):
    """Parameters matching LSTMCell.reset_parameters:
    uniform(-1/sqrt(out), 1/sqrt(out)); weights stored pre-transposed (in, 4*out)."""
    params = []
    for l in range(num_layers):
        d_in = input_size if l == 0 else hidden_size
        d_out = hidden_size if l != num_layers - 1 else input_size
        std = 1.0 / math.sqrt(d_out)
        key, *ks = jax.random.split(key, 5)
        wi = jax.random.uniform(ks[0], (d_in, 4 * d_out), jnp.float32, -std, std)
        bi = jax.random.uniform(ks[1], (1, 4 * d_out), jnp.float32, -std, std)
        wh = jax.random.uniform(ks[2], (d_out, 4 * d_out), jnp.float32, -std, std)
        bh = jax.random.uniform(ks[3], (1, 4 * d_out), jnp.float32, -std, std)
        params.append(dict(wi=wi, bi=bi, wh=wh, bh=bh, d_out=d_out))
    return params


def awd_lstm_forward(inputs, params, *, time_chunk=32,
                     weights_dtype=jnp.bfloat16, px_dtype=jnp.float32):
    """AWD-LSTM forward (eval, unidirectional, hidden_state=None, input_ids=None).

    inputs: (T, B, input_size)
    returns (output, hidden_states, outputs_before_dropout) — mirroring PyTorch:
      output: (T, B, input_size)           (dropout is identity in eval)
      hidden_states: list of (h, c), each (1, B, out_l)
      outputs_before_dropout: list of (T, B, out_l)
    """
    T, B, _ = inputs.shape
    # bf16 recurrent operands pack 16 rows per sublane-packed vreg.
    bf16 = jnp.dtype(weights_dtype) == jnp.dtype(jnp.bfloat16)
    b_tile = 16 if bf16 else MIN_SUBLANE
    Bp = _round_up(B, b_tile)
    x_p = jnp.pad(inputs, ((0, 0), (0, Bp - B), (0, 0)))

    outputs_before_dropout = []
    hidden_states = []
    for p in params:
        d_out = p["d_out"]
        out_p, hT_p, cT_p = lstm_layer(
            x_p, p["wi"], p["bi"], p["wh"], p["bh"], d_out,
            time_chunk=time_chunk, weights_dtype=weights_dtype,
            px_dtype=px_dtype)
        outputs_before_dropout.append(out_p[:, :B, :d_out])
        hidden_states.append((hT_p[None, :B, :d_out], cT_p[None, :B, :d_out]))
        # LockedDropout between layers is identity in eval mode.
        x_p = out_p            # keep padded activations flowing into next layer
    output = outputs_before_dropout[-1]   # final LockedDropout identity in eval
    return output, hidden_states, outputs_before_dropout


# ------------------------------ pure-JAX reference ---------------------------


def _reference_layer(x, wi, bi, wh, bh, h0, c0):
    H = h0.shape[-1]

    def step(carry, xt):
        h, c = carry
        preact = xt @ wi + bi + h @ wh + bh
        i_g = jax.nn.sigmoid(preact[:, :H])
        f_g = jax.nn.sigmoid(preact[:, H:2 * H])
        o_g = jax.nn.sigmoid(preact[:, 2 * H:3 * H])
        g_g = jnp.tanh(preact[:, 3 * H:])
        c_t = f_g * c + i_g * g_g
        h_t = o_g * jnp.tanh(c_t)
        return (h_t, c_t), h_t

    (hT, cT), outs = jax.lax.scan(step, (h0, c0), x)
    return outs, hT, cT


def _reference_forward(inputs, params):
    x = inputs
    outs, hiddens = [], []
    B = inputs.shape[1]
    for p in params:
        H = p["d_out"]
        h0 = jnp.zeros((B, H), jnp.float32)
        c0 = jnp.zeros((B, H), jnp.float32)
        o, hT, cT = _reference_layer(x, p["wi"], p["bi"], p["wh"], p["bh"], h0, c0)
        outs.append(o)
        hiddens.append((hT, cT))
        x = o
    return x, outs, hiddens


# ------------------------------------ main -----------------------------------

if __name__ == "__main__":
    # Small config consistent with the module's forward:
    #   num_hidden_layers=2, input_size=32, hidden_size=64, seq_len=8, batch=2
    num_layers = 2
    input_size = 32
    hidden_size = 64
    T, B = 8, 2

    key = jax.random.PRNGKey(0)
    k_in, k_par = jax.random.split(key)
    inputs = jax.random.normal(k_in, (T, B, input_size), jnp.float32)
    params = init_awd_lstm_params(k_par, num_layers, input_size, hidden_size)

    ref_out, ref_layer_outs, ref_hiddens = _reference_forward(inputs, params)

    # --- strict check: f32 recurrent weights, tight tolerance ----------------
    out32, hs32, obd32 = awd_lstm_forward(inputs, params,
                                          weights_dtype=jnp.float32)
    out32 = jax.block_until_ready(out32)
    assert out32.shape == (T, B, input_size)
    assert len(hs32) == num_layers
    assert hs32[0][0].shape == (1, B, hidden_size)
    assert hs32[-1][0].shape == (1, B, input_size)
    assert jnp.allclose(out32, ref_out, atol=1e-4, rtol=1e-4)
    for got, want in zip(obd32, ref_layer_outs):
        assert jnp.allclose(got, want, atol=1e-4, rtol=1e-4)
    for (gh, gc), (rh, rc) in zip(hs32, ref_hiddens):
        assert jnp.allclose(gh[0], rh, atol=1e-4, rtol=1e-4)
        assert jnp.allclose(gc[0], rc, atol=1e-4, rtol=1e-4)

    # --- default optimized path: bf16 recurrent weights, loose tolerance -----
    out_bf, hs_bf, obd_bf = awd_lstm_forward(inputs, params)
    out_bf = jax.block_until_ready(out_bf)
    assert out_bf.shape == (T, B, input_size)
    assert jnp.allclose(out_bf, ref_out, atol=5e-2, rtol=5e-2)
    for got, want in zip(obd_bf, ref_layer_outs):
        assert jnp.allclose(got, want, atol=5e-2, rtol=5e-2)
    for (gh, gc), (rh, rc) in zip(hs_bf, ref_hiddens):
        assert jnp.allclose(gh[0], rh, atol=5e-2, rtol=5e-2)
        assert jnp.allclose(gc[0], rc, atol=5e-2, rtol=5e-2)

    print("KERNEL_OK")
</pallas_src>

<mosaic_0001>
module attributes {stable_mosaic.version = 11 : i64} {
  func.func @_lstm_recurrent_kernel(%arg0: i32, %arg1: i32, %arg2: memref<8x8x512xf32, #tpu.memory_space<vmem>>, %arg3: memref<128x512xf32, #tpu.memory_space<vmem>>, %arg4: memref<8x8x128xf32, #tpu.memory_space<vmem>>, %arg5: memref<8x128xf32, #tpu.memory_space<vmem>>, %arg6: memref<8x128xf32, #tpu.memory_space<vmem>>, %arg7: memref<8x128xf32, #tpu.memory_space<vmem>>) attributes {dimension_semantics = [#tpu.dimension_semantics<parallel>, #tpu.dimension_semantics<arbitrary>], iteration_bounds = array<i64: 1, 1>, scalar_prefetch = 0 : i64, scratch_operands = 2 : i64, tpu.core_type = #tpu.core_type<tc>, window_params = [{transform_indices = @transform_0, window_bounds = array<i64: 8, 8, 512>}, {pipeline_mode = #tpu.pipeline_mode<synchronous>, transform_indices = @transform_1, window_bounds = array<i64: 128, 512>}, {transform_indices = @transform_2, window_bounds = array<i64: 8, 8, 128>}, {transform_indices = @transform_3, window_bounds = array<i64: 8, 128>}]} {
    %c0_i32 = arith.constant 0 : i32
    %0 = arith.cmpi eq, %arg1, %c0_i32 : i32
    %1 = arith.extui %0 : i1 to i32
    %c0_i32_0 = arith.constant 0 : i32
    %2 = arith.cmpi ne, %1, %c0_i32_0 : i32
    scf.if %2 {
      %cst_116 = arith.constant 0.000000e+00 : f32
      %239 = vector.broadcast %cst_116 : f32 to vector<8x128xf32>
      %c0_117 = arith.constant 0 : index
      %c0_118 = arith.constant 0 : index
      %240 = vector.load %arg6[%c0_117, %c0_118] : memref<8x128xf32, #tpu.memory_space<vmem>>, vector<8x128xf32>
      tpu.vector_store %arg6[%c0_117, %c0_118], %239 {strides = array<i32>} : memref<8x128xf32, #tpu.memory_space<vmem>>, vector<8x128xf32>,
      %cst_119 = arith.constant 0.000000e+00 : f32
      %241 = vector.broadcast %cst_119 : f32 to vector<8x128xf32>
      %c0_120 = arith.constant 0 : index
      %c0_121 = arith.constant 0 : index
      %242 = vector.load %arg7[%c0_120, %c0_121] : memref<8x128xf32, #tpu.memory_space<vmem>>, vector<8x128xf32>
      tpu.vector_store %arg7[%c0_120, %c0_121], %241 {strides = array<i32>} : memref<8x128xf32, #tpu.memory_space<vmem>>, vector<8x128xf32>,
    } else {
    }
    %c0 = arith.constant 0 : index
    %c0_1 = arith.constant 0 : index
    %3 = vector.load %arg3[%c0, %c0_1] : memref<128x512xf32, #tpu.memory_space<vmem>>, vector<128x512xf32>
    %c0_i32_2 = arith.constant 0 : i32
    %c0_3 = arith.constant 0 : index
    %c0_4 = arith.constant 0 : index
    %4 = vector.load %arg6[%c0_3, %c0_4] : memref<8x128xf32, #tpu.memory_space<vmem>>, vector<8x128xf32>
    %c0_5 = arith.constant 0 : index
    %c0_6 = arith.constant 0 : index
    %5 = vector.load %arg7[%c0_5, %c0_6] : memref<8x128xf32, #tpu.memory_space<vmem>>, vector<8x128xf32>
    %6 = arith.index_cast %c0_i32_2 : i32 to index
    %c0_7 = arith.constant 0 : index
    %c0_8 = arith.constant 0 : index
    %7 = vector.load %arg2[%6, %c0_7, %c0_8] : memref<8x8x512xf32, #tpu.memory_space<vmem>>, vector<1x8x512xf32>
    %8 = vector.shape_cast %7 : vector<1x8x512xf32> to vector<8x512xf32>
    %cst = arith.constant dense<0.000000e+00> : vector<8x512xf32>
    %9 = tpu.matmul %4, %3, %cst {dimension_numbers = #tpu.dot_dimension_numbers<[1], [0], [0], [1], [0, 0, 1, 1], [], []>} : vector<8x128xf32>, vector<128x512xf32>, vector<8x512xf32> -> vector<8x512xf32>
    %10 = arith.addf %8, %9 : vector<8x512xf32>
    %11 = vector.extract_strided_slice %10 {offsets = [0, 0], sizes = [8, 384], strides = [1, 1]} : vector<8x512xf32> to vector<8x384xf32>
    %12 = arith.negf %11 : vector<8x384xf32>
    %13 = math.exp %12 : vector<8x384xf32>
    %cst_9 = arith.constant 1.000000e+00 : f32
    %14 = vector.broadcast %cst_9 : f32 to vector<8x384xf32>
    %15 = arith.addf %14, %13 : vector<8x384xf32>
    %16 = arith.divf %14, %15 : vector<8x384xf32>
    %17 = vector.extract_strided_slice %16 {offsets = [0, 0], sizes = [8, 128], strides = [1, 1]} : vector<8x384xf32> to vector<8x128xf32>
    %18 = vector.extract_strided_slice %16 {offsets = [0, 128], sizes = [8, 128], strides = [1, 1]} : vector<8x384xf32> to vector<8x128xf32>
    %19 = vector.extract_strided_slice %16 {offsets = [0, 256], sizes = [8, 128], strides = [1, 1]} : vector<8x384xf32> to vector<8x128xf32>
    %20 = vector.extract_strided_slice %10 {offsets = [0, 384], sizes = [8, 128], strides = [1, 1]} : vector<8x512xf32> to vector<8x128xf32>
    %21 = math.tanh %20 : vector<8x128xf32>
    %22 = arith.mulf %18, %5 : vector<8x128xf32>
    %23 = arith.mulf %17, %21 : vector<8x128xf32>
    %24 = arith.addf %22, %23 : vector<8x128xf32>
    %25 = math.tanh %24 : vector<8x128xf32>
    %26 = arith.mulf %19, %25 : vector<8x128xf32>
    %c0_10 = arith.constant 0 : index
    %c0_11 = arith.constant 0 : index
    %27 = vector.load %arg6[%c0_10, %c0_11] : memref<8x128xf32, #tpu.memory_space<vmem>>, vector<8x128xf32>
    tpu.vector_store %arg6[%c0_10, %c0_11], %26 {strides = array<i32>} : memref<8x128xf32, #tpu.memory_space<vmem>>, vector<8x128xf32>,
    %c0_12 = arith.constant 0 : index
    %c0_13 = arith.constant 0 : index
    %28 = vector.load %arg7[%c0_12, %c0_13] : memref<8x128xf32, #tpu.memory_space<vmem>>, vector<8x128xf32>
    tpu.vector_store %arg7[%c0_12, %c0_13], %24 {strides = array<i32>} : memref<8x128xf32, #tpu.memory_space<vmem>>, vector<8x128xf32>,
    %29 = arith.index_cast %c0_i32_2 : i32 to index
    %c0_14 = arith.constant 0 : index
    %c0_15 = arith.constant 0 : index
    %30 = vector.load %arg4[%29, %c0_14, %c0_15] : memref<8x8x128xf32, #tpu.memory_space<vmem>>, vector<1x8x128xf32>
    %31 = vector.shape_cast %30 : vector<1x8x128xf32> to vector<8x128xf32>
    %32 = vector.shape_cast %26 : vector<8x128xf32> to vector<1x8x128xf32>
    tpu.vector_store %arg4[%29, %c0_14, %c0_15], %32 {strides = array<i32>} : memref<8x8x128xf32, #tpu.memory_space<vmem>>, vector<1x8x128xf32>,
    %c1_i32 = arith.constant 1 : i32
    %c0_16 = arith.constant 0 : index
    %c0_17 = arith.constant 0 : index
    %33 = vector.load %arg6[%c0_16, %c0_17] : memref<8x128xf32, #tpu.memory_space<vmem>>, vector<8x128xf32>
    %c0_18 = arith.constant 0 : index
    %c0_19 = arith.constant 0 : index
    %34 = vector.load %arg7[%c0_18, %c0_19] : memref<8x128xf32, #tpu.memory_space<vmem>>, vector<8x128xf32>
    %35 = arith.index_cast %c1_i32 : i32 to index
    %c0_20 = arith.constant 0 : index
    %c0_21 = arith.constant 0 : index
    %36 = vector.load %arg2[%35, %c0_20, %c0_21] : memref<8x8x512xf32, #tpu.memory_space<vmem>>, vector<1x8x512xf32>
    %37 = vector.shape_cast %36 : vector<1x8x512xf32> to vector<8x512xf32>
    %cst_22 = arith.constant dense<0.000000e+00> : vector<8x512xf32>
    %38 = tpu.matmul %33, %3, %cst_22 {dimension_numbers = #tpu.dot_dimension_numbers<[1], [0], [0], [1], [0, 0, 1, 1], [], []>} : vector<8x128xf32>, vector<128x512xf32>, vector<8x512xf32> -> vector<8x512xf32>
    %39 = arith.addf %37, %38 : vector<8x512xf32>
    %40 = vector.extract_strided_slice %39 {offsets = [0, 0], sizes = [8, 384], strides = [1, 1]} : vector<8x512xf32> to vector<8x384xf32>
    %41 = arith.negf %40 : vector<8x384xf32>
    %42 = math.exp %41 : vector<8x384xf32>
    %cst_23 = arith.constant 1.000000e+00 : f32
    %43 = vector.broadcast %cst_23 : f32 to vector<8x384xf32>
    %44 = arith.addf %43, %42 : vector<8x384xf32>
    %45 = arith.divf %43, %44 : vector<8x384xf32>
    %46 = vector.extract_strided_slice %45 {offsets = [0, 0], sizes = [8, 128], strides = [1, 1]} : vector<8x384xf32> to vector<8x128xf32>
    %47 = vector.extract_strided_slice %45 {offsets = [0, 128], sizes = [8, 128], strides = [1, 1]} : vector<8x384xf32> to vector<8x128xf32>
    %48 = vector.extract_strided_slice %45 {offsets = [0, 256], sizes = [8, 128], strides = [1, 1]} : vector<8x384xf32> to vector<8x128xf32>
    %49 = vector.extract_strided_slice %39 {offsets = [0, 384], sizes = [8, 128], strides = [1, 1]} : vector<8x512xf32> to vector<8x128xf32>
    %50 = math.tanh %49 : vector<8x128xf32>
    %51 = arith.mulf %47, %34 : vector<8x128xf32>
    %52 = arith.mulf %46, %50 : vector<8x128xf32>
    %53 = arith.addf %51, %52 : vector<8x128xf32>
    %54 = math.tanh %53 : vector<8x128xf32>
    %55 = arith.mulf %48, %54 : vector<8x128xf32>
    %c0_24 = arith.constant 0 : index
    %c0_25 = arith.constant 0 : index
    %56 = vector.load %arg6[%c0_24, %c0_25] : memref<8x128xf32, #tpu.memory_space<vmem>>, vector<8x128xf32>
    tpu.vector_store %arg6[%c0_24, %c0_25], %55 {strides = array<i32>} : memref<8x128xf32, #tpu.memory_space<vmem>>, vector<8x128xf32>,
    %c0_26 = arith.constant 0 : index
    %c0_27 = arith.constant 0 : index
    %57 = vector.load %arg7[%c0_26, %c0_27] : memref<8x128xf32, #tpu.memory_space<vmem>>, vector<8x128xf32>
    tpu.vector_store %arg7[%c0_26, %c0_27], %53 {strides = array<i32>} : memref<8x128xf32, #tpu.memory_space<vmem>>, vector<8x128xf32>,
    %58 = arith.index_cast %c1_i32 : i32 to index
    %c0_28 = arith.constant 0 : index
    %c0_29 = arith.constant 0 : index
    %59 = vector.load %arg4[%58, %c0_28, %c0_29] : memref<8x8x128xf32, #tpu.memory_space<vmem>>, vector<1x8x128xf32>
    %60 = vector.shape_cast %59 : vector<1x8x128xf32> to vector<8x128xf32>
    %61 = vector.shape_cast %55 : vector<8x128xf32> to vector<1x8x128xf32>
    tpu.vector_store %arg4[%58, %c0_28, %c0_29], %61 {strides = array<i32>} : memref<8x8x128xf32, #tpu.memory_space<vmem>>, vector<1x8x128xf32>,
    %c2_i32 = arith.constant 2 : i32
    %c0_30 = arith.constant 0 : index
    %c0_31 = arith.constant 0 : index
    %62 = vector.load %arg6[%c0_30, %c0_31] : memref<8x128xf32, #tpu.memory_space<vmem>>, vector<8x128xf32>
    %c0_32 = arith.constant 0 : index
    %c0_33 = arith.constant 0 : index
    %63 = vector.load %arg7[%c0_32, %c0_33] : memref<8x128xf32, #tpu.memory_space<vmem>>, vector<8x128xf32>
    %64 = arith.index_cast %c2_i32 : i32 to index
    %c0_34 = arith.constant 0 : index
    %c0_35 = arith.constant 0 : index
    %65 = vector.load %arg2[%64, %c0_34, %c0_35] : memref<8x8x512xf32, #tpu.memory_space<vmem>>, vector<1x8x512xf32>
    %66 = vector.shape_cast %65 : vector<1x8x512xf32> to vector<8x512xf32>
    %cst_36 = arith.constant dense<0.000000e+00> : vector<8x512xf32>
    %67 = tpu.matmul %62, %3, %cst_36 {dimension_numbers = #tpu.dot_dimension_numbers<[1], [0], [0], [1], [0, 0, 1, 1], [], []>} : vector<8x128xf32>, vector<128x512xf32>, vector<8x512xf32> -> vector<8x512xf32>
    %68 = arith.addf %66, %67 : vector<8x512xf32>
    %69 = vector.extract_strided_slice %68 {offsets = [0, 0], sizes = [8, 384], strides = [1, 1]} : vector<8x512xf32> to vector<8x384xf32>
    %70 = arith.negf %69 : vector<8x384xf32>
    %71 = math.exp %70 : vector<8x384xf32>
    %cst_37 = arith.constant 1.000000e+00 : f32
    %72 = vector.broadcast %cst_37 : f32 to vector<8x384xf32>
    %73 = arith.addf %72, %71 : vector<8x384xf32>
    %74 = arith.divf %72, %73 : vector<8x384xf32>
    %75 = vector.extract_strided_slice %74 {offsets = [0, 0], sizes = [8, 128], strides = [1, 1]} : vector<8x384xf32> to vector<8x128xf32>
    %76 = vector.extract_strided_slice %74 {offsets = [0, 128], sizes = [8, 128], strides = [1, 1]} : vector<8x384xf32> to vector<8x128xf32>
    %77 = vector.extract_strided_slice %74 {offsets = [0, 256], sizes = [8, 128], strides = [1, 1]} : vector<8x384xf32> to vector<8x128xf32>
    %78 = vector.extract_strided_slice %68 {offsets = [0, 384], sizes = [8, 128], strides = [1, 1]} : vector<8x512xf32> to vector<8x128xf32>
    %79 = math.tanh %78 : vector<8x128xf32>
    %80 = arith.mulf %76, %63 : vector<8x128xf32>
    %81 = arith.mulf %75, %79 : vector<8x128xf32>
    %82 = arith.addf %80, %81 : vector<8x128xf32>
    %83 = math.tanh %82 : vector<8x128xf32>
    %84 = arith.mulf %77, %83 : vector<8x128xf32>
    %c0_38 = arith.constant 0 : index
    %c0_39 = arith.constant 0 : index
    %85 = vector.load %arg6[%c0_38, %c0_39] : memref<8x128xf32, #tpu.memory_space<vmem>>, vector<8x128xf32>
    tpu.vector_store %arg6[%c0_38, %c0_39], %84 {strides = array<i32>} : memref<8x128xf32, #tpu.memory_space<vmem>>, vector<8x128xf32>,
    %c0_40 = arith.constant 0 : index
    %c0_41 = arith.constant 0 : index
    %86 = vector.load %arg7[%c0_40, %c0_41] : memref<8x128xf32, #tpu.memory_space<vmem>>, vector<8x128xf32>
    tpu.vector_store %arg7[%c0_40, %c0_41], %82 {strides = array<i32>} : memref<8x128xf32, #tpu.memory_space<vmem>>, vector<8x128xf32>,
    %87 = arith.index_cast %c2_i32 : i32 to index
    %c0_42 = arith.constant 0 : index
    %c0_43 = arith.constant 0 : index
    %88 = vector.load %arg4[%87, %c0_42, %c0_43] : memref<8x8x128xf32, #tpu.memory_space<vmem>>, vector<1x8x128xf32>
    %89 = vector.shape_cast %88 : vector<1x8x128xf32> to vector<8x128xf32>
    %90 = vector.shape_cast %84 : vector<8x128xf32> to vector<1x8x128xf32>
    tpu.vector_store %arg4[%87, %c0_42, %c0_43], %90 {strides = array<i32>} : memref<8x8x128xf32, #tpu.memory_space<vmem>>, vector<1x8x128xf32>,
    %c3_i32 = arith.constant 3 : i32
    %c0_44 = arith.constant 0 : index
    %c0_45 = arith.constant 0 : index
    %91 = vector.load %arg6[%c0_44, %c0_45] : memref<8x128xf32, #tpu.memory_space<vmem>>, vector<8x128xf32>
    %c0_46 = arith.constant 0 : index
    %c0_47 = arith.constant 0 : index
    %92 = vector.load %arg7[%c0_46, %c0_47] : memref<8x128xf32, #tpu.memory_space<vmem>>, vector<8x128xf32>
    %93 = arith.index_cast %c3_i32 : i32 to index
    %c0_48 = arith.constant 0 : index
    %c0_49 = arith.constant 0 : index
    %94 = vector.load %arg2[%93, %c0_48, %c0_49] : memref<8x8x512xf32, #tpu.memory_space<vmem>>, vector<1x8x512xf32>
    %95 = vector.shape_cast %94 : vector<1x8x512xf32> to vector<8x512xf32>
    %cst_50 = arith.constant dense<0.000000e+00> : vector<8x512xf32>
    %96 = tpu.matmul %91, %3, %cst_50 {dimension_numbers = #tpu.dot_dimension_numbers<[1], [0], [0], [1], [0, 0, 1, 1], [], []>} : vector<8x128xf32>, vector<128x512xf32>, vector<8x512xf32> -> vector<8x512xf32>
    %97 = arith.addf %95, %96 : vector<8x512xf32>
    %98 = vector.extract_strided_slice %97 {offsets = [0, 0], sizes = [8, 384], strides = [1, 1]} : vector<8x512xf32> to vector<8x384xf32>
    %99 = arith.negf %98 : vector<8x384xf32>
    %100 = math.exp %99 : vector<8x384xf32>
    %cst_51 = arith.constant 1.000000e+00 : f32
    %101 = vector.broadcast %cst_51 : f32 to vector<8x384xf32>
    %102 = arith.addf %101, %100 : vector<8x384xf32>
    %103 = arith.divf %101, %102 : vector<8x384xf32>
    %104 = vector.extract_strided_slice %103 {offsets = [0, 0], sizes = [8, 128], strides = [1, 1]} : vector<8x384xf32> to vector<8x128xf32>
    %105 = vector.extract_strided_slice %103 {offsets = [0, 128], sizes = [8, 128], strides = [1, 1]} : vector<8x384xf32> to vector<8x128xf32>
    %106 = vector.extract_strided_slice %103 {offsets = [0, 256], sizes = [8, 128], strides = [1, 1]} : vector<8x384xf32> to vector<8x128xf32>
    %107 = vector.extract_strided_slice %97 {offsets = [0, 384], sizes = [8, 128], strides = [1, 1]} : vector<8x512xf32> to vector<8x128xf32>
    %108 = math.tanh %107 : vector<8x128xf32>
    %109 = arith.mulf %105, %92 : vector<8x128xf32>
    %110 = arith.mulf %104, %108 : vector<8x128xf32>
    %111 = arith.addf %109, %110 : vector<8x128xf32>
    %112 = math.tanh %111 : vector<8x128xf32>
    %113 = arith.mulf %106, %112 : vector<8x128xf32>
    %c0_52 = arith.constant 0 : index
    %c0_53 = arith.constant 0 : index
    %114 = vector.load %arg6[%c0_52, %c0_53] : memref<8x128xf32, #tpu.memory_space<vmem>>, vector<8x128xf32>
    tpu.vector_store %arg6[%c0_52, %c0_53], %113 {strides = array<i32>} : memref<8x128xf32, #tpu.memory_space<vmem>>, vector<8x128xf32>,
    %c0_54 = arith.constant 0 : index
    %c0_55 = arith.constant 0 : index
    %115 = vector.load %arg7[%c0_54, %c0_55] : memref<8x128xf32, #tpu.memory_space<vmem>>, vector<8x128xf32>
    tpu.vector_store %arg7[%c0_54, %c0_55], %111 {strides = array<i32>} : memref<8x128xf32, #tpu.memory_space<vmem>>, vector<8x128xf32>,
    %116 = arith.index_cast %c3_i32 : i32 to index
    %c0_56 = arith.constant 0 : index
    %c0_57 = arith.constant 0 : index
    %117 = vector.load %arg4[%116, %c0_56, %c0_57] : memref<8x8x128xf32, #tpu.memory_space<vmem>>, vector<1x8x128xf32>
    %118 = vector.shape_cast %117 : vector<1x8x128xf32> to vector<8x128xf32>
    %119 = vector.shape_cast %113 : vector<8x128xf32> to vector<1x8x128xf32>
    tpu.vector_store %arg4[%116, %c0_56, %c0_57], %119 {strides = array<i32>} : memref<8x8x128xf32, #tpu.memory_space<vmem>>, vector<1x8x128xf32>,
    %c4_i32 = arith.constant 4 : i32
    %c0_58 = arith.constant 0 : index
    %c0_59 = arith.constant 0 : index
    %120 = vector.load %arg6[%c0_58, %c0_59] : memref<8x128xf32, #tpu.memory_space<vmem>>, vector<8x128xf32>
    %c0_60 = arith.constant 0 : index
    %c0_61 = arith.constant 0 : index
    %121 = vector.load %arg7[%c0_60, %c0_61] : memref<8x128xf32, #tpu.memory_space<vmem>>, vector<8x128xf32>
    %122 = arith.index_cast %c4_i32 : i32 to index
    %c0_62 = arith.constant 0 : index
    %c0_63 = arith.constant 0 : index
    %123 = vector.load %arg2[%122, %c0_62, %c0_63] : memref<8x8x512xf32, #tpu.memory_space<vmem>>, vector<1x8x512xf32>
    %124 = vector.shape_cast %123 : vector<1x8x512xf32> to vector<8x512xf32>
    %cst_64 = arith.constant dense<0.000000e+00> : vector<8x512xf32>
    %125 = tpu.matmul %120, %3, %cst_64 {dimension_numbers = #tpu.dot_dimension_numbers<[1], [0], [0], [1], [0, 0, 1, 1], [], []>} : vector<8x128xf32>, vector<128x512xf32>, vector<8x512xf32> -> vector<8x512xf32>
    %126 = arith.addf %124, %125 : vector<8x512xf32>
    %127 = vector.extract_strided_slice %126 {offsets = [0, 0], sizes = [8, 384], strides = [1, 1]} : vector<8x512xf32> to vector<8x384xf32>
    %128 = arith.negf %127 : vector<8x384xf32>
    %129 = math.exp %128 : vector<8x384xf32>
    %cst_65 = arith.constant 1.000000e+00 : f32
    %130 = vector.broadcast %cst_65 : f32 to vector<8x384xf32>
    %131 = arith.addf %130, %129 : vector<8x384xf32>
    %132 = arith.divf %130, %131 : vector<8x384xf32>
    %133 = vector.extract_strided_slice %132 {offsets = [0, 0], sizes = [8, 128], strides = [1, 1]} : vector<8x384xf32> to vector<8x128xf32>
    %134 = vector.extract_strided_slice %132 {offsets = [0, 128], sizes = [8, 128], strides = [1, 1]} : vector<8x384xf32> to vector<8x128xf32>
    %135 = vector.extract_strided_slice %132 {offsets = [0, 256], sizes = [8, 128], strides = [1, 1]} : vector<8x384xf32> to vector<8x128xf32>
    %136 = vector.extract_strided_slice %126 {offsets = [0, 384], sizes = [8, 128], strides = [1, 1]} : vector<8x512xf32> to vector<8x128xf32>
    %137 = math.tanh %136 : vector<8x128xf32>
    %138 = arith.mulf %134, %121 : vector<8x128xf32>
    %139 = arith.mulf %133, %137 : vector<8x128xf32>
    %140 = arith.addf %138, %139 : vector<8x128xf32>
    %141 = math.tanh %140 : vector<8x128xf32>
    %142 = arith.mulf %135, %141 : vector<8x128xf32>
    %c0_66 = arith.constant 0 : index
    %c0_67 = arith.constant 0 : index
    %143 = vector.load %arg6[%c0_66, %c0_67] : memref<8x128xf32, #tpu.memory_space<vmem>>, vector<8x128xf32>
    tpu.vector_store %arg6[%c0_66, %c0_67], %142 {strides = array<i32>} : memref<8x128xf32, #tpu.memory_space<vmem>>, vector<8x128xf32>,
    %c0_68 = arith.constant 0 : index
    %c0_69 = arith.constant 0 : index
    %144 = vector.load %arg7[%c0_68, %c0_69] : memref<8x128xf32, #tpu.memory_space<vmem>>, vector<8x128xf32>
    tpu.vector_store %arg7[%c0_68, %c0_69], %140 {strides = array<i32>} : memref<8x128xf32, #tpu.memory_space<vmem>>, vector<8x128xf32>,
    %145 = arith.index_cast %c4_i32 : i32 to index
    %c0_70 = arith.constant 0 : index
    %c0_71 = arith.constant 0 : index
    %146 = vector.load %arg4[%145, %c0_70, %c0_71] : memref<8x8x128xf32, #tpu.memory_space<vmem>>, vector<1x8x128xf32>
    %147 = vector.shape_cast %146 : vector<1x8x128xf32> to vector<8x128xf32>
    %148 = vector.shape_cast %142 : vector<8x128xf32> to vector<1x8x128xf32>
    tpu.vector_store %arg4[%145, %c0_70, %c0_71], %148 {strides = array<i32>} : memref<8x8x128xf32, #tpu.memory_space<vmem>>, vector<1x8x128xf32>,
    %c5_i32 = arith.constant 5 : i32
    %c0_72 = arith.constant 0 : index
    %c0_73 = arith.constant 0 : index
    %149 = vector.load %arg6[%c0_72, %c0_73] : memref<8x128xf32, #tpu.memory_space<vmem>>, vector<8x128xf32>
    %c0_74 = arith.constant 0 : index
    %c0_75 = arith.constant 0 : index
    %150 = vector.load %arg7[%c0_74, %c0_75] : memref<8x128xf32, #tpu.memory_space<vmem>>, vector<8x128xf32>
    %151 = arith.index_cast %c5_i32 : i32 to index
    %c0_76 = arith.constant 0 : index
    %c0_77 = arith.constant 0 : index
    %152 = vector.load %arg2[%151, %c0_76, %c0_77] : memref<8x8x512xf32, #tpu.memory_space<vmem>>, vector<1x8x512xf32>
    %153 = vector.shape_cast %152 : vector<1x8x512xf32> to vector<8x512xf32>
    %cst_78 = arith.constant dense<0.000000e+00> : vector<8x512xf32>
    %154 = tpu.matmul %149, %3, %cst_78 {dimension_numbers = #tpu.dot_dimension_numbers<[1], [0], [0], [1], [0, 0, 1, 1], [], []>} : vector<8x128xf32>, vector<128x512xf32>, vector<8x512xf32> -> vector<8x512xf32>
    %155 = arith.addf %153, %154 : vector<8x512xf32>
    %156 = vector.extract_strided_slice %155 {offsets = [0, 0], sizes = [8, 384], strides = [1, 1]} : vector<8x512xf32> to vector<8x384xf32>
    %157 = arith.negf %156 : vector<8x384xf32>
    %158 = math.exp %157 : vector<8x384xf32>
    %cst_79 = arith.constant 1.000000e+00 : f32
    %159 = vector.broadcast %cst_79 : f32 to vector<8x384xf32>
    %160 = arith.addf %159, %158 : vector<8x384xf32>
    %161 = arith.divf %159, %160 : vector<8x384xf32>
    %162 = vector.extract_strided_slice %161 {offsets = [0, 0], sizes = [8, 128], strides = [1, 1]} : vector<8x384xf32> to vector<8x128xf32>
    %163 = vector.extract_strided_slice %161 {offsets = [0, 128], sizes = [8, 128], strides = [1, 1]} : vector<8x384xf32> to vector<8x128xf32>
    %164 = vector.extract_strided_slice %161 {offsets = [0, 256], sizes = [8, 128], strides = [1, 1]} : vector<8x384xf32> to vector<8x128xf32>
    %165 = vector.extract_strided_slice %155 {offsets = [0, 384], sizes = [8, 128], strides = [1, 1]} : vector<8x512xf32> to vector<8x128xf32>
    %166 = math.tanh %165 : vector<8x128xf32>
    %167 = arith.mulf %163, %150 : vector<8x128xf32>
    %168 = arith.mulf %162, %166 : vector<8x128xf32>
    %169 = arith.addf %167, %168 : vector<8x128xf32>
    %170 = math.tanh %169 : vector<8x128xf32>
    %171 = arith.mulf %164, %170 : vector<8x128xf32>
    %c0_80 = arith.constant 0 : index
    %c0_81 = arith.constant 0 : index
    %172 = vector.load %arg6[%c0_80, %c0_81] : memref<8x128xf32, #tpu.memory_space<vmem>>, vector<8x128xf32>
    tpu.vector_store %arg6[%c0_80, %c0_81], %171 {strides = array<i32>} : memref<8x128xf32, #tpu.memory_space<vmem>>, vector<8x128xf32>,
    %c0_82 = arith.constant 0 : index
    %c0_83 = arith.constant 0 : index
    %173 = vector.load %arg7[%c0_82, %c0_83] : memref<8x128xf32, #tpu.memory_space<vmem>>, vector<8x128xf32>
    tpu.vector_store %arg7[%c0_82, %c0_83], %169 {strides = array<i32>} : memref<8x128xf32, #tpu.memory_space<vmem>>, vector<8x128xf32>,
    %174 = arith.index_cast %c5_i32 : i32 to index
    %c0_84 = arith.constant 0 : index
    %c0_85 = arith.constant 0 : index
    %175 = vector.load %arg4[%174, %c0_84, %c0_85] : memref<8x8x128xf32, #tpu.memory_space<vmem>>, vector<1x8x128xf32>
    %176 = vector.shape_cast %175 : vector<1x8x128xf32> to vector<8x128xf32>
    %177 = vector.shape_cast %171 : vector<8x128xf32> to vector<1x8x128xf32>
    tpu.vector_store %arg4[%174, %c0_84, %c0_85], %177 {strides = array<i32>} : memref<8x8x128xf32, #tpu.memory_space<vmem>>, vector<1x8x128xf32>,
    %c6_i32 = arith.constant 6 : i32
    %c0_86 = arith.constant 0 : index
    %c0_87 = arith.constant 0 : index
    %178 = vector.load %arg6[%c0_86, %c0_87] : memref<8x128xf32, #tpu.memory_space<vmem>>, vector<8x128xf32>
    %c0_88 = arith.constant 0 : index
    %c0_89 = arith.constant 0 : index
    %179 = vector.load %arg7[%c0_88, %c0_89] : memref<8x128xf32, #tpu.memory_space<vmem>>, vector<8x128xf32>
    %180 = arith.index_cast %c6_i32 : i32 to index
    %c0_90 = arith.constant 0 : index
    %c0_91 = arith.constant 0 : index
    %181 = vector.load %arg2[%180, %c0_90, %c0_91] : memref<8x8x512xf32, #tpu.memory_space<vmem>>, vector<1x8x512xf32>
    %182 = vector.shape_cast %181 : vector<1x8x512xf32> to vector<8x512xf32>
    %cst_92 = arith.constant dense<0.000000e+00> : vector<8x512xf32>
    %183 = tpu.matmul %178, %3, %cst_92 {dimension_numbers = #tpu.dot_dimension_numbers<[1], [0], [0], [1], [0, 0, 1, 1], [], []>} : vector<8x128xf32>, vector<128x512xf32>, vector<8x512xf32> -> vector<8x512xf32>
    %184 = arith.addf %182, %183 : vector<8x512xf32>
    %185 = vector.extract_strided_slice %184 {offsets = [0, 0], sizes = [8, 384], strides = [1, 1]} : vector<8x512xf32> to vector<8x384xf32>
    %186 = arith.negf %185 : vector<8x384xf32>
    %187 = math.exp %186 : vector<8x384xf32>
    %cst_93 = arith.constant 1.000000e+00 : f32
    %188 = vector.broadcast %cst_93 : f32 to vector<8x384xf32>
    %189 = arith.addf %188, %187 : vector<8x384xf32>
    %190 = arith.divf %188, %189 : vector<8x384xf32>
    %191 = vector.extract_strided_slice %190 {offsets = [0, 0], sizes = [8, 128], strides = [1, 1]} : vector<8x384xf32> to vector<8x128xf32>
    %192 = vector.extract_strided_slice %190 {offsets = [0, 128], sizes = [8, 128], strides = [1, 1]} : vector<8x384xf32> to vector<8x128xf32>
    %193 = vector.extract_strided_slice %190 {offsets = [0, 256], sizes = [8, 128], strides = [1, 1]} : vector<8x384xf32> to vector<8x128xf32>
    %194 = vector.extract_strided_slice %184 {offsets = [0, 384], sizes = [8, 128], strides = [1, 1]} : vector<8x512xf32> to vector<8x128xf32>
    %195 = math.tanh %194 : vector<8x128xf32>
    %196 = arith.mulf %192, %179 : vector<8x128xf32>
    %197 = arith.mulf %191, %195 : vector<8x128xf32>
    %198 = arith.addf %196, %197 : vector<8x128xf32>
    %199 = math.tanh %198 : vector<8x128xf32>
    %200 = arith.mulf %193, %199 : vector<8x128xf32>
    %c0_94 = arith.constant 0 : index
    %c0_95 = arith.constant 0 : index
    %201 = vector.load %arg6[%c0_94, %c0_95] : memref<8x128xf32, #tpu.memory_space<vmem>>, vector<8x128xf32>
    tpu.vector_store %arg6[%c0_94, %c0_95], %200 {strides = array<i32>} : memref<8x128xf32, #tpu.memory_space<vmem>>, vector<8x128xf32>,
    %c0_96 = arith.constant 0 : index
    %c0_97 = arith.constant 0 : index
    %202 = vector.load %arg7[%c0_96, %c0_97] : memref<8x128xf32, #tpu.memory_space<vmem>>, vector<8x128xf32>
    tpu.vector_store %arg7[%c0_96, %c0_97], %198 {strides = array<i32>} : memref<8x128xf32, #tpu.memory_space<vmem>>, vector<8x128xf32>,
    %203 = arith.index_cast %c6_i32 : i32 to index
    %c0_98 = arith.constant 0 : index
    %c0_99 = arith.constant 0 : index
    %204 = vector.load %arg4[%203, %c0_98, %c0_99] : memref<8x8x128xf32, #tpu.memory_space<vmem>>, vector<1x8x128xf32>
    %205 = vector.shape_cast %204 : vector<1x8x128xf32> to vector<8x128xf32>
    %206 = vector.shape_cast %200 : vector<8x128xf32> to vector<1x8x128xf32>
    tpu.vector_store %arg4[%203, %c0_98, %c0_99], %206 {strides = array<i32>} : memref<8x8x128xf32, #tpu.memory_space<vmem>>, vector<1x8x128xf32>,
    %c7_i32 = arith.constant 7 : i32
    %c0_100 = arith.constant 0 : index
    %c0_101 = arith.constant 0 : index
    %207 = vector.load %arg6[%c0_100, %c0_101] : memref<8x128xf32, #tpu.memory_space<vmem>>, vector<8x128xf32>
    %c0_102 = arith.constant 0 : index
    %c0_103 = arith.constant 0 : index
    %208 = vector.load %arg7[%c0_102, %c0_103] : memref<8x128xf32, #tpu.memory_space<vmem>>, vector<8x128xf32>
    %209 = arith.index_cast %c7_i32 : i32 to index
    %c0_104 = arith.constant 0 : index
    %c0_105 = arith.constant 0 : index
    %210 = vector.load %arg2[%209, %c0_104, %c0_105] : memref<8x8x512xf32, #tpu.memory_space<vmem>>, vector<1x8x512xf32>
    %211 = vector.shape_cast %210 : vector<1x8x512xf32> to vector<8x512xf32>
    %cst_106 = arith.constant dense<0.000000e+00> : vector<8x512xf32>
    %212 = tpu.matmul %207, %3, %cst_106 {dimension_numbers = #tpu.dot_dimension_numbers<[1], [0], [0], [1], [0, 0, 1, 1], [], []>} : vector<8x128xf32>, vector<128x512xf32>, vector<8x512xf32> -> vector<8x512xf32>
    %213 = arith.addf %211, %212 : vector<8x512xf32>
    %214 = vector.extract_strided_slice %213 {offsets = [0, 0], sizes = [8, 384], strides = [1, 1]} : vector<8x512xf32> to vector<8x384xf32>
    %215 = arith.negf %214 : vector<8x384xf32>
    %216 = math.exp %215 : vector<8x384xf32>
    %cst_107 = arith.constant 1.000000e+00 : f32
    %217 = vector.broadcast %cst_107 : f32 to vector<8x384xf32>
    %218 = arith.addf %217, %216 : vector<8x384xf32>
    %219 = arith.divf %217, %218 : vector<8x384xf32>
    %220 = vector.extract_strided_slice %219 {offsets = [0, 0], sizes = [8, 128], strides = [1, 1]} : vector<8x384xf32> to vector<8x128xf32>
    %221 = vector.extract_strided_slice %219 {offsets = [0, 128], sizes = [8, 128], strides = [1, 1]} : vector<8x384xf32> to vector<8x128xf32>
    %222 = vector.extract_strided_slice %219 {offsets = [0, 256], sizes = [8, 128], strides = [1, 1]} : vector<8x384xf32> to vector<8x128xf32>
    %223 = vector.extract_strided_slice %213 {offsets = [0, 384], sizes = [8, 128], strides = [1, 1]} : vector<8x512xf32> to vector<8x128xf32>
    %224 = math.tanh %223 : vector<8x128xf32>
    %225 = arith.mulf %221, %208 : vector<8x128xf32>
    %226 = arith.mulf %220, %224 : vector<8x128xf32>
    %227 = arith.addf %225, %226 : vector<8x128xf32>
    %228 = math.tanh %227 : vector<8x128xf32>
    %229 = arith.mulf %222, %228 : vector<8x128xf32>
    %c0_108 = arith.constant 0 : index
    %c0_109 = arith.constant 0 : index
    %230 = vector.load %arg6[%c0_108, %c0_109] : memref<8x128xf32, #tpu.memory_space<vmem>>, vector<8x128xf32>
    tpu.vector_store %arg6[%c0_108, %c0_109], %229 {strides = array<i32>} : memref<8x128xf32, #tpu.memory_space<vmem>>, vector<8x128xf32>,
    %c0_110 = arith.constant 0 : index
    %c0_111 = arith.constant 0 : index
    %231 = vector.load %arg7[%c0_110, %c0_111] : memref<8x128xf32, #tpu.memory_space<vmem>>, vector<8x128xf32>
    tpu.vector_store %arg7[%c0_110, %c0_111], %227 {strides = array<i32>} : memref<8x128xf32, #tpu.memory_space<vmem>>, vector<8x128xf32>,
    %232 = arith.index_cast %c7_i32 : i32 to index
    %c0_112 = arith.constant 0 : index
    %c0_113 = arith.constant 0 : index
    %233 = vector.load %arg4[%232, %c0_112, %c0_113] : memref<8x8x128xf32, #tpu.memory_space<vmem>>, vector<1x8x128xf32>
    %234 = vector.shape_cast %233 : vector<1x8x128xf32> to vector<8x128xf32>
    %235 = vector.shape_cast %229 : vector<8x128xf32> to vector<1x8x128xf32>
    tpu.vector_store %arg4[%232, %c0_112, %c0_113], %235 {strides = array<i32>} : memref<8x8x128xf32, #tpu.memory_space<vmem>>, vector<1x8x128xf32>,
    %c8_i32 = arith.constant 8 : i32
    %c0_i32_114 = arith.constant 0 : i32
    %236 = arith.cmpi eq, %arg1, %c0_i32_114 : i32
    %237 = arith.extui %236 : i1 to i32
    %c0_i32_115 = arith.constant 0 : i32
    %238 = arith.cmpi ne, %237, %c0_i32_115 : i32
    scf.if %238 {
      %c0_116 = arith.constant 0 : index
      %c0_117 = arith.constant 0 : index
      %239 = vector.load %arg7[%c0_116, %c0_117] : memref<8x128xf32, #tpu.memory_space<vmem>>, vector<8x128xf32>
      %c0_118 = arith.constant 0 : index
      %c0_119 = arith.constant 0 : index
      %240 = vector.load %arg5[%c0_118, %c0_119] : memref<8x128xf32, #tpu.memory_space<vmem>>, vector<8x128xf32>
      tpu.vector_store %arg5[%c0_118, %c0_119], %239 {strides = array<i32>} : memref<8x128xf32, #tpu.memory_space<vmem>>, vector<8x128xf32>,
    } else {
    }
    return
  }
  func.func @transform_0(%arg0: i32, %arg1: i32) -> (i32, i32, i32) {
    %c0_i32 = arith.constant 0 : i32
    %c0_i32_0 = arith.constant 0 : i32
    return %arg1, %arg0, %c0_i32 : i32, i32, i32
  }
  func.func @transform_1(%arg0: i32, %arg1: i32) -> (i32, i32) {
    %c0_i32 = arith.constant 0 : i32
    %c0_i32_0 = arith.constant 0 : i32
    %c0_i32_1 = arith.constant 0 : i32
    return %c0_i32, %c0_i32_0 : i32, i32
  }
  func.func @transform_2(%arg0: i32, %arg1: i32) -> (i32, i32, i32) {
    %c0_i32 = arith.constant 0 : i32
    %c0_i32_0 = arith.constant 0 : i32
    return %arg1, %arg0, %c0_i32 : i32, i32, i32
  }
  func.func @transform_3(%arg0: i32, %arg1: i32) -> (i32, i32) {
    %c0_i32 = arith.constant 0 : i32
    %c0_i32_0 = arith.constant 0 : i32
    return %arg0, %c0_i32 : i32, i32
  }
}

module attributes {stable_mosaic.version = 11 : i64} {
  func.func @_lstm_recurrent_kernel(%arg0: i32, %arg1: i32, %arg2: memref<8x8x512xf32, #tpu.memory_space<vmem>>, %arg3: memref<128x512xf32, #tpu.memory_space<vmem>>, %arg4: memref<8x8x128xf32, #tpu.memory_space<vmem>>, %arg5: memref<8x128xf32, #tpu.memory_space<vmem>>, %arg6: memref<8x128xf32, #tpu.memory_space<vmem>>, %arg7: memref<8x128xf32, #tpu.memory_space<vmem>>) attributes {dimension_semantics = [#tpu.dimension_semantics<parallel>, #tpu.dimension_semantics<arbitrary>], iteration_bounds = array<i64: 1, 1>, scalar_prefetch = 0 : i64, scratch_operands = 2 : i64, tpu.core_type = #tpu.core_type<tc>, window_params = [{transform_indices = @transform_0, window_bounds = array<i64: 8, 8, 512>}, {pipeline_mode = #tpu.pipeline_mode<synchronous>, transform_indices = @transform_1, window_bounds = array<i64: 128, 512>}, {transform_indices = @transform_2, window_bounds = array<i64: 8, 8, 128>}, {transform_indices = @transform_3, window_bounds = array<i64: 8, 128>}]} {
    %c0_i32 = arith.constant 0 : i32
    %0 = arith.cmpi eq, %arg1, %c0_i32 : i32
    %1 = arith.extui %0 : i1 to i32
    %c0_i32_0 = arith.constant 0 : i32
    %2 = arith.cmpi ne, %1, %c0_i32_0 : i32
    scf.if %2 {
      %cst_116 = arith.constant 0.000000e+00 : f32
      %239 = vector.broadcast %cst_116 : f32 to vector<8x128xf32>
      %c0_117 = arith.constant 0 : index
      %c0_118 = arith.constant 0 : index
      %240 = vector.load %arg6[%c0_117, %c0_118] : memref<8x128xf32, #tpu.memory_space<vmem>>, vector<8x128xf32>
      tpu.vector_store %arg6[%c0_117, %c0_118], %239 {strides = array<i32>} : memref<8x128xf32, #tpu.memory_space<vmem>>, vector<8x128xf32>,
      %cst_119 = arith.constant 0.000000e+00 : f32
      %241 = vector.broadcast %cst_119 : f32 to vector<8x128xf32>
      %c0_120 = arith.constant 0 : index
      %c0_121 = arith.constant 0 : index
      %242 = vector.load %arg7[%c0_120, %c0_121] : memref<8x128xf32, #tpu.memory_space<vmem>>, vector<8x128xf32>
      tpu.vector_store %arg7[%c0_120, %c0_121], %241 {strides = array<i32>} : memref<8x128xf32, #tpu.memory_space<vmem>>, vector<8x128xf32>,
    } else {
    }
    %c0 = arith.constant 0 : index
    %c0_1 = arith.constant 0 : index
    %3 = vector.load %arg3[%c0, %c0_1] : memref<128x512xf32, #tpu.memory_space<vmem>>, vector<128x512xf32>
    %c0_i32_2 = arith.constant 0 : i32
    %c0_3 = arith.constant 0 : index
    %c0_4 = arith.constant 0 : index
    %4 = vector.load %arg6[%c0_3, %c0_4] : memref<8x128xf32, #tpu.memory_space<vmem>>, vector<8x128xf32>
    %c0_5 = arith.constant 0 : index
    %c0_6 = arith.constant 0 : index
    %5 = vector.load %arg7[%c0_5, %c0_6] : memref<8x128xf32, #tpu.memory_space<vmem>>, vector<8x128xf32>
    %6 = arith.index_cast %c0_i32_2 : i32 to index
    %c0_7 = arith.constant 0 : index
    %c0_8 = arith.constant 0 : index
    %7 = vector.load %arg2[%6, %c0_7, %c0_8] : memref<8x8x512xf32, #tpu.memory_space<vmem>>, vector<1x8x512xf32>
    %8 = vector.shape_cast %7 : vector<1x8x512xf32> to vector<8x512xf32>
    %cst = arith.constant dense<0.000000e+00> : vector<8x512xf32>
    %9 = tpu.matmul %4, %3, %cst {dimension_numbers = #tpu.dot_dimension_numbers<[1], [0], [0], [1], [0, 0, 1, 1], [], []>} : vector<8x128xf32>, vector<128x512xf32>, vector<8x512xf32> -> vector<8x512xf32>
    %10 = arith.addf %8, %9 : vector<8x512xf32>
    %11 = vector.extract_strided_slice %10 {offsets = [0, 0], sizes = [8, 384], strides = [1, 1]} : vector<8x512xf32> to vector<8x384xf32>
    %12 = arith.negf %11 : vector<8x384xf32>
    %13 = math.exp %12 : vector<8x384xf32>
    %cst_9 = arith.constant 1.000000e+00 : f32
    %14 = vector.broadcast %cst_9 : f32 to vector<8x384xf32>
    %15 = arith.addf %14, %13 : vector<8x384xf32>
    %16 = arith.divf %14, %15 : vector<8x384xf32>
    %17 = vector.extract_strided_slice %16 {offsets = [0, 0], sizes = [8, 128], strides = [1, 1]} : vector<8x384xf32> to vector<8x128xf32>
    %18 = vector.extract_strided_slice %16 {offsets = [0, 128], sizes = [8, 128], strides = [1, 1]} : vector<8x384xf32> to vector<8x128xf32>
    %19 = vector.extract_strided_slice %16 {offsets = [0, 256], sizes = [8, 128], strides = [1, 1]} : vector<8x384xf32> to vector<8x128xf32>
    %20 = vector.extract_strided_slice %10 {offsets = [0, 384], sizes = [8, 128], strides = [1, 1]} : vector<8x512xf32> to vector<8x128xf32>
    %21 = math.tanh %20 : vector<8x128xf32>
    %22 = arith.mulf %18, %5 : vector<8x128xf32>
    %23 = arith.mulf %17, %21 : vector<8x128xf32>
    %24 = arith.addf %22, %23 : vector<8x128xf32>
    %25 = math.tanh %24 : vector<8x128xf32>
    %26 = arith.mulf %19, %25 : vector<8x128xf32>
    %c0_10 = arith.constant 0 : index
    %c0_11 = arith.constant 0 : index
    %27 = vector.load %arg6[%c0_10, %c0_11] : memref<8x128xf32, #tpu.memory_space<vmem>>, vector<8x128xf32>
    tpu.vector_store %arg6[%c0_10, %c0_11], %26 {strides = array<i32>} : memref<8x128xf32, #tpu.memory_space<vmem>>, vector<8x128xf32>,
    %c0_12 = arith.constant 0 : index
    %c0_13 = arith.constant 0 : index
    %28 = vector.load %arg7[%c0_12, %c0_13] : memref<8x128xf32, #tpu.memory_space<vmem>>, vector<8x128xf32>
    tpu.vector_store %arg7[%c0_12, %c0_13], %24 {strides = array<i32>} : memref<8x128xf32, #tpu.memory_space<vmem>>, vector<8x128xf32>,
    %29 = arith.index_cast %c0_i32_2 : i32 to index
    %c0_14 = arith.constant 0 : index
    %c0_15 = arith.constant 0 : index
    %30 = vector.load %arg4[%29, %c0_14, %c0_15] : memref<8x8x128xf32, #tpu.memory_space<vmem>>, vector<1x8x128xf32>
    %31 = vector.shape_cast %30 : vector<1x8x128xf32> to vector<8x128xf32>
    %32 = vector.shape_cast %26 : vector<8x128xf32> to vector<1x8x128xf32>
    tpu.vector_store %arg4[%29, %c0_14, %c0_15], %32 {strides = array<i32>} : memref<8x8x128xf32, #tpu.memory_space<vmem>>, vector<1x8x128xf32>,
    %c1_i32 = arith.constant 1 : i32
    %c0_16 = arith.constant 0 : index
    %c0_17 = arith.constant 0 : index
    %33 = vector.load %arg6[%c0_16, %c0_17] : memref<8x128xf32, #tpu.memory_space<vmem>>, vector<8x128xf32>
    %c0_18 = arith.constant 0 : index
    %c0_19 = arith.constant 0 : index
    %34 = vector.load %arg7[%c0_18, %c0_19] : memref<8x128xf32, #tpu.memory_space<vmem>>, vector<8x128xf32>
    %35 = arith.index_cast %c1_i32 : i32 to index
    %c0_20 = arith.constant 0 : index
    %c0_21 = arith.constant 0 : index
    %36 = vector.load %arg2[%35, %c0_20, %c0_21] : memref<8x8x512xf32, #tpu.memory_space<vmem>>, vector<1x8x512xf32>
    %37 = vector.shape_cast %36 : vector<1x8x512xf32> to vector<8x512xf32>
    %cst_22 = arith.constant dense<0.000000e+00> : vector<8x512xf32>
    %38 = tpu.matmul %33, %3, %cst_22 {dimension_numbers = #tpu.dot_dimension_numbers<[1], [0], [0], [1], [0, 0, 1, 1], [], []>} : vector<8x128xf32>, vector<128x512xf32>, vector<8x512xf32> -> vector<8x512xf32>
    %39 = arith.addf %37, %38 : vector<8x512xf32>
    %40 = vector.extract_strided_slice %39 {offsets = [0, 0], sizes = [8, 384], strides = [1, 1]} : vector<8x512xf32> to vector<8x384xf32>
    %41 = arith.negf %40 : vector<8x384xf32>
    %42 = math.exp %41 : vector<8x384xf32>
    %cst_23 = arith.constant 1.000000e+00 : f32
    %43 = vector.broadcast %cst_23 : f32 to vector<8x384xf32>
    %44 = arith.addf %43, %42 : vector<8x384xf32>
    %45 = arith.divf %43, %44 : vector<8x384xf32>
    %46 = vector.extract_strided_slice %45 {offsets = [0, 0], sizes = [8, 128], strides = [1, 1]} : vector<8x384xf32> to vector<8x128xf32>
    %47 = vector.extract_strided_slice %45 {offsets = [0, 128], sizes = [8, 128], strides = [1, 1]} : vector<8x384xf32> to vector<8x128xf32>
    %48 = vector.extract_strided_slice %45 {offsets = [0, 256], sizes = [8, 128], strides = [1, 1]} : vector<8x384xf32> to vector<8x128xf32>
    %49 = vector.extract_strided_slice %39 {offsets = [0, 384], sizes = [8, 128], strides = [1, 1]} : vector<8x512xf32> to vector<8x128xf32>
    %50 = math.tanh %49 : vector<8x128xf32>
    %51 = arith.mulf %47, %34 : vector<8x128xf32>
    %52 = arith.mulf %46, %50 : vector<8x128xf32>
    %53 = arith.addf %51, %52 : vector<8x128xf32>
    %54 = math.tanh %53 : vector<8x128xf32>
    %55 = arith.mulf %48, %54 : vector<8x128xf32>
    %c0_24 = arith.constant 0 : index
    %c0_25 = arith.constant 0 : index
    %56 = vector.load %arg6[%c0_24, %c0_25] : memref<8x128xf32, #tpu.memory_space<vmem>>, vector<8x128xf32>
    tpu.vector_store %arg6[%c0_24, %c0_25], %55 {strides = array<i32>} : memref<8x128xf32, #tpu.memory_space<vmem>>, vector<8x128xf32>,
    %c0_26 = arith.constant 0 : index
    %c0_27 = arith.constant 0 : index
    %57 = vector.load %arg7[%c0_26, %c0_27] : memref<8x128xf32, #tpu.memory_space<vmem>>, vector<8x128xf32>
    tpu.vector_store %arg7[%c0_26, %c0_27], %53 {strides = array<i32>} : memref<8x128xf32, #tpu.memory_space<vmem>>, vector<8x128xf32>,
    %58 = arith.index_cast %c1_i32 : i32 to index
    %c0_28 = arith.constant 0 : index
    %c0_29 = arith.constant 0 : index
    %59 = vector.load %arg4[%58, %c0_28, %c0_29] : memref<8x8x128xf32, #tpu.memory_space<vmem>>, vector<1x8x128xf32>
    %60 = vector.shape_cast %59 : vector<1x8x128xf32> to vector<8x128xf32>
    %61 = vector.shape_cast %55 : vector<8x128xf32> to vector<1x8x128xf32>
    tpu.vector_store %arg4[%58, %c0_28, %c0_29], %61 {strides = array<i32>} : memref<8x8x128xf32, #tpu.memory_space<vmem>>, vector<1x8x128xf32>,
    %c2_i32 = arith.constant 2 : i32
    %c0_30 = arith.constant 0 : index
    %c0_31 = arith.constant 0 : index
    %62 = vector.load %arg6[%c0_30, %c0_31] : memref<8x128xf32, #tpu.memory_space<vmem>>, vector<8x128xf32>
    %c0_32 = arith.constant 0 : index
    %c0_33 = arith.constant 0 : index
    %63 = vector.load %arg7[%c0_32, %c0_33] : memref<8x128xf32, #tpu.memory_space<vmem>>, vector<8x128xf32>
    %64 = arith.index_cast %c2_i32 : i32 to index
    %c0_34 = arith.constant 0 : index
    %c0_35 = arith.constant 0 : index
    %65 = vector.load %arg2[%64, %c0_34, %c0_35] : memref<8x8x512xf32, #tpu.memory_space<vmem>>, vector<1x8x512xf32>
    %66 = vector.shape_cast %65 : vector<1x8x512xf32> to vector<8x512xf32>
    %cst_36 = arith.constant dense<0.000000e+00> : vector<8x512xf32>
    %67 = tpu.matmul %62, %3, %cst_36 {dimension_numbers = #tpu.dot_dimension_numbers<[1], [0], [0], [1], [0, 0, 1, 1], [], []>} : vector<8x128xf32>, vector<128x512xf32>, vector<8x512xf32> -> vector<8x512xf32>
    %68 = arith.addf %66, %67 : vector<8x512xf32>
    %69 = vector.extract_strided_slice %68 {offsets = [0, 0], sizes = [8, 384], strides = [1, 1]} : vector<8x512xf32> to vector<8x384xf32>
    %70 = arith.negf %69 : vector<8x384xf32>
    %71 = math.exp %70 : vector<8x384xf32>
    %cst_37 = arith.constant 1.000000e+00 : f32
    %72 = vector.broadcast %cst_37 : f32 to vector<8x384xf32>
    %73 = arith.addf %72, %71 : vector<8x384xf32>
    %74 = arith.divf %72, %73 : vector<8x384xf32>
    %75 = vector.extract_strided_slice %74 {offsets = [0, 0], sizes = [8, 128], strides = [1, 1]} : vector<8x384xf32> to vector<8x128xf32>
    %76 = vector.extract_strided_slice %74 {offsets = [0, 128], sizes = [8, 128], strides = [1, 1]} : vector<8x384xf32> to vector<8x128xf32>
    %77 = vector.extract_strided_slice %74 {offsets = [0, 256], sizes = [8, 128], strides = [1, 1]} : vector<8x384xf32> to vector<8x128xf32>
    %78 = vector.extract_strided_slice %68 {offsets = [0, 384], sizes = [8, 128], strides = [1, 1]} : vector<8x512xf32> to vector<8x128xf32>
    %79 = math.tanh %78 : vector<8x128xf32>
    %80 = arith.mulf %76, %63 : vector<8x128xf32>
    %81 = arith.mulf %75, %79 : vector<8x128xf32>
    %82 = arith.addf %80, %81 : vector<8x128xf32>
    %83 = math.tanh %82 : vector<8x128xf32>
    %84 = arith.mulf %77, %83 : vector<8x128xf32>
    %c0_38 = arith.constant 0 : index
    %c0_39 = arith.constant 0 : index
    %85 = vector.load %arg6[%c0_38, %c0_39] : memref<8x128xf32, #tpu.memory_space<vmem>>, vector<8x128xf32>
    tpu.vector_store %arg6[%c0_38, %c0_39], %84 {strides = array<i32>} : memref<8x128xf32, #tpu.memory_space<vmem>>, vector<8x128xf32>,
    %c0_40 = arith.constant 0 : index
    %c0_41 = arith.constant 0 : index
    %86 = vector.load %arg7[%c0_40, %c0_41] : memref<8x128xf32, #tpu.memory_space<vmem>>, vector<8x128xf32>
    tpu.vector_store %arg7[%c0_40, %c0_41], %82 {strides = array<i32>} : memref<8x128xf32, #tpu.memory_space<vmem>>, vector<8x128xf32>,
    %87 = arith.index_cast %c2_i32 : i32 to index
    %c0_42 = arith.constant 0 : index
    %c0_43 = arith.constant 0 : index
    %88 = vector.load %arg4[%87, %c0_42, %c0_43] : memref<8x8x128xf32, #tpu.memory_space<vmem>>, vector<1x8x128xf32>
    %89 = vector.shape_cast %88 : vector<1x8x128xf32> to vector<8x128xf32>
    %90 = vector.shape_cast %84 : vector<8x128xf32> to vector<1x8x128xf32>
    tpu.vector_store %arg4[%87, %c0_42, %c0_43], %90 {strides = array<i32>} : memref<8x8x128xf32, #tpu.memory_space<vmem>>, vector<1x8x128xf32>,
    %c3_i32 = arith.constant 3 : i32
    %c0_44 = arith.constant 0 : index
    %c0_45 = arith.constant 0 : index
    %91 = vector.load %arg6[%c0_44, %c0_45] : memref<8x128xf32, #tpu.memory_space<vmem>>, vector<8x128xf32>
    %c0_46 = arith.constant 0 : index
    %c0_47 = arith.constant 0 : index
    %92 = vector.load %arg7[%c0_46, %c0_47] : memref<8x128xf32, #tpu.memory_space<vmem>>, vector<8x128xf32>
    %93 = arith.index_cast %c3_i32 : i32 to index
    %c0_48 = arith.constant 0 : index
    %c0_49 = arith.constant 0 : index
    %94 = vector.load %arg2[%93, %c0_48, %c0_49] : memref<8x8x512xf32, #tpu.memory_space<vmem>>, vector<1x8x512xf32>
    %95 = vector.shape_cast %94 : vector<1x8x512xf32> to vector<8x512xf32>
    %cst_50 = arith.constant dense<0.000000e+00> : vector<8x512xf32>
    %96 = tpu.matmul %91, %3, %cst_50 {dimension_numbers = #tpu.dot_dimension_numbers<[1], [0], [0], [1], [0, 0, 1, 1], [], []>} : vector<8x128xf32>, vector<128x512xf32>, vector<8x512xf32> -> vector<8x512xf32>
    %97 = arith.addf %95, %96 : vector<8x512xf32>
    %98 = vector.extract_strided_slice %97 {offsets = [0, 0], sizes = [8, 384], strides = [1, 1]} : vector<8x512xf32> to vector<8x384xf32>
    %99 = arith.negf %98 : vector<8x384xf32>
    %100 = math.exp %99 : vector<8x384xf32>
    %cst_51 = arith.constant 1.000000e+00 : f32
    %101 = vector.broadcast %cst_51 : f32 to vector<8x384xf32>
    %102 = arith.addf %101, %100 : vector<8x384xf32>
    %103 = arith.divf %101, %102 : vector<8x384xf32>
    %104 = vector.extract_strided_slice %103 {offsets = [0, 0], sizes = [8, 128], strides = [1, 1]} : vector<8x384xf32> to vector<8x128xf32>
    %105 = vector.extract_strided_slice %103 {offsets = [0, 128], sizes = [8, 128], strides = [1, 1]} : vector<8x384xf32> to vector<8x128xf32>
    %106 = vector.extract_strided_slice %103 {offsets = [0, 256], sizes = [8, 128], strides = [1, 1]} : vector<8x384xf32> to vector<8x128xf32>
    %107 = vector.extract_strided_slice %97 {offsets = [0, 384], sizes = [8, 128], strides = [1, 1]} : vector<8x512xf32> to vector<8x128xf32>
    %108 = math.tanh %107 : vector<8x128xf32>
    %109 = arith.mulf %105, %92 : vector<8x128xf32>
    %110 = arith.mulf %104, %108 : vector<8x128xf32>
    %111 = arith.addf %109, %110 : vector<8x128xf32>
    %112 = math.tanh %111 : vector<8x128xf32>
    %113 = arith.mulf %106, %112 : vector<8x128xf32>
    %c0_52 = arith.constant 0 : index
    %c0_53 = arith.constant 0 : index
    %114 = vector.load %arg6[%c0_52, %c0_53] : memref<8x128xf32, #tpu.memory_space<vmem>>, vector<8x128xf32>
    tpu.vector_store %arg6[%c0_52, %c0_53], %113 {strides = array<i32>} : memref<8x128xf32, #tpu.memory_space<vmem>>, vector<8x128xf32>,
    %c0_54 = arith.constant 0 : index
    %c0_55 = arith.constant 0 : index
    %115 = vector.load %arg7[%c0_54, %c0_55] : memref<8x128xf32, #tpu.memory_space<vmem>>, vector<8x128xf32>
    tpu.vector_store %arg7[%c0_54, %c0_55], %111 {strides = array<i32>} : memref<8x128xf32, #tpu.memory_space<vmem>>, vector<8x128xf32>,
    %116 = arith.index_cast %c3_i32 : i32 to index
    %c0_56 = arith.constant 0 : index
    %c0_57 = arith.constant 0 : index
    %117 = vector.load %arg4[%116, %c0_56, %c0_57] : memref<8x8x128xf32, #tpu.memory_space<vmem>>, vector<1x8x128xf32>
    %118 = vector.shape_cast %117 : vector<1x8x128xf32> to vector<8x128xf32>
    %119 = vector.shape_cast %113 : vector<8x128xf32> to vector<1x8x128xf32>
    tpu.vector_store %arg4[%116, %c0_56, %c0_57], %119 {strides = array<i32>} : memref<8x8x128xf32, #tpu.memory_space<vmem>>, vector<1x8x128xf32>,
    %c4_i32 = arith.constant 4 : i32
    %c0_58 = arith.constant 0 : index
    %c0_59 = arith.constant 0 : index
    %120 = vector.load %arg6[%c0_58, %c0_59] : memref<8x128xf32, #tpu.memory_space<vmem>>, vector<8x128xf32>
    %c0_60 = arith.constant 0 : index
    %c0_61 = arith.constant 0 : index
    %121 = vector.load %arg7[%c0_60, %c0_61] : memref<8x128xf32, #tpu.memory_space<vmem>>, vector<8x128xf32>
    %122 = arith.index_cast %c4_i32 : i32 to index
    %c0_62 = arith.constant 0 : index
    %c0_63 = arith.constant 0 : index
    %123 = vector.load %arg2[%122, %c0_62, %c0_63] : memref<8x8x512xf32, #tpu.memory_space<vmem>>, vector<1x8x512xf32>
    %124 = vector.shape_cast %123 : vector<1x8x512xf32> to vector<8x512xf32>
    %cst_64 = arith.constant dense<0.000000e+00> : vector<8x512xf32>
    %125 = tpu.matmul %120, %3, %cst_64 {dimension_numbers = #tpu.dot_dimension_numbers<[1], [0], [0], [1], [0, 0, 1, 1], [], []>} : vector<8x128xf32>, vector<128x512xf32>, vector<8x512xf32> -> vector<8x512xf32>
    %126 = arith.addf %124, %125 : vector<8x512xf32>
    %127 = vector.extract_strided_slice %126 {offsets = [0, 0], sizes = [8, 384], strides = [1, 1]} : vector<8x512xf32> to vector<8x384xf32>
    %128 = arith.negf %127 : vector<8x384xf32>
    %129 = math.exp %128 : vector<8x384xf32>
    %cst_65 = arith.constant 1.000000e+00 : f32
    %130 = vector.broadcast %cst_65 : f32 to vector<8x384xf32>
    %131 = arith.addf %130, %129 : vector<8x384xf32>
    %132 = arith.divf %130, %131 : vector<8x384xf32>
    %133 = vector.extract_strided_slice %132 {offsets = [0, 0], sizes = [8, 128], strides = [1, 1]} : vector<8x384xf32> to vector<8x128xf32>
    %134 = vector.extract_strided_slice %132 {offsets = [0, 128], sizes = [8, 128], strides = [1, 1]} : vector<8x384xf32> to vector<8x128xf32>
    %135 = vector.extract_strided_slice %132 {offsets = [0, 256], sizes = [8, 128], strides = [1, 1]} : vector<8x384xf32> to vector<8x128xf32>
    %136 = vector.extract_strided_slice %126 {offsets = [0, 384], sizes = [8, 128], strides = [1, 1]} : vector<8x512xf32> to vector<8x128xf32>
    %137 = math.tanh %136 : vector<8x128xf32>
    %138 = arith.mulf %134, %121 : vector<8x128xf32>
    %139 = arith.mulf %133, %137 : vector<8x128xf32>
    %140 = arith.addf %138, %139 : vector<8x128xf32>
    %141 = math.tanh %140 : vector<8x128xf32>
    %142 = arith.mulf %135, %141 : vector<8x128xf32>
    %c0_66 = arith.constant 0 : index
    %c0_67 = arith.constant 0 : index
    %143 = vector.load %arg6[%c0_66, %c0_67] : memref<8x128xf32, #tpu.memory_space<vmem>>, vector<8x128xf32>
    tpu.vector_store %arg6[%c0_66, %c0_67], %142 {strides = array<i32>} : memref<8x128xf32, #tpu.memory_space<vmem>>, vector<8x128xf32>,
    %c0_68 = arith.constant 0 : index
    %c0_69 = arith.constant 0 : index
    %144 = vector.load %arg7[%c0_68, %c0_69] : memref<8x128xf32, #tpu.memory_space<vmem>>, vector<8x128xf32>
    tpu.vector_store %arg7[%c0_68, %c0_69], %140 {strides = array<i32>} : memref<8x128xf32, #tpu.memory_space<vmem>>, vector<8x128xf32>,
    %145 = arith.index_cast %c4_i32 : i32 to index
    %c0_70 = arith.constant 0 : index
    %c0_71 = arith.constant 0 : index
    %146 = vector.load %arg4[%145, %c0_70, %c0_71] : memref<8x8x128xf32, #tpu.memory_space<vmem>>, vector<1x8x128xf32>
    %147 = vector.shape_cast %146 : vector<1x8x128xf32> to vector<8x128xf32>
    %148 = vector.shape_cast %142 : vector<8x128xf32> to vector<1x8x128xf32>
    tpu.vector_store %arg4[%145, %c0_70, %c0_71], %148 {strides = array<i32>} : memref<8x8x128xf32, #tpu.memory_space<vmem>>, vector<1x8x128xf32>,
    %c5_i32 = arith.constant 5 : i32
    %c0_72 = arith.constant 0 : index
    %c0_73 = arith.constant 0 : index
    %149 = vector.load %arg6[%c0_72, %c0_73] : memref<8x128xf32, #tpu.memory_space<vmem>>, vector<8x128xf32>
    %c0_74 = arith.constant 0 : index
    %c0_75 = arith.constant 0 : index
    %150 = vector.load %arg7[%c0_74, %c0_75] : memref<8x128xf32, #tpu.memory_space<vmem>>, vector<8x128xf32>
    %151 = arith.index_cast %c5_i32 : i32 to index
    %c0_76 = arith.constant 0 : index
    %c0_77 = arith.constant 0 : index
    %152 = vector.load %arg2[%151, %c0_76, %c0_77] : memref<8x8x512xf32, #tpu.memory_space<vmem>>, vector<1x8x512xf32>
    %153 = vector.shape_cast %152 : vector<1x8x512xf32> to vector<8x512xf32>
    %cst_78 = arith.constant dense<0.000000e+00> : vector<8x512xf32>
    %154 = tpu.matmul %149, %3, %cst_78 {dimension_numbers = #tpu.dot_dimension_numbers<[1], [0], [0], [1], [0, 0, 1, 1], [], []>} : vector<8x128xf32>, vector<128x512xf32>, vector<8x512xf32> -> vector<8x512xf32>
    %155 = arith.addf %153, %154 : vector<8x512xf32>
    %156 = vector.extract_strided_slice %155 {offsets = [0, 0], sizes = [8, 384], strides = [1, 1]} : vector<8x512xf32> to vector<8x384xf32>
    %157 = arith.negf %156 : vector<8x384xf32>
    %158 = math.exp %157 : vector<8x384xf32>
    %cst_79 = arith.constant 1.000000e+00 : f32
    %159 = vector.broadcast %cst_79 : f32 to vector<8x384xf32>
    %160 = arith.addf %159, %158 : vector<8x384xf32>
    %161 = arith.divf %159, %160 : vector<8x384xf32>
    %162 = vector.extract_strided_slice %161 {offsets = [0, 0], sizes = [8, 128], strides = [1, 1]} : vector<8x384xf32> to vector<8x128xf32>
    %163 = vector.extract_strided_slice %161 {offsets = [0, 128], sizes = [8, 128], strides = [1, 1]} : vector<8x384xf32> to vector<8x128xf32>
    %164 = vector.extract_strided_slice %161 {offsets = [0, 256], sizes = [8, 128], strides = [1, 1]} : vector<8x384xf32> to vector<8x128xf32>
    %165 = vector.extract_strided_slice %155 {offsets = [0, 384], sizes = [8, 128], strides = [1, 1]} : vector<8x512xf32> to vector<8x128xf32>
    %166 = math.tanh %165 : vector<8x128xf32>
    %167 = arith.mulf %163, %150 : vector<8x128xf32>
    %168 = arith.mulf %162, %166 : vector<8x128xf32>
    %169 = arith.addf %167, %168 : vector<8x128xf32>
    %170 = math.tanh %169 : vector<8x128xf32>
    %171 = arith.mulf %164, %170 : vector<8x128xf32>
    %c0_80 = arith.constant 0 : index
    %c0_81 = arith.constant 0 : index
    %172 = vector.load %arg6[%c0_80, %c0_81] : memref<8x128xf32, #tpu.memory_space<vmem>>, vector<8x128xf32>
    tpu.vector_store %arg6[%c0_80, %c0_81], %171 {strides = array<i32>} : memref<8x128xf32, #tpu.memory_space<vmem>>, vector<8x128xf32>,
    %c0_82 = arith.constant 0 : index
    %c0_83 = arith.constant 0 : index
    %173 = vector.load %arg7[%c0_82, %c0_83] : memref<8x128xf32, #tpu.memory_space<vmem>>, vector<8x128xf32>
    tpu.vector_store %arg7[%c0_82, %c0_83], %169 {strides = array<i32>} : memref<8x128xf32, #tpu.memory_space<vmem>>, vector<8x128xf32>,
    %174 = arith.index_cast %c5_i32 : i32 to index
    %c0_84 = arith.constant 0 : index
    %c0_85 = arith.constant 0 : index
    %175 = vector.load %arg4[%174, %c0_84, %c0_85] : memref<8x8x128xf32, #tpu.memory_space<vmem>>, vector<1x8x128xf32>
    %176 = vector.shape_cast %175 : vector<1x8x128xf32> to vector<8x128xf32>
    %177 = vector.shape_cast %171 : vector<8x128xf32> to vector<1x8x128xf32>
    tpu.vector_store %arg4[%174, %c0_84, %c0_85], %177 {strides = array<i32>} : memref<8x8x128xf32, #tpu.memory_space<vmem>>, vector<1x8x128xf32>,
    %c6_i32 = arith.constant 6 : i32
    %c0_86 = arith.constant 0 : index
    %c0_87 = arith.constant 0 : index
    %178 = vector.load %arg6[%c0_86, %c0_87] : memref<8x128xf32, #tpu.memory_space<vmem>>, vector<8x128xf32>
    %c0_88 = arith.constant 0 : index
    %c0_89 = arith.constant 0 : index
    %179 = vector.load %arg7[%c0_88, %c0_89] : memref<8x128xf32, #tpu.memory_space<vmem>>, vector<8x128xf32>
    %180 = arith.index_cast %c6_i32 : i32 to index
    %c0_90 = arith.constant 0 : index
    %c0_91 = arith.constant 0 : index
    %181 = vector.load %arg2[%180, %c0_90, %c0_91] : memref<8x8x512xf32, #tpu.memory_space<vmem>>, vector<1x8x512xf32>
    %182 = vector.shape_cast %181 : vector<1x8x512xf32> to vector<8x512xf32>
    %cst_92 = arith.constant dense<0.000000e+00> : vector<8x512xf32>
    %183 = tpu.matmul %178, %3, %cst_92 {dimension_numbers = #tpu.dot_dimension_numbers<[1], [0], [0], [1], [0, 0, 1, 1], [], []>} : vector<8x128xf32>, vector<128x512xf32>, vector<8x512xf32> -> vector<8x512xf32>
    %184 = arith.addf %182, %183 : vector<8x512xf32>
    %185 = vector.extract_strided_slice %184 {offsets = [0, 0], sizes = [8, 384], strides = [1, 1]} : vector<8x512xf32> to vector<8x384xf32>
    %186 = arith.negf %185 : vector<8x384xf32>
    %187 = math.exp %186 : vector<8x384xf32>
    %cst_93 = arith.constant 1.000000e+00 : f32
    %188 = vector.broadcast %cst_93 : f32 to vector<8x384xf32>
    %189 = arith.addf %188, %187 : vector<8x384xf32>
    %190 = arith.divf %188, %189 : vector<8x384xf32>
    %191 = vector.extract_strided_slice %190 {offsets = [0, 0], sizes = [8, 128], strides = [1, 1]} : vector<8x384xf32> to vector<8x128xf32>
    %192 = vector.extract_strided_slice %190 {offsets = [0, 128], sizes = [8, 128], strides = [1, 1]} : vector<8x384xf32> to vector<8x128xf32>
    %193 = vector.extract_strided_slice %190 {offsets = [0, 256], sizes = [8, 128], strides = [1, 1]} : vector<8x384xf32> to vector<8x128xf32>
    %194 = vector.extract_strided_slice %184 {offsets = [0, 384], sizes = [8, 128], strides = [1, 1]} : vector<8x512xf32> to vector<8x128xf32>
    %195 = math.tanh %194 : vector<8x128xf32>
    %196 = arith.mulf %192, %179 : vector<8x128xf32>
    %197 = arith.mulf %191, %195 : vector<8x128xf32>
    %198 = arith.addf %196, %197 : vector<8x128xf32>
    %199 = math.tanh %198 : vector<8x128xf32>
    %200 = arith.mulf %193, %199 : vector<8x128xf32>
    %c0_94 = arith.constant 0 : index
    %c0_95 = arith.constant 0 : index
    %201 = vector.load %arg6[%c0_94, %c0_95] : memref<8x128xf32, #tpu.memory_space<vmem>>, vector<8x128xf32>
    tpu.vector_store %arg6[%c0_94, %c0_95], %200 {strides = array<i32>} : memref<8x128xf32, #tpu.memory_space<vmem>>, vector<8x128xf32>,
    %c0_96 = arith.constant 0 : index
    %c0_97 = arith.constant 0 : index
    %202 = vector.load %arg7[%c0_96, %c0_97] : memref<8x128xf32, #tpu.memory_space<vmem>>, vector<8x128xf32>
    tpu.vector_store %arg7[%c0_96, %c0_97], %198 {strides = array<i32>} : memref<8x128xf32, #tpu.memory_space<vmem>>, vector<8x128xf32>,
    %203 = arith.index_cast %c6_i32 : i32 to index
    %c0_98 = arith.constant 0 : index
    %c0_99 = arith.constant 0 : index
    %204 = vector.load %arg4[%203, %c0_98, %c0_99] : memref<8x8x128xf32, #tpu.memory_space<vmem>>, vector<1x8x128xf32>
    %205 = vector.shape_cast %204 : vector<1x8x128xf32> to vector<8x128xf32>
    %206 = vector.shape_cast %200 : vector<8x128xf32> to vector<1x8x128xf32>
    tpu.vector_store %arg4[%203, %c0_98, %c0_99], %206 {strides = array<i32>} : memref<8x8x128xf32, #tpu.memory_space<vmem>>, vector<1x8x128xf32>,
    %c7_i32 = arith.constant 7 : i32
    %c0_100 = arith.constant 0 : index
    %c0_101 = arith.constant 0 : index
    %207 = vector.load %arg6[%c0_100, %c0_101] : memref<8x128xf32, #tpu.memory_space<vmem>>, vector<8x128xf32>
    %c0_102 = arith.constant 0 : index
    %c0_103 = arith.constant 0 : index
    %208 = vector.load %arg7[%c0_102, %c0_103] : memref<8x128xf32, #tpu.memory_space<vmem>>, vector<8x128xf32>
    %209 = arith.index_cast %c7_i32 : i32 to index
    %c0_104 = arith.constant 0 : index
    %c0_105 = arith.constant 0 : index
    %210 = vector.load %arg2[%209, %c0_104, %c0_105] : memref<8x8x512xf32, #tpu.memory_space<vmem>>, vector<1x8x512xf32>
    %211 = vector.shape_cast %210 : vector<1x8x512xf32> to vector<8x512xf32>
    %cst_106 = arith.constant dense<0.000000e+00> : vector<8x512xf32>
    %212 = tpu.matmul %207, %3, %cst_106 {dimension_numbers = #tpu.dot_dimension_numbers<[1], [0], [0], [1], [0, 0, 1, 1], [], []>} : vector<8x128xf32>, vector<128x512xf32>, vector<8x512xf32> -> vector<8x512xf32>
    %213 = arith.addf %211, %212 : vector<8x512xf32>
    %214 = vector.extract_strided_slice %213 {offsets = [0, 0], sizes = [8, 384], strides = [1, 1]} : vector<8x512xf32> to vector<8x384xf32>
    %215 = arith.negf %214 : vector<8x384xf32>
    %216 = math.exp %215 : vector<8x384xf32>
    %cst_107 = arith.constant 1.000000e+00 : f32
    %217 = vector.broadcast %cst_107 : f32 to vector<8x384xf32>
    %218 = arith.addf %217, %216 : vector<8x384xf32>
    %219 = arith.divf %217, %218 : vector<8x384xf32>
    %220 = vector.extract_strided_slice %219 {offsets = [0, 0], sizes = [8, 128], strides = [1, 1]} : vector<8x384xf32> to vector<8x128xf32>
    %221 = vector.extract_strided_slice %219 {offsets = [0, 128], sizes = [8, 128], strides = [1, 1]} : vector<8x384xf32> to vector<8x128xf32>
    %222 = vector.extract_strided_slice %219 {offsets = [0, 256], sizes = [8, 128], strides = [1, 1]} : vector<8x384xf32> to vector<8x128xf32>
    %223 = vector.extract_strided_slice %213 {offsets = [0, 384], sizes = [8, 128], strides = [1, 1]} : vector<8x512xf32> to vector<8x128xf32>
    %224 = math.tanh %223 : vector<8x128xf32>
    %225 = arith.mulf %221, %208 : vector<8x128xf32>
    %226 = arith.mulf %220, %224 : vector<8x128xf32>
    %227 = arith.addf %225, %226 : vector<8x128xf32>
    %228 = math.tanh %227 : vector<8x128xf32>
    %229 = arith.mulf %222, %228 : vector<8x128xf32>
    %c0_108 = arith.constant 0 : index
    %c0_109 = arith.constant 0 : index
    %230 = vector.load %arg6[%c0_108, %c0_109] : memref<8x128xf32, #tpu.memory_space<vmem>>, vector<8x128xf32>
    tpu.vector_store %arg6[%c0_108, %c0_109], %229 {strides = array<i32>} : memref<8x128xf32, #tpu.memory_space<vmem>>, vector<8x128xf32>,
    %c0_110 = arith.constant 0 : index
    %c0_111 = arith.constant 0 : index
    %231 = vector.load %arg7[%c0_110, %c0_111] : memref<8x128xf32, #tpu.memory_space<vmem>>, vector<8x128xf32>
    tpu.vector_store %arg7[%c0_110, %c0_111], %227 {strides = array<i32>} : memref<8x128xf32, #tpu.memory_space<vmem>>, vector<8x128xf32>,
    %232 = arith.index_cast %c7_i32 : i32 to index
    %c0_112 = arith.constant 0 : index
    %c0_113 = arith.constant 0 : index
    %233 = vector.load %arg4[%232, %c0_112, %c0_113] : memref<8x8x128xf32, #tpu.memory_space<vmem>>, vector<1x8x128xf32>
    %234 = vector.shape_cast %233 : vector<1x8x128xf32> to vector<8x128xf32>
    %235 = vector.shape_cast %229 : vector<8x128xf32> to vector<1x8x128xf32>
    tpu.vector_store %arg4[%232, %c0_112, %c0_113], %235 {strides = array<i32>} : memref<8x8x128xf32, #tpu.memory_space<vmem>>, vector<1x8x128xf32>,
    %c8_i32 = arith.constant 8 : i32
    %c0_i32_114 = arith.constant 0 : i32
    %236 = arith.cmpi eq, %arg1, %c0_i32_114 : i32
    %237 = arith.extui %236 : i1 to i32
    %c0_i32_115 = arith.constant 0 : i32
    %238 = arith.cmpi ne, %237, %c0_i32_115 : i32
    scf.if %238 {
      %c0_116 = arith.constant 0 : index
      %c0_117 = arith.constant 0 : index
      %239 = vector.load %arg7[%c0_116, %c0_117] : memref<8x128xf32, #tpu.memory_space<vmem>>, vector<8x128xf32>
      %c0_118 = arith.constant 0 : index
      %c0_119 = arith.constant 0 : index
      %240 = vector.load %arg5[%c0_118, %c0_119] : memref<8x128xf32, #tpu.memory_space<vmem>>, vector<8x128xf32>
      tpu.vector_store %arg5[%c0_118, %c0_119], %239 {strides = array<i32>} : memref<8x128xf32, #tpu.memory_space<vmem>>, vector<8x128xf32>,
    } else {
    }
    return
  }
  func.func @transform_0(%arg0: i32, %arg1: i32) -> (i32, i32, i32) {
    %c0_i32 = arith.constant 0 : i32
    %c0_i32_0 = arith.constant 0 : i32
    return %arg1, %arg0, %c0_i32 : i32, i32, i32
  }
  func.func @transform_1(%arg0: i32, %arg1: i32) -> (i32, i32) {
    %c0_i32 = arith.constant 0 : i32
    %c0_i32_0 = arith.constant 0 : i32
    %c0_i32_1 = arith.constant 0 : i32
    return %c0_i32, %c0_i32_0 : i32, i32
  }
  func.func @transform_2(%arg0: i32, %arg1: i32) -> (i32, i32, i32) {
    %c0_i32 = arith.constant 0 : i32
    %c0_i32_0 = arith.constant 0 : i32
    return %arg1, %arg0, %c0_i32 : i32, i32, i32
  }
  func.func @transform_3(%arg0: i32, %arg1: i32) -> (i32, i32) {
    %c0_i32 = arith.constant 0 : i32
    %c0_i32_0 = arith.constant 0 : i32
    return %arg0, %c0_i32 : i32, i32
  }
}

</mosaic_0001>

<llo_original>
// kernel: tpu_custom_call.1
$region0: #{tpu_custom_call.1}
  #allocation0 [shape = 'u32[]', space=smem, size = 0x4, offset = 0x4, fixed_abs, tag = 'smem constant byte address 0x4 - core index']
  #allocation1 [shape = 'u32[144,128]{1,0:T(1,128)}', space=vmem, size = 0x12000, scoped, tag = 'internal scratch']
  #allocation2 [shape = 'f32[8,128]{1,0:T(8,128)}', space=vmem, size = 0x1000, scoped, tag = 'scratch operand']
  #allocation3 [shape = 'f32[8,128]{1,0:T(8,128)}', space=vmem, size = 0x1000, scoped, tag = 'scratch operand']
  %s0 = inlined_call_operand.hbm [shape: f32[8,8,512], index: 0, kind: input, shape index: {}]
  %s1 = inlined_call_operand.hbm [shape: f32[128,512], index: 1, kind: input, shape index: {}]
  %s2 = inlined_call_operand.hbm [shape: f32[8,8,128], index: 2, kind: output, shape index: {0}]
  %s3 = inlined_call_operand.hbm [shape: f32[8,128], index: 3, kind: output, shape index: {1}]
  %4 = xla_tuple %s2, %s3
  %s5 = sld [smem:[#allocation0]]
  $region42: #{tpu_custom_call.1} parent=0
    _
  %s7 = ssub.s32 1, %s5
  %s8 = scalar_select 0, %s7, %s5
  $region1: #{tpu_custom_call.1} parent=0
    #allocation4 [shape = 'u8[131072]{0}', space=vmem, size = 0x20000, scoped, tag = 'input window, operand 0, single buffered']
    #allocation5 [shape = 's32[1]{0}', space=sflag, size = 0x4, scoped, tag = 'scoped memory for tpu_custom_call.1']
    #allocation6 [shape = 's32[1]{0}', space=sflag, size = 0x4, scoped, tag = 'scoped memory for tpu_custom_call.1']
    #allocation7 [shape = 'u8[262144]{0}', space=vmem, size = 0x40000, scoped, tag = 'input window, operand 1, single buffered']
    #allocation8 [shape = 's32[1]{0}', space=sflag, size = 0x4, scoped, tag = 'scoped memory for tpu_custom_call.1']
    #allocation9 [shape = 'u8[32768]{0}', space=vmem, size = 0x8000, scoped, tag = 'output window, operand 0, single buffered']
    #allocation10 [shape = 'u8[4096]{0}', space=vmem, size = 0x1000, scoped, tag = 'output window, operand 1, single buffered']
    #allocation11 [shape = 's32[1]{0}', space=sflag, size = 0x4, scoped, tag = 'scoped memory for tpu_custom_call.1']
    %9 = vsyncpa [#allocation5], 0
    %10 = vsyncpa [#allocation8], 0
    %11 = vsyncpa [#allocation6], 0
    %12 = vsyncpa [#allocation11], 0
    // Predicated region
    $region2: #{tpu_custom_call.1} parent=1 // pred_check
      _
    $region3: #{tpu_custom_call.1} parent=1 // pred_check_branch
      %14 = sbr.rel (0) target = $region5
    $region4: #{tpu_custom_call.1} parent=1 // pred_region
      %s16 = ssub.s32 4096, 4096
      %17 = vsyncadd [#allocation5], %s16
      %s18 = sshll.u32 [#allocation4], 4
      %s19 = int_to_ptr.vmem [resolvable:$true] %s18
      %24 = dma.hbm_to_vmem [thread:$0]  %s0, 4096, %s19, [#allocation5], 512, 512, 32
    $region5: #{tpu_custom_call.1} parent=1 // pred_fallthru
      _
    // Predicated region
    $region6: #{tpu_custom_call.1} parent=1 // pred_check
      _
    $region7: #{tpu_custom_call.1} parent=1 // pred_check_branch
      %26 = sbr.rel (0) target = $region9
    $region8: #{tpu_custom_call.1} parent=1 // pred_region
      %s28 = ssub.s32 8192, 8192
      %29 = vsyncadd [#allocation8], %s28
      %s30 = sshll.u32 [#allocation7], 4
      %s31 = int_to_ptr.vmem [resolvable:$true] %s30
      %36 = dma.hbm_to_vmem [thread:$0]  %s1, 8192, %s31, [#allocation8], 512, 512, 32
    $region9: #{tpu_custom_call.1} parent=1 // pred_fallthru
      _
    // Predicated region
    $region10: #{tpu_custom_call.1} parent=1 // pred_check
      _
    $region11: #{tpu_custom_call.1} parent=1 // pred_check_branch
      %38 = sbr.rel (0) target = $region13
    $region12: #{tpu_custom_call.1} parent=1 // pred_region
      %39 = dma.done [#allocation5], 4096
    $region13: #{tpu_custom_call.1} parent=1 // pred_fallthru
      _
    // Predicated region
    $region14: #{tpu_custom_call.1} parent=1 // pred_check
      _
    $region15: #{tpu_custom_call.1} parent=1 // pred_check_branch
      %41 = sbr.rel (0) target = $region17
    $region16: #{tpu_custom_call.1} parent=1 // pred_region
      %42 = dma.done [#allocation8], 8192
    $region17: #{tpu_custom_call.1} parent=1 // pred_fallthru
      _
    %p43 = scmp.eq.s32.totalorder 0, 0
    // Predicated region
    $region18: #{tpu_custom_call.1} parent=1 // pred_check
      %p44 = pneg %p43
    $region19: #{tpu_custom_call.1} parent=1 // pred_check_branch
      %46 = sbr.rel (%p44) target = $region21
    $region20: #{tpu_custom_call.1} parent=1 // pred_region
      %47 = vst [vmem:[#allocation2] sm:$0xff] 0.0
      %48 = vst [vmem:[#allocation3] sm:$0xff] 0.0
    $region21: #{tpu_custom_call.1} parent=1 // pred_fallthru
      _
    %v49 = vld [vmem:[#allocation7] sm:$0xff]
    %v50 = vld [vmem:[#allocation7 + $0x8] sm:$0xff]
    %v51 = vld [vmem:[#allocation7 + $0x10] sm:$0xff]
    %v52 = vld [vmem:[#allocation7 + $0x18] sm:$0xff]
    %v53 = vld [vmem:[#allocation7 + $0x20] sm:$0xff]
    %v54 = vld [vmem:[#allocation7 + $0x28] sm:$0xff]
    %v55 = vld [vmem:[#allocation7 + $0x30] sm:$0xff]
    %v56 = vld [vmem:[#allocation7 + $0x38] sm:$0xff]
    %v57 = vld [vmem:[#allocation7 + $0x40] sm:$0xff]
    %v58 = vld [vmem:[#allocation7 + $0x48] sm:$0xff]
    %v59 = vld [vmem:[#allocation7 + $0x50] sm:$0xff]
    %v60 = vld [vmem:[#allocation7 + $0x58] sm:$0xff]
    %v61 = vld [vmem:[#allocation7 + $0x60] sm:$0xff]
    %v62 = vld [vmem:[#allocation7 + $0x68] sm:$0xff]
    %v63 = vld [vmem:[#allocation7 + $0x70] sm:$0xff]
    %v64 = vld [vmem:[#allocation7 + $0x78] sm:$0xff]
    %v65 = vld [vmem:[#allocation7 + $0x80] sm:$0xff]
    %v66 = vld [vmem:[#allocation7 + $0x88] sm:$0xff]
    %v67 = vld [vmem:[#allocation7 + $0x90] sm:$0xff]
    %v68 = vld [vmem:[#allocation7 + $0x98] sm:$0xff]
    %v69 = vld [vmem:[#allocation7 + $0xa0] sm:$0xff]
    %v70 = vld [vmem:[#allocation7 + $0xa8] sm:$0xff]
    %v71 = vld [vmem:[#allocation7 + $0xb0] sm:$0xff]
    %v72 = vld [vmem:[#allocation7 + $0xb8] sm:$0xff]
    %v73 = vld [vmem:[#allocation7 + $0xc0] sm:$0xff]
    %v74 = vld [vmem:[#allocation7 + $0xc8] sm:$0xff]
    %v75 = vld [vmem:[#allocation7 + $0xd0] sm:$0xff]
    %v76 = vld [vmem:[#allocation7 + $0xd8] sm:$0xff]
    %v77 = vld [vmem:[#allocation7 + $0xe0] sm:$0xff]
    %v78 = vld [vmem:[#allocation7 + $0xe8] sm:$0xff]
    %v79 = vld [vmem:[#allocation7 + $0xf0] sm:$0xff]
    %v80 = vld [vmem:[#allocation7 + $0xf8] sm:$0xff]
    %v81 = vld [vmem:[#allocation7 + $0x100] sm:$0xff]
    %v82 = vld [vmem:[#allocation7 + $0x108] sm:$0xff]
    %v83 = vld [vmem:[#allocation7 + $0x110] sm:$0xff]
    %v84 = vld [vmem:[#allocation7 + $0x118] sm:$0xff]
    %v85 = vld [vmem:[#allocation7 + $0x120] sm:$0xff]
    %v86 = vld [vmem:[#allocation7 + $0x128] sm:$0xff]
    %v87 = vld [vmem:[#allocation7 + $0x130] sm:$0xff]
    %v88 = vld [vmem:[#allocation7 + $0x138] sm:$0xff]
    %v89 = vld [vmem:[#allocation7 + $0x140] sm:$0xff]
    %v90 = vld [vmem:[#allocation7 + $0x148] sm:$0xff]
    %v91 = vld [vmem:[#allocation7 + $0x150] sm:$0xff]
    %v92 = vld [vmem:[#allocation7 + $0x158] sm:$0xff]
    %v93 = vld [vmem:[#allocation7 + $0x160] sm:$0xff]
    %v94 = vld [vmem:[#allocation7 + $0x168] sm:$0xff]
    %v95 = vld [vmem:[#allocation7 + $0x170] sm:$0xff]
    %v96 = vld [vmem:[#allocation7 + $0x178] sm:$0xff]
    %v97 = vld [vmem:[#allocation7 + $0x180] sm:$0xff]
    %v98 = vld [vmem:[#allocation7 + $0x188] sm:$0xff]
    %v99 = vld [vmem:[#allocation7 + $0x190] sm:$0xff]
    %v100 = vld [vmem:[#allocation7 + $0x198] sm:$0xff]
    %v101 = vld [vmem:[#allocation7 + $0x1a0] sm:$0xff]
    %v102 = vld [vmem:[#allocation7 + $0x1a8] sm:$0xff]
    %v103 = vld [vmem:[#allocation7 + $0x1b0] sm:$0xff]
    %v104 = vld [vmem:[#allocation7 + $0x1b8] sm:$0xff]
    %v105 = vld [vmem:[#allocation7 + $0x1c0] sm:$0xff]
    %v106 = vld [vmem:[#allocation7 + $0x1c8] sm:$0xff]
    %v107 = vld [vmem:[#allocation7 + $0x1d0] sm:$0xff]
    %v108 = vld [vmem:[#allocation7 + $0x1d8] sm:$0xff]
    %v109 = vld [vmem:[#allocation7 + $0x1e0] sm:$0xff]
    %v110 = vld [vmem:[#allocation7 + $0x1e8] sm:$0xff]
    %v111 = vld [vmem:[#allocation7 + $0x1f0] sm:$0xff]
    %v112 = vld [vmem:[#allocation7 + $0x1f8] sm:$0xff]
    %v113 = vld [vmem:[#allocation2] sm:$0xff]
    %v114 = vld [vmem:[#allocation3] sm:$0xff]
    %v115 = vld [vmem:[#allocation4] sm:$0xff]
    %v116 = vld [vmem:[#allocation4 + $0x8] sm:$0xff]
    %v117 = vld [vmem:[#allocation4 + $0x10] sm:$0xff]
    %v118 = vld [vmem:[#allocation4 + $0x18] sm:$0xff]
    %119 = vmatprep.subr.mxu0 %v50
    %120 = vmatpush1.msra.mxu0 %v49
    %121 = vmatprep.subr.mxu0 %v54
    %122 = vmatpush1.msra.mxu0 %v53
    %123 = vmatprep.subr.mxu0 %v58
    %124 = vmatpush1.msra.mxu0 %v57
    %125 = vmatprep.subr.mxu0 %v62
    %126 = vmatpush1.msra.mxu0 %v61
    %127 = vmatprep.subr.mxu0 %v66
    %128 = vmatpush1.msra.mxu0 %v65
    %129 = vmatprep.subr.mxu0 %v70
    %130 = vmatpush1.msra.mxu0 %v69
    %131 = vmatprep.subr.mxu0 %v74
    %132 = vmatpush1.msra.mxu0 %v73
    %133 = vmatprep.subr.mxu0 %v78
    %134 = vmatpush1.msra.mxu0 %v77
    %135 = vmatprep.subr.mxu0 %v82
    %136 = vmatpush1.msra.mxu0 %v81
    %137 = vmatprep.subr.mxu0 %v86
    %138 = vmatpush1.msra.mxu0 %v85
    %139 = vmatprep.subr.mxu0 %v90
    %140 = vmatpush1.msra.mxu0 %v89
    %141 = vmatprep.subr.mxu0 %v94
    %142 = vmatpush1.msra.mxu0 %v93
    %143 = vmatprep.subr.mxu0 %v98
    %144 = vmatpush1.msra.mxu0 %v97
    %145 = vmatprep.subr.mxu0 %v102
    %146 = vmatpush1.msra.mxu0 %v101
    %147 = vmatprep.subr.mxu0 %v106
    %148 = vmatpush1.msra.mxu0 %v105
    %149 = vmatprep.subr.mxu0 %v110
    %150 = vmatpush1.msra.mxu0 %v109
    %151 = vmatprep.subr.mxu0 0.0
    %152 = vmatpush1.msra.mxu0 0.0
    %153 = vmatprep.subr.mxu0 0.0
    %154 = vmatpush1.msra.mxu0 0.0
    %155 = vmatprep.subr.mxu0 0.0
    %156 = vmatpush1.msra.mxu0 0.0
    %157 = vmatprep.subr.mxu0 0.0
    %158 = vmatpush1.msra.mxu0 0.0
    %159 = vmatprep.subr.mxu0 0.0
    %160 = vmatpush1.msra.mxu0 0.0
    %161 = vmatprep.subr.mxu0 0.0
    %162 = vmatpush1.msra.mxu0 0.0
    %163 = vmatprep.subr.mxu0 0.0
    %164 = vmatpush1.msra.mxu0 0.0
    %165 = vmatprep.subr.mxu0 0.0
    %166 = vmatpush1.msra.mxu0 0.0
    %167 = vmatprep.subr.mxu0 0.0
    %168 = vmatpush1.msra.mxu0 0.0
    %169 = vmatprep.subr.mxu0 0.0
    %170 = vmatpush1.msra.mxu0 0.0
    %171 = vmatprep.subr.mxu0 0.0
    %172 = vmatpush1.msra.mxu0 0.0
    %173 = vmatprep.subr.mxu0 0.0
    %174 = vmatpush1.msra.mxu0 0.0
    %175 = vmatprep.subr.mxu0 0.0
    %176 = vmatpush1.msra.mxu0 0.0
    %177 = vmatprep.subr.mxu0 0.0
    %178 = vmatpush1.msra.mxu0 0.0
    %179 = vmatprep.subr.mxu0 0.0
    %180 = vmatpush1.msra.mxu0 0.0
    %181 = vmatprep.subr.mxu0 0.0
    %182 = vmatpush1.msra.mxu0 0.0
    %183 = vmatprep.mubr.f32.mxu0 0.0
    %184 = vmatmul.mubr.f32.gmra.mrb[0].mxu0 %v113
    %v185 = vpop.f32.mrb[0].mxu0
    %v186 = vadd.f32 0.0, %v185
    %v187 = vpop.f32.mrb[0].mxu0
    %v188 = vadd.f32 0.0, %v187
    %189 = vdwg.mxu0
    %190 = vmatprep.subr.mxu0 %v52
    %191 = vmatpush1.msra.mxu0 %v51
    %192 = vmatprep.subr.mxu0 %v56
    %193 = vmatpush1.msra.mxu0 %v55
    %194 = vmatprep.subr.mxu0 %v60
    %195 = vmatpush1.msra.mxu0 %v59
    %196 = vmatprep.subr.mxu0 %v64
    %197 = vmatpush1.msra.mxu0 %v63
    %198 = vmatprep.subr.mxu0 %v68
    %199 = vmatpush1.msra.mxu0 %v67
    %200 = vmatprep.subr.mxu0 %v72
    %201 = vmatpush1.msra.mxu0 %v71
    %202 = vmatprep.subr.mxu0 %v76
    %203 = vmatpush1.msra.mxu0 %v75
    %204 = vmatprep.subr.mxu0 %v80
    %205 = vmatpush1.msra.mxu0 %v79
    %206 = vmatprep.subr.mxu0 %v84
    %207 = vmatpush1.msra.mxu0 %v83
    %208 = vmatprep.subr.mxu0 %v88
    %209 = vmatpush1.msra.mxu0 %v87
    %210 = vmatprep.subr.mxu0 %v92
    %211 = vmatpush1.msra.mxu0 %v91
    %212 = vmatprep.subr.mxu0 %v96
    %213 = vmatpush1.msra.mxu0 %v95
    %214 = vmatprep.subr.mxu0 %v100
    %215 = vmatpush1.msra.mxu0 %v99
    %216 = vmatprep.subr.mxu0 %v104
    %217 = vmatpush1.msra.mxu0 %v103
    %218 = vmatprep.subr.mxu0 %v108
    %219 = vmatpush1.msra.mxu0 %v107
    %220 = vmatprep.subr.mxu0 %v112
    %221 = vmatpush1.msra.mxu0 %v111
    %222 = vmatprep.subr.mxu0 0.0
    %223 = vmatpush1.msra.mxu0 0.0
    %224 = vmatprep.subr.mxu0 0.0
    %225 = vmatpush1.msra.mxu0 0.0
    %226 = vmatprep.subr.mxu0 0.0
    %227 = vmatpush1.msra.mxu0 0.0
    %228 = vmatprep.subr.mxu0 0.0
    %229 = vmatpush1.msra.mxu0 0.0
    %230 = vmatprep.subr.mxu0 0.0
    %231 = vmatpush1.msra.mxu0 0.0
    %232 = vmatprep.subr.mxu0 0.0
    %233 = vmatpush1.msra.mxu0 0.0
    %234 = vmatprep.subr.mxu0 0.0
    %235 = vmatpush1.msra.mxu0 0.0
    %236 = vmatprep.subr.mxu0 0.0
    %237 = vmatpush1.msra.mxu0 0.0
    %238 = vmatprep.subr.mxu0 0.0
    %239 = vmatpush1.msra.mxu0 0.0
    %240 = vmatprep.subr.mxu0 0.0
    %241 = vmatpush1.msra.mxu0 0.0
    %242 = vmatprep.subr.mxu0 0.0
    %243 = vmatpush1.msra.mxu0 0.0
    %244 = vmatprep.subr.mxu0 0.0
    %245 = vmatpush1.msra.mxu0 0.0
    %246 = vmatprep.subr.mxu0 0.0
    %247 = vmatpush1.msra.mxu0 0.0
    %248 = vmatprep.subr.mxu0 0.0
    %249 = vmatpush1.msra.mxu0 0.0
    %250 = vmatprep.subr.mxu0 0.0
    %251 = vmatpush1.msra.mxu0 0.0
    %252 = vmatprep.subr.mxu0 0.0
    %253 = vmatpush1.msra.mxu0 0.0
    %254 = vmatprep.mubr.f32.mxu0 0.0
    %255 = vmatmul.mubr.f32.gmra.mrb[0].mxu0 %v113
    %v256 = vpop.f32.mrb[0].mxu0
    %v257 = vadd.f32 0.0, %v256
    %v258 = vpop.f32.mrb[0].mxu0
    %v259 = vadd.f32 0.0, %v258
    %260 = vdwg.mxu0
    %v261 = vadd.f32 %v115, %v186
    %v262 = vadd.f32 %v116, %v188
    %v263 = vadd.f32 %v117, %v257
    %v264 = vadd.f32 %v118, %v259
    %v265 = vxor.u32 %v261, 2147483648
    %v266 = vxor.u32 %v262, 2147483648
    %v267 = vxor.u32 %v263, 2147483648
    %v268 = vmul.f32 %v265, 1.442695
    %v269 = vpow.pop %v268
    %v270 = vmul.f32 %v266, 1.442695
    %v271 = vpow.pop %v270
    %v272 = vmul.f32 %v267, 1.442695
    %v273 = vpow.pop %v272
    %v274 = vadd.f32 %v269, 1.0
    %v275 = vadd.f32 %v271, 1.0
    %v276 = vadd.f32 %v273, 1.0
    %v277 = vrcp.pop %v274
    %v278 = vmul.f32 1.0, %v277
    %v279 = vrcp.pop %v275
    %v280 = vmul.f32 1.0, %v279
    %v281 = vrcp.pop %v276
    %v282 = vmul.f32 1.0, %v281
    %v283 = vtanh.pop %v264
    %v284 = vmul.f32 %v280, %v114
    %v285 = vmul.f32 %v278, %v283
    %v286 = vadd.f32 %v284, %v285
    %v287 = vtanh.pop %v286
    %v288 = vmul.f32 %v282, %v287
    %289 = vst [vmem:[#allocation2] sm:$0xff] %v288
    %290 = vst [vmem:[#allocation3] sm:$0xff] %v286
    %291 = vst [vmem:[#allocation9] sm:$0xff] %v288
    %v292 = vld [vmem:[#allocation2] sm:$0xff]
    %v293 = vld [vmem:[#allocation3] sm:$0xff]
    %s294 = scalar_lea.vmem [#allocation4], 32
    %v295 = vld [vmem:[%s294] sm:$0xff]
    %v296 = vld [vmem:[%s294 + $0x8] sm:$0xff]
    %v297 = vld [vmem:[%s294 + $0x10] sm:$0xff]
    %v298 = vld [vmem:[%s294 + $0x18] sm:$0xff]
    %299 = vmatprep.subr.mxu0 %v50
    %300 = vmatpush1.msra.mxu0 %v49
    %301 = vmatprep.subr.mxu0 %v54
    %302 = vmatpush1.msra.mxu0 %v53
    %303 = vmatprep.subr.mxu0 %v58
    %304 = vmatpush1.msra.mxu0 %v57
    %305 = vmatprep.subr.mxu0 %v62
    %306 = vmatpush1.msra.mxu0 %v61
    %307 = vmatprep.subr.mxu0 %v66
    %308 = vmatpush1.msra.mxu0 %v65
    %309 = vmatprep.subr.mxu0 %v70
    %310 = vmatpush1.msra.mxu0 %v69
    %311 = vmatprep.subr.mxu0 %v74
    %312 = vmatpush1.msra.mxu0 %v73
    %313 = vmatprep.subr.mxu0 %v78
    %314 = vmatpush1.msra.mxu0 %v77
    %315 = vmatprep.subr.mxu0 %v82
    %316 = vmatpush1.msra.mxu0 %v81
    %317 = vmatprep.subr.mxu0 %v86
    %318 = vmatpush1.msra.mxu0 %v85
    %319 = vmatprep.subr.mxu0 %v90
    %320 = vmatpush1.msra.mxu0 %v89
    %321 = vmatprep.subr.mxu0 %v94
    %322 = vmatpush1.msra.mxu0 %v93
    %323 = vmatprep.subr.mxu0 %v98
    %324 = vmatpush1.msra.mxu0 %v97
    %325 = vmatprep.subr.mxu0 %v102
    %326 = vmatpush1.msra.mxu0 %v101
    %327 = vmatprep.subr.mxu0 %v106
    %328 = vmatpush1.msra.mxu0 %v105
    %329 = vmatprep.subr.mxu0 %v110
    %330 = vmatpush1.msra.mxu0 %v109
    %331 = vmatprep.subr.mxu0 0.0
    %332 = vmatpush1.msra.mxu0 0.0
    %333 = vmatprep.subr.mxu0 0.0
    %334 = vmatpush1.msra.mxu0 0.0
    %335 = vmatprep.subr.mxu0 0.0
    %336 = vmatpush1.msra.mxu0 0.0
    %337 = vmatprep.subr.mxu0 0.0
    %338 = vmatpush1.msra.mxu0 0.0
    %339 = vmatprep.subr.mxu0 0.0
    %340 = vmatpush1.msra.mxu0 0.0
    %341 = vmatprep.subr.mxu0 0.0
    %342 = vmatpush1.msra.mxu0 0.0
    %343 = vmatprep.subr.mxu0 0.0
    %344 = vmatpush1.msra.mxu0 0.0
    %345 = vmatprep.subr.mxu0 0.0
    %346 = vmatpush1.msra.mxu0 0.0
    %347 = vmatprep.subr.mxu0 0.0
    %348 = vmatpush1.msra.mxu0 0.0
    %349 = vmatprep.subr.mxu0 0.0
    %350 = vmatpush1.msra.mxu0 0.0
    %351 = vmatprep.subr.mxu0 0.0
    %352 = vmatpush1.msra.mxu0 0.0
    %353 = vmatprep.subr.mxu0 0.0
    %354 = vmatpush1.msra.mxu0 0.0
    %355 = vmatprep.subr.mxu0 0.0
    %356 = vmatpush1.msra.mxu0 0.0
    %357 = vmatprep.subr.mxu0 0.0
    %358 = vmatpush1.msra.mxu0 0.0
    %359 = vmatprep.subr.mxu0 0.0
    %360 = vmatpush1.msra.mxu0 0.0
    %361 = vmatprep.subr.mxu0 0.0
    %362 = vmatpush1.msra.mxu0 0.0
    %363 = vmatprep.mubr.f32.mxu0 0.0
    %364 = vmatmul.mubr.f32.gmra.mrb[0].mxu0 %v292
    %v365 = vpop.f32.mrb[0].mxu0
    %v366 = vadd.f32 0.0, %v365
    %v367 = vpop.f32.mrb[0].mxu0
    %v368 = vadd.f32 0.0, %v367
    %369 = vdwg.mxu0
    %370 = vmatprep.subr.mxu0 %v52
    %371 = vmatpush1.msra.mxu0 %v51
    %372 = vmatprep.subr.mxu0 %v56
    %373 = vmatpush1.msra.mxu0 %v55
    %374 = vmatprep.subr.mxu0 %v60
    %375 = vmatpush1.msra.mxu0 %v59
    %376 = vmatprep.subr.mxu0 %v64
    %377 = vmatpush1.msra.mxu0 %v63
    %378 = vmatprep.subr.mxu0 %v68
    %379 = vmatpush1.msra.mxu0 %v67
    %380 = vmatprep.subr.mxu0 %v72
    %381 = vmatpush1.msra.mxu0 %v71
    %382 = vmatprep.subr.mxu0 %v76
    %383 = vmatpush1.msra.mxu0 %v75
    %384 = vmatprep.subr.mxu0 %v80
    %385 = vmatpush1.msra.mxu0 %v79
    %386 = vmatprep.subr.mxu0 %v84
    %387 = vmatpush1.msra.mxu0 %v83
    %388 = vmatprep.subr.mxu0 %v88
    %389 = vmatpush1.msra.mxu0 %v87
    %390 = vmatprep.subr.mxu0 %v92
    %391 = vmatpush1.msra.mxu0 %v91
    %392 = vmatprep.subr.mxu0 %v96
    %393 = vmatpush1.msra.mxu0 %v95
    %394 = vmatprep.subr.mxu0 %v100
    %395 = vmatpush1.msra.mxu0 %v99
    %396 = vmatprep.subr.mxu0 %v104
    %397 = vmatpush1.msra.mxu0 %v103
    %398 = vmatprep.subr.mxu0 %v108
    %399 = vmatpush1.msra.mxu0 %v107
    %400 = vmatprep.subr.mxu0 %v112
    %401 = vmatpush1.msra.mxu0 %v111
    %402 = vmatprep.subr.mxu0 0.0
    %403 = vmatpush1.msra.mxu0 0.0
    %404 = vmatprep.subr.mxu0 0.0
    %405 = vmatpush1.msra.mxu0 0.0
    %406 = vmatprep.subr.mxu0 0.0
    %407 = vmatpush1.msra.mxu0 0.0
    %408 = vmatprep.subr.mxu0 0.0
    %409 = vmatpush1.msra.mxu0 0.0
    %410 = vmatprep.subr.mxu0 0.0
    %411 = vmatpush1.msra.mxu0 0.0
    %412 = vmatprep.subr.mxu0 0.0
    %413 = vmatpush1.msra.mxu0 0.0
    %414 = vmatprep.subr.mxu0 0.0
    %415 = vmatpush1.msra.mxu0 0.0
    %416 = vmatprep.subr.mxu0 0.0
    %417 = vmatpush1.msra.mxu0 0.0
    %418 = vmatprep.subr.mxu0 0.0
    %419 = vmatpush1.msra.mxu0 0.0
    %420 = vmatprep.subr.mxu0 0.0
    %421 = vmatpush1.msra.mxu0 0.0
    %422 = vmatprep.subr.mxu0 0.0
    %423 = vmatpush1.msra.mxu0 0.0
    %424 = vmatprep.subr.mxu0 0.0
    %425 = vmatpush1.msra.mxu0 0.0
    %426 = vmatprep.subr.mxu0 0.0
    %427 = vmatpush1.msra.mxu0 0.0
    %428 = vmatprep.subr.mxu0 0.0
    %429 = vmatpush1.msra.mxu0 0.0
    %430 = vmatprep.subr.mxu0 0.0
    %431 = vmatpush1.msra.mxu0 0.0
    %432 = vmatprep.subr.mxu0 0.0
    %433 = vmatpush1.msra.mxu0 0.0
    %434 = vmatprep.mubr.f32.mxu0 0.0
    %435 = vmatmul.mubr.f32.gmra.mrb[0].mxu0 %v292
    %v436 = vpop.f32.mrb[0].mxu0
    %v437 = vadd.f32 0.0, %v436
    %v438 = vpop.f32.mrb[0].mxu0
    %v439 = vadd.f32 0.0, %v438
    %440 = vdwg.mxu0
    %v441 = vadd.f32 %v295, %v366
    %v442 = vadd.f32 %v296, %v368
    %v443 = vadd.f32 %v297, %v437
    %v444 = vadd.f32 %v298, %v439
    %v445 = vxor.u32 %v441, 2147483648
    %v446 = vxor.u32 %v442, 2147483648
    %v447 = vxor.u32 %v443, 2147483648
    %v448 = vmul.f32 %v445, 1.442695
    %v449 = vpow.pop %v448
    %v450 = vmul.f32 %v446, 1.442695
    %v451 = vpow.pop %v450
    %v452 = vmul.f32 %v447, 1.442695
    %v453 = vpow.pop %v452
    %v454 = vadd.f32 %v449, 1.0
    %v455 = vadd.f32 %v451, 1.0
    %v456 = vadd.f32 %v453, 1.0
    %v457 = vrcp.pop %v454
    %v458 = vmul.f32 1.0, %v457
    %v459 = vrcp.pop %v455
    %v460 = vmul.f32 1.0, %v459
    %v461 = vrcp.pop %v456
    %v462 = vmul.f32 1.0, %v461
    %v463 = vtanh.pop %v444
    %v464 = vmul.f32 %v460, %v293
    %v465 = vmul.f32 %v458, %v463
    %v466 = vadd.f32 %v464, %v465
    %v467 = vtanh.pop %v466
    %v468 = vmul.f32 %v462, %v467
    %469 = vst [vmem:[#allocation2] sm:$0xff] %v468
    %470 = vst [vmem:[#allocation3] sm:$0xff] %v466
    %s471 = scalar_lea.vmem [#allocation9], 8
    %472 = vst [vmem:[%s471] sm:$0xff] %v468
    %v473 = vld [vmem:[#allocation2] sm:$0xff]
    %v474 = vld [vmem:[#allocation3] sm:$0xff]
    %s475 = scalar_lea.vmem [#allocation4], 64
    %v476 = vld [vmem:[%s475] sm:$0xff]
    %v477 = vld [vmem:[%s475 + $0x8] sm:$0xff]
    %v478 = vld [vmem:[%s475 + $0x10] sm:$0xff]
    %v479 = vld [vmem:[%s475 + $0x18] sm:$0xff]
    %480 = vmatprep.subr.mxu0 %v50
    %481 = vmatpush1.msra.mxu0 %v49
    %482 = vmatprep.subr.mxu0 %v54
    %483 = vmatpush1.msra.mxu0 %v53
    %484 = vmatprep.subr.mxu0 %v58
    %485 = vmatpush1.msra.mxu0 %v57
    %486 = vmatprep.subr.mxu0 %v62
    %487 = vmatpush1.msra.mxu0 %v61
    %488 = vmatprep.subr.mxu0 %v66
    %489 = vmatpush1.msra.mxu0 %v65
    %490 = vmatprep.subr.mxu0 %v70
    %491 = vmatpush1.msra.mxu0 %v69
    %492 = vmatprep.subr.mxu0 %v74
    %493 = vmatpush1.msra.mxu0 %v73
    %494 = vmatprep.subr.mxu0 %v78
    %495 = vmatpush1.msra.mxu0 %v77
    %496 = vmatprep.subr.mxu0 %v82
    %497 = vmatpush1.msra.mxu0 %v81
    %498 = vmatprep.subr.mxu0 %v86
    %499 = vmatpush1.msra.mxu0 %v85
    %500 = vmatprep.subr.mxu0 %v90
    %501 = vmatpush1.msra.mxu0 %v89
    %502 = vmatprep.subr.mxu0 %v94
    %503 = vmatpush1.msra.mxu0 %v93
    %504 = vmatprep.subr.mxu0 %v98
    %505 = vmatpush1.msra.mxu0 %v97
    %506 = vmatprep.subr.mxu0 %v102
    %507 = vmatpush1.msra.mxu0 %v101
    %508 = vmatprep.subr.mxu0 %v106
    %509 = vmatpush1.msra.mxu0 %v105
    %510 = vmatprep.subr.mxu0 %v110
    %511 = vmatpush1.msra.mxu0 %v109
    %512 = vmatprep.subr.mxu0 0.0
    %513 = vmatpush1.msra.mxu0 0.0
    %514 = vmatprep.subr.mxu0 0.0
    %515 = vmatpush1.msra.mxu0 0.0
    %516 = vmatprep.subr.mxu0 0.0
    %517 = vmatpush1.msra.mxu0 0.0
    %518 = vmatprep.subr.mxu0 0.0
    %519 = vmatpush1.msra.mxu0 0.0
    %520 = vmatprep.subr.mxu0 0.0
    %521 = vmatpush1.msra.mxu0 0.0
    %522 = vmatprep.subr.mxu0 0.0
    %523 = vmatpush1.msra.mxu0 0.0
    %524 = vmatprep.subr.mxu0 0.0
    %525 = vmatpush1.msra.mxu0 0.0
    %526 = vmatprep.subr.mxu0 0.0
    %527 = vmatpush1.msra.mxu0 0.0
    %528 = vmatprep.subr.mxu0 0.0
    %529 = vmatpush1.msra.mxu0 0.0
    %530 = vmatprep.subr.mxu0 0.0
    %531 = vmatpush1.msra.mxu0 0.0
    %532 = vmatprep.subr.mxu0 0.0
    %533 = vmatpush1.msra.mxu0 0.0
    %534 = vmatprep.subr.mxu0 0.0
    %535 = vmatpush1.msra.mxu0 0.0
    %536 = vmatprep.subr.mxu0 0.0
    %537 = vmatpush1.msra.mxu0 0.0
    %538 = vmatprep.subr.mxu0 0.0
    %539 = vmatpush1.msra.mxu0 0.0
    %540 = vmatprep.subr.mxu0 0.0
    %541 = vmatpush1.msra.mxu0 0.0
    %542 = vmatprep.subr.mxu0 0.0
    %543 = vmatpush1.msra.mxu0 0.0
    %544 = vmatprep.mubr.f32.mxu0 0.0
    %545 = vmatmul.mubr.f32.gmra.mrb[0].mxu0 %v473
    %v546 = vpop.f32.mrb[0].mxu0
    %v547 = vadd.f32 0.0, %v546
    %v548 = vpop.f32.mrb[0].mxu0
    %v549 = vadd.f32 0.0, %v548
    %550 = vdwg.mxu0
    %551 = vmatprep.subr.mxu0 %v52
    %552 = vmatpush1.msra.mxu0 %v51
    %553 = vmatprep.subr.mxu0 %v56
    %554 = vmatpush1.msra.mxu0 %v55
    %555 = vmatprep.subr.mxu0 %v60
    %556 = vmatpush1.msra.mxu0 %v59
    %557 = vmatprep.subr.mxu0 %v64
    %558 = vmatpush1.msra.mxu0 %v63
    %559 = vmatprep.subr.mxu0 %v68
    %560 = vmatpush1.msra.mxu0 %v67
    %561 = vmatprep.subr.mxu0 %v72
    %562 = vmatpush1.msra.mxu0 %v71
    %563 = vmatprep.subr.mxu0 %v76
    %564 = vmatpush1.msra.mxu0 %v75
    %565 = vmatprep.subr.mxu0 %v80
    %566 = vmatpush1.msra.mxu0 %v79
    %567 = vmatprep.subr.mxu0 %v84
    %568 = vmatpush1.msra.mxu0 %v83
    %569 = vmatprep.subr.mxu0 %v88
    %570 = vmatpush1.msra.mxu0 %v87
    %571 = vmatprep.subr.mxu0 %v92
    %572 = vmatpush1.msra.mxu0 %v91
    %573 = vmatprep.subr.mxu0 %v96
    %574 = vmatpush1.msra.mxu0 %v95
    %575 = vmatprep.subr.mxu0 %v100
    %576 = vmatpush1.msra.mxu0 %v99
    %577 = vmatprep.subr.mxu0 %v104
    %578 = vmatpush1.msra.mxu0 %v103
    %579 = vmatprep.subr.mxu0 %v108
    %580 = vmatpush1.msra.mxu0 %v107
    %581 = vmatprep.subr.mxu0 %v112
    %582 = vmatpush1.msra.mxu0 %v111
    %583 = vmatprep.subr.mxu0 0.0
    %584 = vmatpush1.msra.mxu0 0.0
    %585 = vmatprep.subr.mxu0 0.0
    %586 = vmatpush1.msra.mxu0 0.0
    %587 = vmatprep.subr.mxu0 0.0
    %588 = vmatpush1.msra.mxu0 0.0
    %589 = vmatprep.subr.mxu0 0.0
    %590 = vmatpush1.msra.mxu0 0.0
    %591 = vmatprep.subr.mxu0 0.0
    %592 = vmatpush1.msra.mxu0 0.0
    %593 = vmatprep.subr.mxu0 0.0
    %594 = vmatpush1.msra.mxu0 0.0
    %595 = vmatprep.subr.mxu0 0.0
    %596 = vmatpush1.msra.mxu0 0.0
    %597 = vmatprep.subr.mxu0 0.0
    %598 = vmatpush1.msra.mxu0 0.0
    %599 = vmatprep.subr.mxu0 0.0
    %600 = vmatpush1.msra.mxu0 0.0
    %601 = vmatprep.subr.mxu0 0.0
    %602 = vmatpush1.msra.mxu0 0.0
    %603 = vmatprep.subr.mxu0 0.0
    %604 = vmatpush1.msra.mxu0 0.0
    %605 = vmatprep.subr.mxu0 0.0
    %606 = vmatpush1.msra.mxu0 0.0
    %607 = vmatprep.subr.mxu0 0.0
    %608 = vmatpush1.msra.mxu0 0.0
    %609 = vmatprep.subr.mxu0 0.0
    %610 = vmatpush1.msra.mxu0 0.0
    %611 = vmatprep.subr.mxu0 0.0
    %612 = vmatpush1.msra.mxu0 0.0
    %613 = vmatprep.subr.mxu0 0.0
    %614 = vmatpush1.msra.mxu0 0.0
    %615 = vmatprep.mubr.f32.mxu0 0.0
    %616 = vmatmul.mubr.f32.gmra.mrb[0].mxu0 %v473
    %v617 = vpop.f32.mrb[0].mxu0
    %v618 = vadd.f32 0.0, %v617
    %v619 = vpop.f32.mrb[0].mxu0
    %v620 = vadd.f32 0.0, %v619
    %621 = vdwg.mxu0
    %v622 = vadd.f32 %v476, %v547
    %v623 = vadd.f32 %v477, %v549
    %v624 = vadd.f32 %v478, %v618
    %v625 = vadd.f32 %v479, %v620
    %v626 = vxor.u32 %v622, 2147483648
    %v627 = vxor.u32 %v623, 2147483648
    %v628 = vxor.u32 %v624, 2147483648
    %v629 = vmul.f32 %v626, 1.442695
    %v630 = vpow.pop %v629
    %v631 = vmul.f32 %v627, 1.442695
    %v632 = vpow.pop %v631
    %v633 = vmul.f32 %v628, 1.442695
    %v634 = vpow.pop %v633
    %v635 = vadd.f32 %v630, 1.0
    %v636 = vadd.f32 %v632, 1.0
    %v637 = vadd.f32 %v634, 1.0
    %v638 = vrcp.pop %v635
    %v639 = vmul.f32 1.0, %v638
    %v640 = vrcp.pop %v636
    %v641 = vmul.f32 1.0, %v640
    %v642 = vrcp.pop %v637
    %v643 = vmul.f32 1.0, %v642
    %v644 = vtanh.pop %v625
    %v645 = vmul.f32 %v641, %v474
    %v646 = vmul.f32 %v639, %v644
    %v647 = vadd.f32 %v645, %v646
    %v648 = vtanh.pop %v647
    %v649 = vmul.f32 %v643, %v648
    %650 = vst [vmem:[#allocation2] sm:$0xff] %v649
    %651 = vst [vmem:[#allocation3] sm:$0xff] %v647
    %s652 = scalar_lea.vmem [#allocation9], 16
    %653 = vst [vmem:[%s652] sm:$0xff] %v649
    %v654 = vld [vmem:[#allocation2] sm:$0xff]
    %v655 = vld [vmem:[#allocation3] sm:$0xff]
    %s656 = scalar_lea.vmem [#allocation4], 96
    %v657 = vld [vmem:[%s656] sm:$0xff]
    %v658 = vld [vmem:[%s656 + $0x8] sm:$0xff]
    %v659 = vld [vmem:[%s656 + $0x10] sm:$0xff]
    %v660 = vld [vmem:[%s656 + $0x18] sm:$0xff]
    %661 = vmatprep.subr.mxu0 %v50
    %662 = vmatpush1.msra.mxu0 %v49
    %663 = vmatprep.subr.mxu0 %v54
    %664 = vmatpush1.msra.mxu0 %v53
    %665 = vmatprep.subr.mxu0 %v58
    %666 = vmatpush1.msra.mxu0 %v57
    %667 = vmatprep.subr.mxu0 %v62
    %668 = vmatpush1.msra.mxu0 %v61
    %669 = vmatprep.subr.mxu0 %v66
    %670 = vmatpush1.msra.mxu0 %v65
    %671 = vmatprep.subr.mxu0 %v70
    %672 = vmatpush1.msra.mxu0 %v69
    %673 = vmatprep.subr.mxu0 %v74
    %674 = vmatpush1.msra.mxu0 %v73
    %675 = vmatprep.subr.mxu0 %v78
    %676 = vmatpush1.msra.mxu0 %v77
    %677 = vmatprep.subr.mxu0 %v82
    %678 = vmatpush1.msra.mxu0 %v81
    %679 = vmatprep.subr.mxu0 %v86
    %680 = vmatpush1.msra.mxu0 %v85
    %681 = vmatprep.subr.mxu0 %v90
    %682 = vmatpush1.msra.mxu0 %v89
    %683 = vmatprep.subr.mxu0 %v94
    %684 = vmatpush1.msra.mxu0 %v93
    %685 = vmatprep.subr.mxu0 %v98
    %686 = vmatpush1.msra.mxu0 %v97
    %687 = vmatprep.subr.mxu0 %v102
    %688 = vmatpush1.msra.mxu0 %v101
    %689 = vmatprep.subr.mxu0 %v106
    %690 = vmatpush1.msra.mxu0 %v105
    %691 = vmatprep.subr.mxu0 %v110
    %692 = vmatpush1.msra.mxu0 %v109
    %693 = vmatprep.subr.mxu0 0.0
    %694 = vmatpush1.msra.mxu0 0.0
    %695 = vmatprep.subr.mxu0 0.0
    %696 = vmatpush1.msra.mxu0 0.0
    %697 = vmatprep.subr.mxu0 0.0
    %698 = vmatpush1.msra.mxu0 0.0
    %699 = vmatprep.subr.mxu0 0.0
    %700 = vmatpush1.msra.mxu0 0.0
    %701 = vmatprep.subr.mxu0 0.0
    %702 = vmatpush1.msra.mxu0 0.0
    %703 = vmatprep.subr.mxu0 0.0
    %704 = vmatpush1.msra.mxu0 0.0
    %705 = vmatprep.subr.mxu0 0.0
    %706 = vmatpush1.msra.mxu0 0.0
    %707 = vmatprep.subr.mxu0 0.0
    %708 = vmatpush1.msra.mxu0 0.0
    %709 = vmatprep.subr.mxu0 0.0
    %710 = vmatpush1.msra.mxu0 0.0
    %711 = vmatprep.subr.mxu0 0.0
    %712 = vmatpush1.msra.mxu0 0.0
    %713 = vmatprep.subr.mxu0 0.0
    %714 = vmatpush1.msra.mxu0 0.0
    %715 = vmatprep.subr.mxu0 0.0
    %716 = vmatpush1.msra.mxu0 0.0
    %717 = vmatprep.subr.mxu0 0.0
    %718 = vmatpush1.msra.mxu0 0.0
    %719 = vmatprep.subr.mxu0 0.0
    %720 = vmatpush1.msra.mxu0 0.0
    %721 = vmatprep.subr.mxu0 0.0
    %722 = vmatpush1.msra.mxu0 0.0
    %723 = vmatprep.subr.mxu0 0.0
    %724 = vmatpush1.msra.mxu0 0.0
    %725 = vmatprep.mubr.f32.mxu0 0.0
    %726 = vmatmul.mubr.f32.gmra.mrb[0].mxu0 %v654
    %v727 = vpop.f32.mrb[0].mxu0
    %v728 = vadd.f32 0.0, %v727
    %v729 = vpop.f32.mrb[0].mxu0
    %v730 = vadd.f32 0.0, %v729
    %731 = vdwg.mxu0
    %732 = vmatprep.subr.mxu0 %v52
    %733 = vmatpush1.msra.mxu0 %v51
    %734 = vmatprep.subr.mxu0 %v56
    %735 = vmatpush1.msra.mxu0 %v55
    %736 = vmatprep.subr.mxu0 %v60
    %737 = vmatpush1.msra.mxu0 %v59
    %738 = vmatprep.subr.mxu0 %v64
    %739 = vmatpush1.msra.mxu0 %v63
    %740 = vmatprep.subr.mxu0 %v68
    %741 = vmatpush1.msra.mxu0 %v67
    %742 = vmatprep.subr.mxu0 %v72
    %743 = vmatpush1.msra.mxu0 %v71
    %744 = vmatprep.subr.mxu0 %v76
    %745 = vmatpush1.msra.mxu0 %v75
    %746 = vmatprep.subr.mxu0 %v80
    %747 = vmatpush1.msra.mxu0 %v79
    %748 = vmatprep.subr.mxu0 %v84
    %749 = vmatpush1.msra.mxu0 %v83
    %750 = vmatprep.subr.mxu0 %v88
    %751 = vmatpush1.msra.mxu0 %v87
    %752 = vmatprep.subr.mxu0 %v92
    %753 = vmatpush1.msra.mxu0 %v91
    %754 = vmatprep.subr.mxu0 %v96
    %755 = vmatpush1.msra.mxu0 %v95
    %756 = vmatprep.subr.mxu0 %v100
    %757 = vmatpush1.msra.mxu0 %v99
    %758 = vmatprep.subr.mxu0 %v104
    %759 = vmatpush1.msra.mxu0 %v103
    %760 = vmatprep.subr.mxu0 %v108
    %761 = vmatpush1.msra.mxu0 %v107
    %762 = vmatprep.subr.mxu0 %v112
    %763 = vmatpush1.msra.mxu0 %v111
    %764 = vmatprep.subr.mxu0 0.0
    %765 = vmatpush1.msra.mxu0 0.0
    %766 = vmatprep.subr.mxu0 0.0
    %767 = vmatpush1.msra.mxu0 0.0
    %768 = vmatprep.subr.mxu0 0.0
    %769 = vmatpush1.msra.mxu0 0.0
    %770 = vmatprep.subr.mxu0 0.0
    %771 = vmatpush1.msra.mxu0 0.0
    %772 = vmatprep.subr.mxu0 0.0
    %773 = vmatpush1.msra.mxu0 0.0
    %774 = vmatprep.subr.mxu0 0.0
    %775 = vmatpush1.msra.mxu0 0.0
    %776 = vmatprep.subr.mxu0 0.0
    %777 = vmatpush1.msra.mxu0 0.0
    %778 = vmatprep.subr.mxu0 0.0
    %779 = vmatpush1.msra.mxu0 0.0
    %780 = vmatprep.subr.mxu0 0.0
    %781 = vmatpush1.msra.mxu0 0.0
    %782 = vmatprep.subr.mxu0 0.0
    %783 = vmatpush1.msra.mxu0 0.0
    %784 = vmatprep.subr.mxu0 0.0
    %785 = vmatpush1.msra.mxu0 0.0
    %786 = vmatprep.subr.mxu0 0.0
    %787 = vmatpush1.msra.mxu0 0.0
    %788 = vmatprep.subr.mxu0 0.0
    %789 = vmatpush1.msra.mxu0 0.0
    %790 = vmatprep.subr.mxu0 0.0
    %791 = vmatpush1.msra.mxu0 0.0
    %792 = vmatprep.subr.mxu0 0.0
    %793 = vmatpush1.msra.mxu0 0.0
    %794 = vmatprep.subr.mxu0 0.0
    %795 = vmatpush1.msra.mxu0 0.0
    %796 = vmatprep.mubr.f32.mxu0 0.0
    %797 = vmatmul.mubr.f32.gmra.mrb[0].mxu0 %v654
    %v798 = vpop.f32.mrb[0].mxu0
    %v799 = vadd.f32 0.0, %v798
    %v800 = vpop.f32.mrb[0].mxu0
    %v801 = vadd.f32 0.0, %v800
    %802 = vdwg.mxu0
    %v803 = vadd.f32 %v657, %v728
    %v804 = vadd.f32 %v658, %v730
    %v805 = vadd.f32 %v659, %v799
    %v806 = vadd.f32 %v660, %v801
    %v807 = vxor.u32 %v803, 2147483648
    %v808 = vxor.u32 %v804, 2147483648
    %v809 = vxor.u32 %v805, 2147483648
    %v810 = vmul.f32 %v807, 1.442695
    %v811 = vpow.pop %v810
    %v812 = vmul.f32 %v808, 1.442695
    %v813 = vpow.pop %v812
    %v814 = vmul.f32 %v809, 1.442695
    %v815 = vpow.pop %v814
    %v816 = vadd.f32 %v811, 1.0
    %v817 = vadd.f32 %v813, 1.0
    %v818 = vadd.f32 %v815, 1.0
    %v819 = vrcp.pop %v816
    %v820 = vmul.f32 1.0, %v819
    %v821 = vrcp.pop %v817
    %v822 = vmul.f32 1.0, %v821
    %v823 = vrcp.pop %v818
    %v824 = vmul.f32 1.0, %v823
    %v825 = vtanh.pop %v806
    %v826 = vmul.f32 %v822, %v655
    %v827 = vmul.f32 %v820, %v825
    %v828 = vadd.f32 %v826, %v827
    %v829 = vtanh.pop %v828
    %v830 = vmul.f32 %v824, %v829
    %831 = vst [vmem:[#allocation2] sm:$0xff] %v830
    %832 = vst [vmem:[#allocation3] sm:$0xff] %v828
    %s833 = scalar_lea.vmem [#allocation9], 24
    %834 = vst [vmem:[%s833] sm:$0xff] %v830
    %v835 = vld [vmem:[#allocation2] sm:$0xff]
    %v836 = vld [vmem:[#allocation3] sm:$0xff]
    %s837 = scalar_lea.vmem [#allocation4], 128
    %v838 = vld [vmem:[%s837] sm:$0xff]
    %v839 = vld [vmem:[%s837 + $0x8] sm:$0xff]
    %v840 = vld [vmem:[%s837 + $0x10] sm:$0xff]
    %v841 = vld [vmem:[%s837 + $0x18] sm:$0xff]
    %842 = vmatprep.subr.mxu0 %v50
    %843 = vmatpush1.msra.mxu0 %v49
    %844 = vmatprep.subr.mxu0 %v54
    %845 = vmatpush1.msra.mxu0 %v53
    %846 = vmatprep.subr.mxu0 %v58
    %847 = vmatpush1.msra.mxu0 %v57
    %848 = vmatprep.subr.mxu0 %v62
    %849 = vmatpush1.msra.mxu0 %v61
    %850 = vmatprep.subr.mxu0 %v66
    %851 = vmatpush1.msra.mxu0 %v65
    %852 = vmatprep.subr.mxu0 %v70
    %853 = vmatpush1.msra.mxu0 %v69
    %854 = vmatprep.subr.mxu0 %v74
    %855 = vmatpush1.msra.mxu0 %v73
    %856 = vmatprep.subr.mxu0 %v78
    %857 = vmatpush1.msra.mxu0 %v77
    %858 = vmatprep.subr.mxu0 %v82
    %859 = vmatpush1.msra.mxu0 %v81
    %860 = vmatprep.subr.mxu0 %v86
    %861 = vmatpush1.msra.mxu0 %v85
    %862 = vmatprep.subr.mxu0 %v90
    %863 = vmatpush1.msra.mxu0 %v89
    %864 = vmatprep.subr.mxu0 %v94
    %865 = vmatpush1.msra.mxu0 %v93
    %866 = vmatprep.subr.mxu0 %v98
    %867 = vmatpush1.msra.mxu0 %v97
    %868 = vmatprep.subr.mxu0 %v102
    %869 = vmatpush1.msra.mxu0 %v101
    %870 = vmatprep.subr.mxu0 %v106
    %871 = vmatpush1.msra.mxu0 %v105
    %872 = vmatprep.subr.mxu0 %v110
    %873 = vmatpush1.msra.mxu0 %v109
    %874 = vmatprep.subr.mxu0 0.0
    %875 = vmatpush1.msra.mxu0 0.0
    %876 = vmatprep.subr.mxu0 0.0
    %877 = vmatpush1.msra.mxu0 0.0
    %878 = vmatprep.subr.mxu0 0.0
    %879 = vmatpush1.msra.mxu0 0.0
    %880 = vmatprep.subr.mxu0 0.0
    %881 = vmatpush1.msra.mxu0 0.0
    %882 = vmatprep.subr.mxu0 0.0
    %883 = vmatpush1.msra.mxu0 0.0
    %884 = vmatprep.subr.mxu0 0.0
    %885 = vmatpush1.msra.mxu0 0.0
    %886 = vmatprep.subr.mxu0 0.0
    %887 = vmatpush1.msra.mxu0 0.0
    %888 = vmatprep.subr.mxu0 0.0
    %889 = vmatpush1.msra.mxu0 0.0
    %890 = vmatprep.subr.mxu0 0.0
    %891 = vmatpush1.msra.mxu0 0.0
    %892 = vmatprep.subr.mxu0 0.0
    %893 = vmatpush1.msra.mxu0 0.0
    %894 = vmatprep.subr.mxu0 0.0
    %895 = vmatpush1.msra.mxu0 0.0
    %896 = vmatprep.subr.mxu0 0.0
    %897 = vmatpush1.msra.mxu0 0.0
    %898 = vmatprep.subr.mxu0 0.0
    %899 = vmatpush1.msra.mxu0 0.0
    %900 = vmatprep.subr.mxu0 0.0
    %901 = vmatpush1.msra.mxu0 0.0
    %902 = vmatprep.subr.mxu0 0.0
    %903 = vmatpush1.msra.mxu0 0.0
    %904 = vmatprep.subr.mxu0 0.0
    %905 = vmatpush1.msra.mxu0 0.0
    %906 = vmatprep.mubr.f32.mxu0 0.0
    %907 = vmatmul.mubr.f32.gmra.mrb[0].mxu0 %v835
    %v908 = vpop.f32.mrb[0].mxu0
    %v909 = vadd.f32 0.0, %v908
    %v910 = vpop.f32.mrb[0].mxu0
    %v911 = vadd.f32 0.0, %v910
    %912 = vdwg.mxu0
    %913 = vmatprep.subr.mxu0 %v52
    %914 = vmatpush1.msra.mxu0 %v51
    %915 = vmatprep.subr.mxu0 %v56
    %916 = vmatpush1.msra.mxu0 %v55
    %917 = vmatprep.subr.mxu0 %v60
    %918 = vmatpush1.msra.mxu0 %v59
    %919 = vmatprep.subr.mxu0 %v64
    %920 = vmatpush1.msra.mxu0 %v63
    %921 = vmatprep.subr.mxu0 %v68
    %922 = vmatpush1.msra.mxu0 %v67
    %923 = vmatprep.subr.mxu0 %v72
    %924 = vmatpush1.msra.mxu0 %v71
    %925 = vmatprep.subr.mxu0 %v76
    %926 = vmatpush1.msra.mxu0 %v75
    %927 = vmatprep.subr.mxu0 %v80
    %928 = vmatpush1.msra.mxu0 %v79
    %929 = vmatprep.subr.mxu0 %v84
    %930 = vmatpush1.msra.mxu0 %v83
    %931 = vmatprep.subr.mxu0 %v88
    %932 = vmatpush1.msra.mxu0 %v87
    %933 = vmatprep.subr.mxu0 %v92
    %934 = vmatpush1.msra.mxu0 %v91
    %935 = vmatprep.subr.mxu0 %v96
    %936 = vmatpush1.msra.mxu0 %v95
    %937 = vmatprep.subr.mxu0 %v100
    %938 = vmatpush1.msra.mxu0 %v99
    %939 = vmatprep.subr.mxu0 %v104
    %940 = vmatpush1.msra.mxu0 %v103
    %941 = vmatprep.subr.mxu0 %v108
    %942 = vmatpush1.msra.mxu0 %v107
    %943 = vmatprep.subr.mxu0 %v112
    %944 = vmatpush1.msra.mxu0 %v111
    %945 = vmatprep.subr.mxu0 0.0
    %946 = vmatpush1.msra.mxu0 0.0
    %947 = vmatprep.subr.mxu0 0.0
    %948 = vmatpush1.msra.mxu0 0.0
    %949 = vmatprep.subr.mxu0 0.0
    %950 = vmatpush1.msra.mxu0 0.0
    %951 = vmatprep.subr.mxu0 0.0
    %952 = vmatpush1.msra.mxu0 0.0
    %953 = vmatprep.subr.mxu0 0.0
    %954 = vmatpush1.msra.mxu0 0.0
    %955 = vmatprep.subr.mxu0 0.0
    %956 = vmatpush1.msra.mxu0 0.0
    %957 = vmatprep.subr.mxu0 0.0
    %958 = vmatpush1.msra.mxu0 0.0
    %959 = vmatprep.subr.mxu0 0.0
    %960 = vmatpush1.msra.mxu0 0.0
    %961 = vmatprep.subr.mxu0 0.0
    %962 = vmatpush1.msra.mxu0 0.0
    %963 = vmatprep.subr.mxu0 0.0
    %964 = vmatpush1.msra.mxu0 0.0
    %965 = vmatprep.subr.mxu0 0.0
    %966 = vmatpush1.msra.mxu0 0.0
    %967 = vmatprep.subr.mxu0 0.0
    %968 = vmatpush1.msra.mxu0 0.0
    %969 = vmatprep.subr.mxu0 0.0
    %970 = vmatpush1.msra.mxu0 0.0
    %971 = vmatprep.subr.mxu0 0.0
    %972 = vmatpush1.msra.mxu0 0.0
    %973 = vmatprep.subr.mxu0 0.0
    %974 = vmatpush1.msra.mxu0 0.0
    %975 = vmatprep.subr.mxu0 0.0
    %976 = vmatpush1.msra.mxu0 0.0
    %977 = vmatprep.mubr.f32.mxu0 0.0
    %978 = vmatmul.mubr.f32.gmra.mrb[0].mxu0 %v835
    %v979 = vpop.f32.mrb[0].mxu0
    %v980 = vadd.f32 0.0, %v979
    %v981 = vpop.f32.mrb[0].mxu0
    %v982 = vadd.f32 0.0, %v981
    %983 = vdwg.mxu0
    %v984 = vadd.f32 %v838, %v909
    %v985 = vadd.f32 %v839, %v911
    %v986 = vadd.f32 %v840, %v980
    %v987 = vadd.f32 %v841, %v982
    %v988 = vxor.u32 %v984, 2147483648
    %v989 = vxor.u32 %v985, 2147483648
    %v990 = vxor.u32 %v986, 2147483648
    %v991 = vmul.f32 %v988, 1.442695
    %v992 = vpow.pop %v991
    %v993 = vmul.f32 %v989, 1.442695
    %v994 = vpow.pop %v993
    %v995 = vmul.f32 %v990, 1.442695
    %v996 = vpow.pop %v995
    %v997 = vadd.f32 %v992, 1.0
    %v998 = vadd.f32 %v994, 1.0
    %v999 = vadd.f32 %v996, 1.0
    %v1000 = vrcp.pop %v997
    %v1001 = vmul.f32 1.0, %v1000
    %v1002 = vrcp.pop %v998
    %v1003 = vmul.f32 1.0, %v1002
    %v1004 = vrcp.pop %v999
    %v1005 = vmul.f32 1.0, %v1004
    %v1006 = vtanh.pop %v987
    %v1007 = vmul.f32 %v1003, %v836
    %v1008 = vmul.f32 %v1001, %v1006
    %v1009 = vadd.f32 %v1007, %v1008
    %v1010 = vtanh.pop %v1009
    %v1011 = vmul.f32 %v1005, %v1010
    %1012 = vst [vmem:[#allocation2] sm:$0xff] %v1011
    %1013 = vst [vmem:[#allocation3] sm:$0xff] %v1009
    %s1014 = scalar_lea.vmem [#allocation9], 32
    %1015 = vst [vmem:[%s1014] sm:$0xff] %v1011
    %v1016 = vld [vmem:[#allocation2] sm:$0xff]
    %v1017 = vld [vmem:[#allocation3] sm:$0xff]
    %s1018 = scalar_lea.vmem [#allocation4], 160
    %v1019 = vld [vmem:[%s1018] sm:$0xff]
    %v1020 = vld [vmem:[%s1018 + $0x8] sm:$0xff]
    %v1021 = vld [vmem:[%s1018 + $0x10] sm:$0xff]
    %v1022 = vld [vmem:[%s1018 + $0x18] sm:$0xff]
    %1023 = vmatprep.subr.mxu0 %v50
    %1024 = vmatpush1.msra.mxu0 %v49
    %1025 = vmatprep.subr.mxu0 %v54
    %1026 = vmatpush1.msra.mxu0 %v53
    %1027 = vmatprep.subr.mxu0 %v58
    %1028 = vmatpush1.msra.mxu0 %v57
    %1029 = vmatprep.subr.mxu0 %v62
    %1030 = vmatpush1.msra.mxu0 %v61
    %1031 = vmatprep.subr.mxu0 %v66
    %1032 = vmatpush1.msra.mxu0 %v65
    %1033 = vmatprep.subr.mxu0 %v70
    %1034 = vmatpush1.msra.mxu0 %v69
    %1035 = vmatprep.subr.mxu0 %v74
    %1036 = vmatpush1.msra.mxu0 %v73
    %1037 = vmatprep.subr.mxu0 %v78
    %1038 = vmatpush1.msra.mxu0 %v77
    %1039 = vmatprep.subr.mxu0 %v82
    %1040 = vmatpush1.msra.mxu0 %v81
    %1041 = vmatprep.subr.mxu0 %v86
    %1042 = vmatpush1.msra.mxu0 %v85
    %1043 = vmatprep.subr.mxu0 %v90
    %1044 = vmatpush1.msra.mxu0 %v89
    %1045 = vmatprep.subr.mxu0 %v94
    %1046 = vmatpush1.msra.mxu0 %v93
    %1047 = vmatprep.subr.mxu0 %v98
    %1048 = vmatpush1.msra.mxu0 %v97
    %1049 = vmatprep.subr.mxu0 %v102
    %1050 = vmatpush1.msra.mxu0 %v101
    %1051 = vmatprep.subr.mxu0 %v106
    %1052 = vmatpush1.msra.mxu0 %v105
    %1053 = vmatprep.subr.mxu0 %v110
    %1054 = vmatpush1.msra.mxu0 %v109
    %1055 = vmatprep.subr.mxu0 0.0
    %1056 = vmatpush1.msra.mxu0 0.0
    %1057 = vmatprep.subr.mxu0 0.0
    %1058 = vmatpush1.msra.mxu0 0.0
    %1059 = vmatprep.subr.mxu0 0.0
    %1060 = vmatpush1.msra.mxu0 0.0
    %1061 = vmatprep.subr.mxu0 0.0
    %1062 = vmatpush1.msra.mxu0 0.0
    %1063 = vmatprep.subr.mxu0 0.0
    %1064 = vmatpush1.msra.mxu0 0.0
    %1065 = vmatprep.subr.mxu0 0.0
    %1066 = vmatpush1.msra.mxu0 0.0
    %1067 = vmatprep.subr.mxu0 0.0
    %1068 = vmatpush1.msra.mxu0 0.0
    %1069 = vmatprep.subr.mxu0 0.0
    %1070 = vmatpush1.msra.mxu0 0.0
    %1071 = vmatprep.subr.mxu0 0.0
    %1072 = vmatpush1.msra.mxu0 0.0
    %1073 = vmatprep.subr.mxu0 0.0
    %1074 = vmatpush1.msra.mxu0 0.0
    %1075 = vmatprep.subr.mxu0 0.0
    %1076 = vmatpush1.msra.mxu0 0.0
    %1077 = vmatprep.subr.mxu0 0.0
    %1078 = vmatpush1.msra.mxu0 0.0
    %1079 = vmatprep.subr.mxu0 0.0
    %1080 = vmatpush1.msra.mxu0 0.0
    %1081 = vmatprep.subr.mxu0 0.0
    %1082 = vmatpush1.msra.mxu0 0.0
    %1083 = vmatprep.subr.mxu0 0.0
    %1084 = vmatpush1.msra.mxu0 0.0
    %1085 = vmatprep.subr.mxu0 0.0
    %1086 = vmatpush1.msra.mxu0 0.0
    %1087 = vmatprep.mubr.f32.mxu0 0.0
    %1088 = vmatmul.mubr.f32.gmra.mrb[0].mxu0 %v1016
    %v1089 = vpop.f32.mrb[0].mxu0
    %v1090 = vadd.f32 0.0, %v1089
    %v1091 = vpop.f32.mrb[0].mxu0
    %v1092 = vadd.f32 0.0, %v1091
    %1093 = vdwg.mxu0
    %1094 = vmatprep.subr.mxu0 %v52
    %1095 = vmatpush1.msra.mxu0 %v51
    %1096 = vmatprep.subr.mxu0 %v56
    %1097 = vmatpush1.msra.mxu0 %v55
    %1098 = vmatprep.subr.mxu0 %v60
    %1099 = vmatpush1.msra.mxu0 %v59
    %1100 = vmatprep.subr.mxu0 %v64
    %1101 = vmatpush1.msra.mxu0 %v63
    %1102 = vmatprep.subr.mxu0 %v68
    %1103 = vmatpush1.msra.mxu0 %v67
    %1104 = vmatprep.subr.mxu0 %v72
    %1105 = vmatpush1.msra.mxu0 %v71
    %1106 = vmatprep.subr.mxu0 %v76
    %1107 = vmatpush1.msra.mxu0 %v75
    %1108 = vmatprep.subr.mxu0 %v80
    %1109 = vmatpush1.msra.mxu0 %v79
    %1110 = vmatprep.subr.mxu0 %v84
    %1111 = vmatpush1.msra.mxu0 %v83
    %1112 = vmatprep.subr.mxu0 %v88
    %1113 = vmatpush1.msra.mxu0 %v87
    %1114 = vmatprep.subr.mxu0 %v92
    %1115 = vmatpush1.msra.mxu0 %v91
    %1116 = vmatprep.subr.mxu0 %v96
    %1117 = vmatpush1.msra.mxu0 %v95
    %1118 = vmatprep.subr.mxu0 %v100
    %1119 = vmatpush1.msra.mxu0 %v99
    %1120 = vmatprep.subr.mxu0 %v104
    %1121 = vmatpush1.msra.mxu0 %v103
    %1122 = vmatprep.subr.mxu0 %v108
    %1123 = vmatpush1.msra.mxu0 %v107
    %1124 = vmatprep.subr.mxu0 %v112
    %1125 = vmatpush1.msra.mxu0 %v111
    %1126 = vmatprep.subr.mxu0 0.0
    %1127 = vmatpush1.msra.mxu0 0.0
    %1128 = vmatprep.subr.mxu0 0.0
    %1129 = vmatpush1.msra.mxu0 0.0
    %1130 = vmatprep.subr.mxu0 0.0
    %1131 = vmatpush1.msra.mxu0 0.0
    %1132 = vmatprep.subr.mxu0 0.0
    %1133 = vmatpush1.msra.mxu0 0.0
    %1134 = vmatprep.subr.mxu0 0.0
    %1135 = vmatpush1.msra.mxu0 0.0
    %1136 = vmatprep.subr.mxu0 0.0
    %1137 = vmatpush1.msra.mxu0 0.0
    %1138 = vmatprep.subr.mxu0 0.0
    %1139 = vmatpush1.msra.mxu0 0.0
    %1140 = vmatprep.subr.mxu0 0.0
    %1141 = vmatpush1.msra.mxu0 0.0
    %1142 = vmatprep.subr.mxu0 0.0
    %1143 = vmatpush1.msra.mxu0 0.0
    %1144 = vmatprep.subr.mxu0 0.0
    %1145 = vmatpush1.msra.mxu0 0.0
    %1146 = vmatprep.subr.mxu0 0.0
    %1147 = vmatpush1.msra.mxu0 0.0
    %1148 = vmatprep.subr.mxu0 0.0
    %1149 = vmatpush1.msra.mxu0 0.0
    %1150 = vmatprep.subr.mxu0 0.0
    %1151 = vmatpush1.msra.mxu0 0.0
    %1152 = vmatprep.subr.mxu0 0.0
    %1153 = vmatpush1.msra.mxu0 0.0
    %1154 = vmatprep.subr.mxu0 0.0
    %1155 = vmatpush1.msra.mxu0 0.0
    %1156 = vmatprep.subr.mxu0 0.0
    %1157 = vmatpush1.msra.mxu0 0.0
    %1158 = vmatprep.mubr.f32.mxu0 0.0
    %1159 = vmatmul.mubr.f32.gmra.mrb[0].mxu0 %v1016
    %v1160 = vpop.f32.mrb[0].mxu0
    %v1161 = vadd.f32 0.0, %v1160
    %v1162 = vpop.f32.mrb[0].mxu0
    %v1163 = vadd.f32 0.0, %v1162
    %1164 = vdwg.mxu0
    %v1165 = vadd.f32 %v1019, %v1090
    %v1166 = vadd.f32 %v1020, %v1092
    %v1167 = vadd.f32 %v1021, %v1161
    %v1168 = vadd.f32 %v1022, %v1163
    %v1169 = vxor.u32 %v1165, 2147483648
    %v1170 = vxor.u32 %v1166, 2147483648
    %v1171 = vxor.u32 %v1167, 2147483648
    %v1172 = vmul.f32 %v1169, 1.442695
    %v1173 = vpow.pop %v1172
    %v1174 = vmul.f32 %v1170, 1.442695
    %v1175 = vpow.pop %v1174
    %v1176 = vmul.f32 %v1171, 1.442695
    %v1177 = vpow.pop %v1176
    %v1178 = vadd.f32 %v1173, 1.0
    %v1179 = vadd.f32 %v1175, 1.0
    %v1180 = vadd.f32 %v1177, 1.0
    %v1181 = vrcp.pop %v1178
    %v1182 = vmul.f32 1.0, %v1181
    %v1183 = vrcp.pop %v1179
    %v1184 = vmul.f32 1.0, %v1183
    %v1185 = vrcp.pop %v1180
    %v1186 = vmul.f32 1.0, %v1185
    %v1187 = vtanh.pop %v1168
    %v1188 = vmul.f32 %v1184, %v1017
    %v1189 = vmul.f32 %v1182, %v1187
    %v1190 = vadd.f32 %v1188, %v1189
    %v1191 = vtanh.pop %v1190
    %v1192 = vmul.f32 %v1186, %v1191
    %1193 = vst [vmem:[#allocation2] sm:$0xff] %v1192
    %1194 = vst [vmem:[#allocation3] sm:$0xff] %v1190
    %s1195 = scalar_lea.vmem [#allocation9], 40
    %1196 = vst [vmem:[%s1195] sm:$0xff] %v1192
    %v1197 = vld [vmem:[#allocation2] sm:$0xff]
    %v1198 = vld [vmem:[#allocation3] sm:$0xff]
    %s1199 = scalar_lea.vmem [#allocation4], 192
    %v1200 = vld [vmem:[%s1199] sm:$0xff]
    %v1201 = vld [vmem:[%s1199 + $0x8] sm:$0xff]
    %v1202 = vld [vmem:[%s1199 + $0x10] sm:$0xff]
    %v1203 = vld [vmem:[%s1199 + $0x18] sm:$0xff]
    %1204 = vmatprep.subr.mxu0 %v50
    %1205 = vmatpush1.msra.mxu0 %v49
    %1206 = vmatprep.subr.mxu0 %v54
    %1207 = vmatpush1.msra.mxu0 %v53
    %1208 = vmatprep.subr.mxu0 %v58
    %1209 = vmatpush1.msra.mxu0 %v57
    %1210 = vmatprep.subr.mxu0 %v62
    %1211 = vmatpush1.msra.mxu0 %v61
    %1212 = vmatprep.subr.mxu0 %v66
    %1213 = vmatpush1.msra.mxu0 %v65
    %1214 = vmatprep.subr.mxu0 %v70
    %1215 = vmatpush1.msra.mxu0 %v69
    %1216 = vmatprep.subr.mxu0 %v74
    %1217 = vmatpush1.msra.mxu0 %v73
    %1218 = vmatprep.subr.mxu0 %v78
    %1219 = vmatpush1.msra.mxu0 %v77
    %1220 = vmatprep.subr.mxu0 %v82
    %1221 = vmatpush1.msra.mxu0 %v81
    %1222 = vmatprep.subr.mxu0 %v86
    %1223 = vmatpush1.msra.mxu0 %v85
    %1224 = vmatprep.subr.mxu0 %v90
    %1225 = vmatpush1.msra.mxu0 %v89
    %1226 = vmatprep.subr.mxu0 %v94
    %1227 = vmatpush1.msra.mxu0 %v93
    %1228 = vmatprep.subr.mxu0 %v98
    %1229 = vmatpush1.msra.mxu0 %v97
    %1230 = vmatprep.subr.mxu0 %v102
    %1231 = vmatpush1.msra.mxu0 %v101
    %1232 = vmatprep.subr.mxu0 %v106
    %1233 = vmatpush1.msra.mxu0 %v105
    %1234 = vmatprep.subr.mxu0 %v110
    %1235 = vmatpush1.msra.mxu0 %v109
    %1236 = vmatprep.subr.mxu0 0.0
    %1237 = vmatpush1.msra.mxu0 0.0
    %1238 = vmatprep.subr.mxu0 0.0
    %1239 = vmatpush1.msra.mxu0 0.0
    %1240 = vmatprep.subr.mxu0 0.0
    %1241 = vmatpush1.msra.mxu0 0.0
    %1242 = vmatprep.subr.mxu0 0.0
    %1243 = vmatpush1.msra.mxu0 0.0
    %1244 = vmatprep.subr.mxu0 0.0
    %1245 = vmatpush1.msra.mxu0 0.0
    %1246 = vmatprep.subr.mxu0 0.0
    %1247 = vmatpush1.msra.mxu0 0.0
    %1248 = vmatprep.subr.mxu0 0.0
    %1249 = vmatpush1.msra.mxu0 0.0
    %1250 = vmatprep.subr.mxu0 0.0
    %1251 = vmatpush1.msra.mxu0 0.0
    %1252 = vmatprep.subr.mxu0 0.0
    %1253 = vmatpush1.msra.mxu0 0.0
    %1254 = vmatprep.subr.mxu0 0.0
    %1255 = vmatpush1.msra.mxu0 0.0
    %1256 = vmatprep.subr.mxu0 0.0
    %1257 = vmatpush1.msra.mxu0 0.0
    %1258 = vmatprep.subr.mxu0 0.0
    %1259 = vmatpush1.msra.mxu0 0.0
    %1260 = vmatprep.subr.mxu0 0.0
    %1261 = vmatpush1.msra.mxu0 0.0
    %1262 = vmatprep.subr.mxu0 0.0
    %1263 = vmatpush1.msra.mxu0 0.0
    %1264 = vmatprep.subr.mxu0 0.0
    %1265 = vmatpush1.msra.mxu0 0.0
    %1266 = vmatprep.subr.mxu0 0.0
    %1267 = vmatpush1.msra.mxu0 0.0
    %1268 = vmatprep.mubr.f32.mxu0 0.0
    %1269 = vmatmul.mubr.f32.gmra.mrb[0].mxu0 %v1197
    %v1270 = vpop.f32.mrb[0].mxu0
    %v1271 = vadd.f32 0.0, %v1270
    %v1272 = vpop.f32.mrb[0].mxu0
    %v1273 = vadd.f32 0.0, %v1272
    %1274 = vdwg.mxu0
    %1275 = vmatprep.subr.mxu0 %v52
    %1276 = vmatpush1.msra.mxu0 %v51
    %1277 = vmatprep.subr.mxu0 %v56
    %1278 = vmatpush1.msra.mxu0 %v55
    %1279 = vmatprep.subr.mxu0 %v60
    %1280 = vmatpush1.msra.mxu0 %v59
    %1281 = vmatprep.subr.mxu0 %v64
    %1282 = vmatpush1.msra.mxu0 %v63
    %1283 = vmatprep.subr.mxu0 %v68
    %1284 = vmatpush1.msra.mxu0 %v67
    %1285 = vmatprep.subr.mxu0 %v72
    %1286 = vmatpush1.msra.mxu0 %v71
    %1287 = vmatprep.subr.mxu0 %v76
    %1288 = vmatpush1.msra.mxu0 %v75
    %1289 = vmatprep.subr.mxu0 %v80
    %1290 = vmatpush1.msra.mxu0 %v79
    %1291 = vmatprep.subr.mxu0 %v84
    %1292 = vmatpush1.msra.mxu0 %v83
    %1293 = vmatprep.subr.mxu0 %v88
    %1294 = vmatpush1.msra.mxu0 %v87
    %1295 = vmatprep.subr.mxu0 %v92
    %1296 = vmatpush1.msra.mxu0 %v91
    %1297 = vmatprep.subr.mxu0 %v96
    %1298 = vmatpush1.msra.mxu0 %v95
    %1299 = vmatprep.subr.mxu0 %v100
    %1300 = vmatpush1.msra.mxu0 %v99
    %1301 = vmatprep.subr.mxu0 %v104
    %1302 = vmatpush1.msra.mxu0 %v103
    %1303 = vmatprep.subr.mxu0 %v108
    %1304 = vmatpush1.msra.mxu0 %v107
    %1305 = vmatprep.subr.mxu0 %v112
    %1306 = vmatpush1.msra.mxu0 %v111
    %1307 = vmatprep.subr.mxu0 0.0
    %1308 = vmatpush1.msra.mxu0 0.0
    %1309 = vmatprep.subr.mxu0 0.0
    %1310 = vmatpush1.msra.mxu0 0.0
    %1311 = vmatprep.subr.mxu0 0.0
    %1312 = vmatpush1.msra.mxu0 0.0
    %1313 = vmatprep.subr.mxu0 0.0
    %1314 = vmatpush1.msra.mxu0 0.0
    %1315 = vmatprep.subr.mxu0 0.0
    %1316 = vmatpush1.msra.mxu0 0.0
    %1317 = vmatprep.subr.mxu0 0.0
    %1318 = vmatpush1.msra.mxu0 0.0
    %1319 = vmatprep.subr.mxu0 0.0
    %1320 = vmatpush1.msra.mxu0 0.0
    %1321 = vmatprep.subr.mxu0 0.0
    %1322 = vmatpush1.msra.mxu0 0.0
    %1323 = vmatprep.subr.mxu0 0.0
    %1324 = vmatpush1.msra.mxu0 0.0
    %1325 = vmatprep.subr.mxu0 0.0
    %1326 = vmatpush1.msra.mxu0 0.0
    %1327 = vmatprep.subr.mxu0 0.0
    %1328 = vmatpush1.msra.mxu0 0.0
    %1329 = vmatprep.subr.mxu0 0.0
    %1330 = vmatpush1.msra.mxu0 0.0
    %1331 = vmatprep.subr.mxu0 0.0
    %1332 = vmatpush1.msra.mxu0 0.0
    %1333 = vmatprep.subr.mxu0 0.0
    %1334 = vmatpush1.msra.mxu0 0.0
    %1335 = vmatprep.subr.mxu0 0.0
    %1336 = vmatpush1.msra.mxu0 0.0
    %1337 = vmatprep.subr.mxu0 0.0
    %1338 = vmatpush1.msra.mxu0 0.0
    %1339 = vmatprep.mubr.f32.mxu0 0.0
    %1340 = vmatmul.mubr.f32.gmra.mrb[0].mxu0 %v1197
    %v1341 = vpop.f32.mrb[0].mxu0
    %v1342 = vadd.f32 0.0, %v1341
    %v1343 = vpop.f32.mrb[0].mxu0
    %v1344 = vadd.f32 0.0, %v1343
    %1345 = vdwg.mxu0
    %v1346 = vadd.f32 %v1200, %v1271
    %v1347 = vadd.f32 %v1201, %v1273
    %v1348 = vadd.f32 %v1202, %v1342
    %v1349 = vadd.f32 %v1203, %v1344
    %v1350 = vxor.u32 %v1346, 2147483648
    %v1351 = vxor.u32 %v1347, 2147483648
    %v1352 = vxor.u32 %v1348, 2147483648
    %v1353 = vmul.f32 %v1350, 1.442695
    %v1354 = vpow.pop %v1353
    %v1355 = vmul.f32 %v1351, 1.442695
    %v1356 = vpow.pop %v1355
    %v1357 = vmul.f32 %v1352, 1.442695
    %v1358 = vpow.pop %v1357
    %v1359 = vadd.f32 %v1354, 1.0
    %v1360 = vadd.f32 %v1356, 1.0
    %v1361 = vadd.f32 %v1358, 1.0
    %v1362 = vrcp.pop %v1359
    %v1363 = vmul.f32 1.0, %v1362
    %v1364 = vrcp.pop %v1360
    %v1365 = vmul.f32 1.0, %v1364
    %v1366 = vrcp.pop %v1361
    %v1367 = vmul.f32 1.0, %v1366
    %v1368 = vtanh.pop %v1349
    %v1369 = vmul.f32 %v1365, %v1198
    %v1370 = vmul.f32 %v1363, %v1368
    %v1371 = vadd.f32 %v1369, %v1370
    %v1372 = vtanh.pop %v1371
    %v1373 = vmul.f32 %v1367, %v1372
    %1374 = vst [vmem:[#allocation2] sm:$0xff] %v1373
    %1375 = vst [vmem:[#allocation3] sm:$0xff] %v1371
    %s1376 = scalar_lea.vmem [#allocation9], 48
    %1377 = vst [vmem:[%s1376] sm:$0xff] %v1373
    %v1378 = vld [vmem:[#allocation2] sm:$0xff]
    %v1379 = vld [vmem:[#allocation3] sm:$0xff]
    %s1380 = scalar_lea.vmem [#allocation4], 224
    %v1381 = vld [vmem:[%s1380] sm:$0xff]
    %v1382 = vld [vmem:[%s1380 + $0x8] sm:$0xff]
    %v1383 = vld [vmem:[%s1380 + $0x10] sm:$0xff]
    %v1384 = vld [vmem:[%s1380 + $0x18] sm:$0xff]
    %1385 = vmatprep.subr.mxu0 %v50
    %1386 = vmatpush1.msra.mxu0 %v49
    %1387 = vmatprep.subr.mxu0 %v54
    %1388 = vmatpush1.msra.mxu0 %v53
    %1389 = vmatprep.subr.mxu0 %v58
    %1390 = vmatpush1.msra.mxu0 %v57
    %1391 = vmatprep.subr.mxu0 %v62
    %1392 = vmatpush1.msra.mxu0 %v61
    %1393 = vmatprep.subr.mxu0 %v66
    %1394 = vmatpush1.msra.mxu0 %v65
    %1395 = vmatprep.subr.mxu0 %v70
    %1396 = vmatpush1.msra.mxu0 %v69
    %1397 = vmatprep.subr.mxu0 %v74
    %1398 = vmatpush1.msra.mxu0 %v73
    %1399 = vmatprep.subr.mxu0 %v78
    %1400 = vmatpush1.msra.mxu0 %v77
    %1401 = vmatprep.subr.mxu0 %v82
    %1402 = vmatpush1.msra.mxu0 %v81
    %1403 = vmatprep.subr.mxu0 %v86
    %1404 = vmatpush1.msra.mxu0 %v85
    %1405 = vmatprep.subr.mxu0 %v90
    %1406 = vmatpush1.msra.mxu0 %v89
    %1407 = vmatprep.subr.mxu0 %v94
    %1408 = vmatpush1.msra.mxu0 %v93
    %1409 = vmatprep.subr.mxu0 %v98
    %1410 = vmatpush1.msra.mxu0 %v97
    %1411 = vmatprep.subr.mxu0 %v102
    %1412 = vmatpush1.msra.mxu0 %v101
    %1413 = vmatprep.subr.mxu0 %v106
    %1414 = vmatpush1.msra.mxu0 %v105
    %1415 = vmatprep.subr.mxu0 %v110
    %1416 = vmatpush1.msra.mxu0 %v109
    %1417 = vmatprep.subr.mxu0 0.0
    %1418 = vmatpush1.msra.mxu0 0.0
    %1419 = vmatprep.subr.mxu0 0.0
    %1420 = vmatpush1.msra.mxu0 0.0
    %1421 = vmatprep.subr.mxu0 0.0
    %1422 = vmatpush1.msra.mxu0 0.0
    %1423 = vmatprep.subr.mxu0 0.0
    %1424 = vmatpush1.msra.mxu0 0.0
    %1425 = vmatprep.subr.mxu0 0.0
    %1426 = vmatpush1.msra.mxu0 0.0
    %1427 = vmatprep.subr.mxu0 0.0
    %1428 = vmatpush1.msra.mxu0 0.0
    %1429 = vmatprep.subr.mxu0 0.0
    %1430 = vmatpush1.msra.mxu0 0.0
    %1431 = vmatprep.subr.mxu0 0.0
    %1432 = vmatpush1.msra.mxu0 0.0
    %1433 = vmatprep.subr.mxu0 0.0
    %1434 = vmatpush1.msra.mxu0 0.0
    %1435 = vmatprep.subr.mxu0 0.0
    %1436 = vmatpush1.msra.mxu0 0.0
    %1437 = vmatprep.subr.mxu0 0.0
    %1438 = vmatpush1.msra.mxu0 0.0
    %1439 = vmatprep.subr.mxu0 0.0
    %1440 = vmatpush1.msra.mxu0 0.0
    %1441 = vmatprep.subr.mxu0 0.0
    %1442 = vmatpush1.msra.mxu0 0.0
    %1443 = vmatprep.subr.mxu0 0.0
    %1444 = vmatpush1.msra.mxu0 0.0
    %1445 = vmatprep.subr.mxu0 0.0
    %1446 = vmatpush1.msra.mxu0 0.0
    %1447 = vmatprep.subr.mxu0 0.0
    %1448 = vmatpush1.msra.mxu0 0.0
    %1449 = vmatprep.mubr.f32.mxu0 0.0
    %1450 = vmatmul.mubr.f32.gmra.mrb[0].mxu0 %v1378
    %v1451 = vpop.f32.mrb[0].mxu0
    %v1452 = vadd.f32 0.0, %v1451
    %v1453 = vpop.f32.mrb[0].mxu0
    %v1454 = vadd.f32 0.0, %v1453
    %1455 = vdwg.mxu0
    %1456 = vmatprep.subr.mxu0 %v52
    %1457 = vmatpush1.msra.mxu0 %v51
    %1458 = vmatprep.subr.mxu0 %v56
    %1459 = vmatpush1.msra.mxu0 %v55
    %1460 = vmatprep.subr.mxu0 %v60
    %1461 = vmatpush1.msra.mxu0 %v59
    %1462 = vmatprep.subr.mxu0 %v64
    %1463 = vmatpush1.msra.mxu0 %v63
    %1464 = vmatprep.subr.mxu0 %v68
    %1465 = vmatpush1.msra.mxu0 %v67
    %1466 = vmatprep.subr.mxu0 %v72
    %1467 = vmatpush1.msra.mxu0 %v71
    %1468 = vmatprep.subr.mxu0 %v76
    %1469 = vmatpush1.msra.mxu0 %v75
    %1470 = vmatprep.subr.mxu0 %v80
    %1471 = vmatpush1.msra.mxu0 %v79
    %1472 = vmatprep.subr.mxu0 %v84
    %1473 = vmatpush1.msra.mxu0 %v83
    %1474 = vmatprep.subr.mxu0 %v88
    %1475 = vmatpush1.msra.mxu0 %v87
    %1476 = vmatprep.subr.mxu0 %v92
    %1477 = vmatpush1.msra.mxu0 %v91
    %1478 = vmatprep.subr.mxu0 %v96
    %1479 = vmatpush1.msra.mxu0 %v95
    %1480 = vmatprep.subr.mxu0 %v100
    %1481 = vmatpush1.msra.mxu0 %v99
    %1482 = vmatprep.subr.mxu0 %v104
    %1483 = vmatpush1.msra.mxu0 %v103
    %1484 = vmatprep.subr.mxu0 %v108
    %1485 = vmatpush1.msra.mxu0 %v107
    %1486 = vmatprep.subr.mxu0 %v112
    %1487 = vmatpush1.msra.mxu0 %v111
    %1488 = vmatprep.subr.mxu0 0.0
    %1489 = vmatpush1.msra.mxu0 0.0
    %1490 = vmatprep.subr.mxu0 0.0
    %1491 = vmatpush1.msra.mxu0 0.0
    %1492 = vmatprep.subr.mxu0 0.0
    %1493 = vmatpush1.msra.mxu0 0.0
    %1494 = vmatprep.subr.mxu0 0.0
    %1495 = vmatpush1.msra.mxu0 0.0
    %1496 = vmatprep.subr.mxu0 0.0
    %1497 = vmatpush1.msra.mxu0 0.0
    %1498 = vmatprep.subr.mxu0 0.0
    %1499 = vmatpush1.msra.mxu0 0.0
    %1500 = vmatprep.subr.mxu0 0.0
    %1501 = vmatpush1.msra.mxu0 0.0
    %1502 = vmatprep.subr.mxu0 0.0
    %1503 = vmatpush1.msra.mxu0 0.0
    %1504 = vmatprep.subr.mxu0 0.0
    %1505 = vmatpush1.msra.mxu0 0.0
    %1506 = vmatprep.subr.mxu0 0.0
    %1507 = vmatpush1.msra.mxu0 0.0
    %1508 = vmatprep.subr.mxu0 0.0
    %1509 = vmatpush1.msra.mxu0 0.0
    %1510 = vmatprep.subr.mxu0 0.0
    %1511 = vmatpush1.msra.mxu0 0.0
    %1512 = vmatprep.subr.mxu0 0.0
    %1513 = vmatpush1.msra.mxu0 0.0
    %1514 = vmatprep.subr.mxu0 0.0
    %1515 = vmatpush1.msra.mxu0 0.0
    %1516 = vmatprep.subr.mxu0 0.0
    %1517 = vmatpush1.msra.mxu0 0.0
    %1518 = vmatprep.subr.mxu0 0.0
    %1519 = vmatpush1.msra.mxu0 0.0
    %1520 = vmatprep.mubr.f32.mxu0 0.0
    %1521 = vmatmul.mubr.f32.gmra.mrb[0].mxu0 %v1378
    %v1522 = vpop.f32.mrb[0].mxu0
    %v1523 = vadd.f32 0.0, %v1522
    %v1524 = vpop.f32.mrb[0].mxu0
    %v1525 = vadd.f32 0.0, %v1524
    %1526 = vdwg.mxu0
    %v1527 = vadd.f32 %v1381, %v1452
    %v1528 = vadd.f32 %v1382, %v1454
    %v1529 = vadd.f32 %v1383, %v1523
    %v1530 = vadd.f32 %v1384, %v1525
    %v1531 = vxor.u32 %v1527, 2147483648
    %v1532 = vxor.u32 %v1528, 2147483648
    %v1533 = vxor.u32 %v1529, 2147483648
    %v1534 = vmul.f32 %v1531, 1.442695
    %v1535 = vpow.pop %v1534
    %v1536 = vmul.f32 %v1532, 1.442695
    %v1537 = vpow.pop %v1536
    %v1538 = vmul.f32 %v1533, 1.442695
    %v1539 = vpow.pop %v1538
    %v1540 = vadd.f32 %v1535, 1.0
    %v1541 = vadd.f32 %v1537, 1.0
    %v1542 = vadd.f32 %v1539, 1.0
    %v1543 = vrcp.pop %v1540
    %v1544 = vmul.f32 1.0, %v1543
    %v1545 = vrcp.pop %v1541
    %v1546 = vmul.f32 1.0, %v1545
    %v1547 = vrcp.pop %v1542
    %v1548 = vmul.f32 1.0, %v1547
    %v1549 = vtanh.pop %v1530
    %v1550 = vmul.f32 %v1546, %v1379
    %v1551 = vmul.f32 %v1544, %v1549
    %v1552 = vadd.f32 %v1550, %v1551
    %v1553 = vtanh.pop %v1552
    %v1554 = vmul.f32 %v1548, %v1553
    %1555 = vst [vmem:[#allocation2] sm:$0xff] %v1554
    %1556 = vst [vmem:[#allocation3] sm:$0xff] %v1552
    %s1557 = scalar_lea.vmem [#allocation9], 56
    %1558 = vst [vmem:[%s1557] sm:$0xff] %v1554
    // Predicated region
    $region22: #{tpu_custom_call.1} parent=1 // pred_check
      %p1559 = pneg %p43
    $region23: #{tpu_custom_call.1} parent=1 // pred_check_branch
      %1561 = sbr.rel (%p1559) target = $region25
    $region24: #{tpu_custom_call.1} parent=1 // pred_region
      %v1562 = vld [vmem:[#allocation3] sm:$0xff]
      %1563 = vst [vmem:[#allocation10] sm:$0xff] %v1562
    $region25: #{tpu_custom_call.1} parent=1 // pred_fallthru
      _
    // Predicated region
    $region26: #{tpu_custom_call.1} parent=1 // pred_check
      _
    $region27: #{tpu_custom_call.1} parent=1 // pred_check_branch
      %1565 = sbr.rel (0) target = $region29
    $region28: #{tpu_custom_call.1} parent=1 // pred_region
      %s1567 = ssub.s32 1024, 1024
      %1568 = vsyncadd [#allocation6], %s1567
      %s1569 = sshll.u32 [#allocation9], 4
      %s1570 = int_to_ptr.vmem [resolvable:$true] %s1569
      %1575 = dma.vmem_to_hbm [thread:$0]  %s1570, 1024, %s2, [#allocation6], 128, 128, 8
    $region29: #{tpu_custom_call.1} parent=1 // pred_fallthru
      _
    // Predicated region
    $region30: #{tpu_custom_call.1} parent=1 // pred_check
      _
    $region31: #{tpu_custom_call.1} parent=1 // pred_check_branch
      %1577 = sbr.rel (0) target = $region33
    $region32: #{tpu_custom_call.1} parent=1 // pred_region
      %s1579 = ssub.s32 128, 128
      %1580 = vsyncadd [#allocation11], %s1579
      %s1582 = sshll.u32 [#allocation10], 4
      %s1583 = int_to_ptr.vmem [resolvable:$true] %s1582
      %1585 = dma.vmem_to_hbm [thread:$0]  %s1583, 128, %s3, [#allocation11]
    $region33: #{tpu_custom_call.1} parent=1 // pred_fallthru
      _
    // Predicated region
    $region34: #{tpu_custom_call.1} parent=1 // pred_check
      _
    $region35: #{tpu_custom_call.1} parent=1 // pred_check_branch
      %1587 = sbr.rel (0) target = $region37
    $region36: #{tpu_custom_call.1} parent=1 // pred_region
      %1588 = dma.done [#allocation6], 1024
    $region37: #{tpu_custom_call.1} parent=1 // pred_fallthru
      _
    // Predicated region
    $region38: #{tpu_custom_call.1} parent=1 // pred_check
      _
    $region39: #{tpu_custom_call.1} parent=1 // pred_check_branch
      %1590 = sbr.rel (0) target = $region41
    $region40: #{tpu_custom_call.1} parent=1 // pred_region
      %1591 = dma.done [#allocation11], 128
    $region41: #{tpu_custom_call.1} parent=1 // pred_fallthru
      _
    %1592 = vsyncpa [#allocation5], 1
    %1593 = vsyncpa [#allocation8], 1
    %1594 = vsyncpa [#allocation6], 1
    %1595 = vsyncpa [#allocation11], 1

// kernel: tpu_custom_call.1
$region0: #{tpu_custom_call.1}
  #allocation0 [shape = 'u32[]', space=smem, size = 0x4, offset = 0x4, fixed_abs, tag = 'smem constant byte address 0x4 - core index']
  #allocation1 [shape = 'u32[144,128]{1,0:T(1,128)}', space=vmem, size = 0x12000, scoped, tag = 'internal scratch']
  #allocation2 [shape = 'f32[8,128]{1,0:T(8,128)}', space=vmem, size = 0x1000, scoped, tag = 'scratch operand']
  #allocation3 [shape = 'f32[8,128]{1,0:T(8,128)}', space=vmem, size = 0x1000, scoped, tag = 'scratch operand']
  %s0 = inlined_call_operand.hbm [shape: f32[8,8,512], index: 0, kind: input, shape index: {}]
  %s1 = inlined_call_operand.hbm [shape: f32[128,512], index: 1, kind: input, shape index: {}]
  %s2 = inlined_call_operand.hbm [shape: f32[8,8,128], index: 2, kind: output, shape index: {0}]
  %s3 = inlined_call_operand.hbm [shape: f32[8,128], index: 3, kind: output, shape index: {1}]
  %4 = xla_tuple %s2, %s3
  %s5 = sld [smem:[#allocation0]]
  $region42: #{tpu_custom_call.1} parent=0
    _
  %s7 = ssub.s32 1, %s5
  %s8 = scalar_select 0, %s7, %s5
  $region1: #{tpu_custom_call.1} parent=0
    #allocation4 [shape = 'u8[131072]{0}', space=vmem, size = 0x20000, scoped, tag = 'input window, operand 0, single buffered']
    #allocation5 [shape = 's32[1]{0}', space=sflag, size = 0x4, scoped, tag = 'scoped memory for tpu_custom_call.1']
    #allocation6 [shape = 's32[1]{0}', space=sflag, size = 0x4, scoped, tag = 'scoped memory for tpu_custom_call.1']
    #allocation7 [shape = 'u8[262144]{0}', space=vmem, size = 0x40000, scoped, tag = 'input window, operand 1, single buffered']
    #allocation8 [shape = 's32[1]{0}', space=sflag, size = 0x4, scoped, tag = 'scoped memory for tpu_custom_call.1']
    #allocation9 [shape = 'u8[32768]{0}', space=vmem, size = 0x8000, scoped, tag = 'output window, operand 0, single buffered']
    #allocation10 [shape = 'u8[4096]{0}', space=vmem, size = 0x1000, scoped, tag = 'output window, operand 1, single buffered']
    #allocation11 [shape = 's32[1]{0}', space=sflag, size = 0x4, scoped, tag = 'scoped memory for tpu_custom_call.1']
    %9 = vsyncpa [#allocation5], 0
    %10 = vsyncpa [#allocation8], 0
    %11 = vsyncpa [#allocation6], 0
    %12 = vsyncpa [#allocation11], 0
    // Predicated region
    $region2: #{tpu_custom_call.1} parent=1 // pred_check
      _
    $region3: #{tpu_custom_call.1} parent=1 // pred_check_branch
      %14 = sbr.rel (0) target = $region5
    $region4: #{tpu_custom_call.1} parent=1 // pred_region
      %s16 = ssub.s32 4096, 4096
      %17 = vsyncadd [#allocation5], %s16
      %s18 = sshll.u32 [#allocation4], 4
      %s19 = int_to_ptr.vmem [resolvable:$true] %s18
      %24 = dma.hbm_to_vmem [thread:$0]  %s0, 4096, %s19, [#allocation5], 512, 512, 32
    $region5: #{tpu_custom_call.1} parent=1 // pred_fallthru
      _
    // Predicated region
    $region6: #{tpu_custom_call.1} parent=1 // pred_check
      _
    $region7: #{tpu_custom_call.1} parent=1 // pred_check_branch
      %26 = sbr.rel (0) target = $region9
    $region8: #{tpu_custom_call.1} parent=1 // pred_region
      %s28 = ssub.s32 8192, 8192
      %29 = vsyncadd [#allocation8], %s28
      %s30 = sshll.u32 [#allocation7], 4
      %s31 = int_to_ptr.vmem [resolvable:$true] %s30
      %36 = dma.hbm_to_vmem [thread:$0]  %s1, 8192, %s31, [#allocation8], 512, 512, 32
    $region9: #{tpu_custom_call.1} parent=1 // pred_fallthru
      _
    // Predicated region
    $region10: #{tpu_custom_call.1} parent=1 // pred_check
      _
    $region11: #{tpu_custom_call.1} parent=1 // pred_check_branch
      %38 = sbr.rel (0) target = $region13
    $region12: #{tpu_custom_call.1} parent=1 // pred_region
      %39 = dma.done [#allocation5], 4096
    $region13: #{tpu_custom_call.1} parent=1 // pred_fallthru
      _
    // Predicated region
    $region14: #{tpu_custom_call.1} parent=1 // pred_check
      _
    $region15: #{tpu_custom_call.1} parent=1 // pred_check_branch
      %41 = sbr.rel (0) target = $region17
    $region16: #{tpu_custom_call.1} parent=1 // pred_region
      %42 = dma.done [#allocation8], 8192
    $region17: #{tpu_custom_call.1} parent=1 // pred_fallthru
      _
    %p43 = scmp.eq.s32.totalorder 0, 0
    // Predicated region
    $region18: #{tpu_custom_call.1} parent=1 // pred_check
      %p44 = pneg %p43
    $region19: #{tpu_custom_call.1} parent=1 // pred_check_branch
      %46 = sbr.rel (%p44) target = $region21
    $region20: #{tpu_custom_call.1} parent=1 // pred_region
      %47 = vst [vmem:[#allocation2] sm:$0xff] 0.0
      %48 = vst [vmem:[#allocation3] sm:$0xff] 0.0
    $region21: #{tpu_custom_call.1} parent=1 // pred_fallthru
      _
    %v49 = vld [vmem:[#allocation7] sm:$0xff]
    %v50 = vld [vmem:[#allocation7 + $0x8] sm:$0xff]
    %v51 = vld [vmem:[#allocation7 + $0x10] sm:$0xff]
    %v52 = vld [vmem:[#allocation7 + $0x18] sm:$0xff]
    %v53 = vld [vmem:[#allocation7 + $0x20] sm:$0xff]
    %v54 = vld [vmem:[#allocation7 + $0x28] sm:$0xff]
    %v55 = vld [vmem:[#allocation7 + $0x30] sm:$0xff]
    %v56 = vld [vmem:[#allocation7 + $0x38] sm:$0xff]
    %v57 = vld [vmem:[#allocation7 + $0x40] sm:$0xff]
    %v58 = vld [vmem:[#allocation7 + $0x48] sm:$0xff]
    %v59 = vld [vmem:[#allocation7 + $0x50] sm:$0xff]
    %v60 = vld [vmem:[#allocation7 + $0x58] sm:$0xff]
    %v61 = vld [vmem:[#allocation7 + $0x60] sm:$0xff]
    %v62 = vld [vmem:[#allocation7 + $0x68] sm:$0xff]
    %v63 = vld [vmem:[#allocation7 + $0x70] sm:$0xff]
    %v64 = vld [vmem:[#allocation7 + $0x78] sm:$0xff]
    %v65 = vld [vmem:[#allocation7 + $0x80] sm:$0xff]
    %v66 = vld [vmem:[#allocation7 + $0x88] sm:$0xff]
    %v67 = vld [vmem:[#allocation7 + $0x90] sm:$0xff]
    %v68 = vld [vmem:[#allocation7 + $0x98] sm:$0xff]
    %v69 = vld [vmem:[#allocation7 + $0xa0] sm:$0xff]
    %v70 = vld [vmem:[#allocation7 + $0xa8] sm:$0xff]
    %v71 = vld [vmem:[#allocation7 + $0xb0] sm:$0xff]
    %v72 = vld [vmem:[#allocation7 + $0xb8] sm:$0xff]
    %v73 = vld [vmem:[#allocation7 + $0xc0] sm:$0xff]
    %v74 = vld [vmem:[#allocation7 + $0xc8] sm:$0xff]
    %v75 = vld [vmem:[#allocation7 + $0xd0] sm:$0xff]
    %v76 = vld [vmem:[#allocation7 + $0xd8] sm:$0xff]
    %v77 = vld [vmem:[#allocation7 + $0xe0] sm:$0xff]
    %v78 = vld [vmem:[#allocation7 + $0xe8] sm:$0xff]
    %v79 = vld [vmem:[#allocation7 + $0xf0] sm:$0xff]
    %v80 = vld [vmem:[#allocation7 + $0xf8] sm:$0xff]
    %v81 = vld [vmem:[#allocation7 + $0x100] sm:$0xff]
    %v82 = vld [vmem:[#allocation7 + $0x108] sm:$0xff]
    %v83 = vld [vmem:[#allocation7 + $0x110] sm:$0xff]
    %v84 = vld [vmem:[#allocation7 + $0x118] sm:$0xff]
    %v85 = vld [vmem:[#allocation7 + $0x120] sm:$0xff]
    %v86 = vld [vmem:[#allocation7 + $0x128] sm:$0xff]
    %v87 = vld [vmem:[#allocation7 + $0x130] sm:$0xff]
    %v88 = vld [vmem:[#allocation7 + $0x138] sm:$0xff]
    %v89 = vld [vmem:[#allocation7 + $0x140] sm:$0xff]
    %v90 = vld [vmem:[#allocation7 + $0x148] sm:$0xff]
    %v91 = vld [vmem:[#allocation7 + $0x150] sm:$0xff]
    %v92 = vld [vmem:[#allocation7 + $0x158] sm:$0xff]
    %v93 = vld [vmem:[#allocation7 + $0x160] sm:$0xff]
    %v94 = vld [vmem:[#allocation7 + $0x168] sm:$0xff]
    %v95 = vld [vmem:[#allocation7 + $0x170] sm:$0xff]
    %v96 = vld [vmem:[#allocation7 + $0x178] sm:$0xff]
    %v97 = vld [vmem:[#allocation7 + $0x180] sm:$0xff]
    %v98 = vld [vmem:[#allocation7 + $0x188] sm:$0xff]
    %v99 = vld [vmem:[#allocation7 + $0x190] sm:$0xff]
    %v100 = vld [vmem:[#allocation7 + $0x198] sm:$0xff]
    %v101 = vld [vmem:[#allocation7 + $0x1a0] sm:$0xff]
    %v102 = vld [vmem:[#allocation7 + $0x1a8] sm:$0xff]
    %v103 = vld [vmem:[#allocation7 + $0x1b0] sm:$0xff]
    %v104 = vld [vmem:[#allocation7 + $0x1b8] sm:$0xff]
    %v105 = vld [vmem:[#allocation7 + $0x1c0] sm:$0xff]
    %v106 = vld [vmem:[#allocation7 + $0x1c8] sm:$0xff]
    %v107 = vld [vmem:[#allocation7 + $0x1d0] sm:$0xff]
    %v108 = vld [vmem:[#allocation7 + $0x1d8] sm:$0xff]
    %v109 = vld [vmem:[#allocation7 + $0x1e0] sm:$0xff]
    %v110 = vld [vmem:[#allocation7 + $0x1e8] sm:$0xff]
    %v111 = vld [vmem:[#allocation7 + $0x1f0] sm:$0xff]
    %v112 = vld [vmem:[#allocation7 + $0x1f8] sm:$0xff]
    %v113 = vld [vmem:[#allocation2] sm:$0xff]
    %v114 = vld [vmem:[#allocation3] sm:$0xff]
    %v115 = vld [vmem:[#allocation4] sm:$0xff]
    %v116 = vld [vmem:[#allocation4 + $0x8] sm:$0xff]
    %v117 = vld [vmem:[#allocation4 + $0x10] sm:$0xff]
    %v118 = vld [vmem:[#allocation4 + $0x18] sm:$0xff]
    %119 = vmatprep.subr.mxu0 %v50
    %120 = vmatpush1.msra.mxu0 %v49
    %121 = vmatprep.subr.mxu0 %v54
    %122 = vmatpush1.msra.mxu0 %v53
    %123 = vmatprep.subr.mxu0 %v58
    %124 = vmatpush1.msra.mxu0 %v57
    %125 = vmatprep.subr.mxu0 %v62
    %126 = vmatpush1.msra.mxu0 %v61
    %127 = vmatprep.subr.mxu0 %v66
    %128 = vmatpush1.msra.mxu0 %v65
    %129 = vmatprep.subr.mxu0 %v70
    %130 = vmatpush1.msra.mxu0 %v69
    %131 = vmatprep.subr.mxu0 %v74
    %132 = vmatpush1.msra.mxu0 %v73
    %133 = vmatprep.subr.mxu0 %v78
    %134 = vmatpush1.msra.mxu0 %v77
    %135 = vmatprep.subr.mxu0 %v82
    %136 = vmatpush1.msra.mxu0 %v81
    %137 = vmatprep.subr.mxu0 %v86
    %138 = vmatpush1.msra.mxu0 %v85
    %139 = vmatprep.subr.mxu0 %v90
    %140 = vmatpush1.msra.mxu0 %v89
    %141 = vmatprep.subr.mxu0 %v94
    %142 = vmatpush1.msra.mxu0 %v93
    %143 = vmatprep.subr.mxu0 %v98
    %144 = vmatpush1.msra.mxu0 %v97
    %145 = vmatprep.subr.mxu0 %v102
    %146 = vmatpush1.msra.mxu0 %v101
    %147 = vmatprep.subr.mxu0 %v106
    %148 = vmatpush1.msra.mxu0 %v105
    %149 = vmatprep.subr.mxu0 %v110
    %150 = vmatpush1.msra.mxu0 %v109
    %151 = vmatprep.subr.mxu0 0.0
    %152 = vmatpush1.msra.mxu0 0.0
    %153 = vmatprep.subr.mxu0 0.0
    %154 = vmatpush1.msra.mxu0 0.0
    %155 = vmatprep.subr.mxu0 0.0
    %156 = vmatpush1.msra.mxu0 0.0
    %157 = vmatprep.subr.mxu0 0.0
    %158 = vmatpush1.msra.mxu0 0.0
    %159 = vmatprep.subr.mxu0 0.0
    %160 = vmatpush1.msra.mxu0 0.0
    %161 = vmatprep.subr.mxu0 0.0
    %162 = vmatpush1.msra.mxu0 0.0
    %163 = vmatprep.subr.mxu0 0.0
    %164 = vmatpush1.msra.mxu0 0.0
    %165 = vmatprep.subr.mxu0 0.0
    %166 = vmatpush1.msra.mxu0 0.0
    %167 = vmatprep.subr.mxu0 0.0
    %168 = vmatpush1.msra.mxu0 0.0
    %169 = vmatprep.subr.mxu0 0.0
    %170 = vmatpush1.msra.mxu0 0.0
    %171 = vmatprep.subr.mxu0 0.0
    %172 = vmatpush1.msra.mxu0 0.0
    %173 = vmatprep.subr.mxu0 0.0
    %174 = vmatpush1.msra.mxu0 0.0
    %175 = vmatprep.subr.mxu0 0.0
    %176 = vmatpush1.msra.mxu0 0.0
    %177 = vmatprep.subr.mxu0 0.0
    %178 = vmatpush1.msra.mxu0 0.0
    %179 = vmatprep.subr.mxu0 0.0
    %180 = vmatpush1.msra.mxu0 0.0
    %181 = vmatprep.subr.mxu0 0.0
    %182 = vmatpush1.msra.mxu0 0.0
    %183 = vmatprep.mubr.f32.mxu0 0.0
    %184 = vmatmul.mubr.f32.gmra.mrb[0].mxu0 %v113
    %v185 = vpop.f32.mrb[0].mxu0
    %v186 = vadd.f32 0.0, %v185
    %v187 = vpop.f32.mrb[0].mxu0
    %v188 = vadd.f32 0.0, %v187
    %189 = vdwg.mxu0
    %190 = vmatprep.subr.mxu0 %v52
    %191 = vmatpush1.msra.mxu0 %v51
    %192 = vmatprep.subr.mxu0 %v56
    %193 = vmatpush1.msra.mxu0 %v55
    %194 = vmatprep.subr.mxu0 %v60
    %195 = vmatpush1.msra.mxu0 %v59
    %196 = vmatprep.subr.mxu0 %v64
    %197 = vmatpush1.msra.mxu0 %v63
    %198 = vmatprep.subr.mxu0 %v68
    %199 = vmatpush1.msra.mxu0 %v67
    %200 = vmatprep.subr.mxu0 %v72
    %201 = vmatpush1.msra.mxu0 %v71
    %202 = vmatprep.subr.mxu0 %v76
    %203 = vmatpush1.msra.mxu0 %v75
    %204 = vmatprep.subr.mxu0 %v80
    %205 = vmatpush1.msra.mxu0 %v79
    %206 = vmatprep.subr.mxu0 %v84
    %207 = vmatpush1.msra.mxu0 %v83
    %208 = vmatprep.subr.mxu0 %v88
    %209 = vmatpush1.msra.mxu0 %v87
    %210 = vmatprep.subr.mxu0 %v92
    %211 = vmatpush1.msra.mxu0 %v91
    %212 = vmatprep.subr.mxu0 %v96
    %213 = vmatpush1.msra.mxu0 %v95
    %214 = vmatprep.subr.mxu0 %v100
    %215 = vmatpush1.msra.mxu0 %v99
    %216 = vmatprep.subr.mxu0 %v104
    %217 = vmatpush1.msra.mxu0 %v103
    %218 = vmatprep.subr.mxu0 %v108
    %219 = vmatpush1.msra.mxu0 %v107
    %220 = vmatprep.subr.mxu0 %v112
    %221 = vmatpush1.msra.mxu0 %v111
    %222 = vmatprep.subr.mxu0 0.0
    %223 = vmatpush1.msra.mxu0 0.0
    %224 = vmatprep.subr.mxu0 0.0
    %225 = vmatpush1.msra.mxu0 0.0
    %226 = vmatprep.subr.mxu0 0.0
    %227 = vmatpush1.msra.mxu0 0.0
    %228 = vmatprep.subr.mxu0 0.0
    %229 = vmatpush1.msra.mxu0 0.0
    %230 = vmatprep.subr.mxu0 0.0
    %231 = vmatpush1.msra.mxu0 0.0
    %232 = vmatprep.subr.mxu0 0.0
    %233 = vmatpush1.msra.mxu0 0.0
    %234 = vmatprep.subr.mxu0 0.0
    %235 = vmatpush1.msra.mxu0 0.0
    %236 = vmatprep.subr.mxu0 0.0
    %237 = vmatpush1.msra.mxu0 0.0
    %238 = vmatprep.subr.mxu0 0.0
    %239 = vmatpush1.msra.mxu0 0.0
    %240 = vmatprep.subr.mxu0 0.0
    %241 = vmatpush1.msra.mxu0 0.0
    %242 = vmatprep.subr.mxu0 0.0
    %243 = vmatpush1.msra.mxu0 0.0
    %244 = vmatprep.subr.mxu0 0.0
    %245 = vmatpush1.msra.mxu0 0.0
    %246 = vmatprep.subr.mxu0 0.0
    %247 = vmatpush1.msra.mxu0 0.0
    %248 = vmatprep.subr.mxu0 0.0
    %249 = vmatpush1.msra.mxu0 0.0
    %250 = vmatprep.subr.mxu0 0.0
    %251 = vmatpush1.msra.mxu0 0.0
    %252 = vmatprep.subr.mxu0 0.0
    %253 = vmatpush1.msra.mxu0 0.0
    %254 = vmatprep.mubr.f32.mxu0 0.0
    %255 = vmatmul.mubr.f32.gmra.mrb[0].mxu0 %v113
    %v256 = vpop.f32.mrb[0].mxu0
    %v257 = vadd.f32 0.0, %v256
    %v258 = vpop.f32.mrb[0].mxu0
    %v259 = vadd.f32 0.0, %v258
    %260 = vdwg.mxu0
    %v261 = vadd.f32 %v115, %v186
    %v262 = vadd.f32 %v116, %v188
    %v263 = vadd.f32 %v117, %v257
    %v264 = vadd.f32 %v118, %v259
    %v265 = vxor.u32 %v261, 2147483648
    %v266 = vxor.u32 %v262, 2147483648
    %v267 = vxor.u32 %v263, 2147483648
    %v268 = vmul.f32 %v265, 1.442695
    %v269 = vpow.pop %v268
    %v270 = vmul.f32 %v266, 1.442695
    %v271 = vpow.pop %v270
    %v272 = vmul.f32 %v267, 1.442695
    %v273 = vpow.pop %v272
    %v274 = vadd.f32 %v269, 1.0
    %v275 = vadd.f32 %v271, 1.0
    %v276 = vadd.f32 %v273, 1.0
    %v277 = vrcp.pop %v274
    %v278 = vmul.f32 1.0, %v277
    %v279 = vrcp.pop %v275
    %v280 = vmul.f32 1.0, %v279
    %v281 = vrcp.pop %v276
    %v282 = vmul.f32 1.0, %v281
    %v283 = vtanh.pop %v264
    %v284 = vmul.f32 %v280, %v114
    %v285 = vmul.f32 %v278, %v283
    %v286 = vadd.f32 %v284, %v285
    %v287 = vtanh.pop %v286
    %v288 = vmul.f32 %v282, %v287
    %289 = vst [vmem:[#allocation2] sm:$0xff] %v288
    %290 = vst [vmem:[#allocation3] sm:$0xff] %v286
    %291 = vst [vmem:[#allocation9] sm:$0xff] %v288
    %v292 = vld [vmem:[#allocation2] sm:$0xff]
    %v293 = vld [vmem:[#allocation3] sm:$0xff]
    %s294 = scalar_lea.vmem [#allocation4], 32
    %v295 = vld [vmem:[%s294] sm:$0xff]
    %v296 = vld [vmem:[%s294 + $0x8] sm:$0xff]
    %v297 = vld [vmem:[%s294 + $0x10] sm:$0xff]
    %v298 = vld [vmem:[%s294 + $0x18] sm:$0xff]
    %299 = vmatprep.subr.mxu0 %v50
    %300 = vmatpush1.msra.mxu0 %v49
    %301 = vmatprep.subr.mxu0 %v54
    %302 = vmatpush1.msra.mxu0 %v53
    %303 = vmatprep.subr.mxu0 %v58
    %304 = vmatpush1.msra.mxu0 %v57
    %305 = vmatprep.subr.mxu0 %v62
    %306 = vmatpush1.msra.mxu0 %v61
    %307 = vmatprep.subr.mxu0 %v66
    %308 = vmatpush1.msra.mxu0 %v65
    %309 = vmatprep.subr.mxu0 %v70
    %310 = vmatpush1.msra.mxu0 %v69
    %311 = vmatprep.subr.mxu0 %v74
    %312 = vmatpush1.msra.mxu0 %v73
    %313 = vmatprep.subr.mxu0 %v78
    %314 = vmatpush1.msra.mxu0 %v77
    %315 = vmatprep.subr.mxu0 %v82
    %316 = vmatpush1.msra.mxu0 %v81
    %317 = vmatprep.subr.mxu0 %v86
    %318 = vmatpush1.msra.mxu0 %v85
    %319 = vmatprep.subr.mxu0 %v90
    %320 = vmatpush1.msra.mxu0 %v89
    %321 = vmatprep.subr.mxu0 %v94
    %322 = vmatpush1.msra.mxu0 %v93
    %323 = vmatprep.subr.mxu0 %v98
    %324 = vmatpush1.msra.mxu0 %v97
    %325 = vmatprep.subr.mxu0 %v102
    %326 = vmatpush1.msra.mxu0 %v101
    %327 = vmatprep.subr.mxu0 %v106
    %328 = vmatpush1.msra.mxu0 %v105
    %329 = vmatprep.subr.mxu0 %v110
    %330 = vmatpush1.msra.mxu0 %v109
    %331 = vmatprep.subr.mxu0 0.0
    %332 = vmatpush1.msra.mxu0 0.0
    %333 = vmatprep.subr.mxu0 0.0
    %334 = vmatpush1.msra.mxu0 0.0
    %335 = vmatprep.subr.mxu0 0.0
    %336 = vmatpush1.msra.mxu0 0.0
    %337 = vmatprep.subr.mxu0 0.0
    %338 = vmatpush1.msra.mxu0 0.0
    %339 = vmatprep.subr.mxu0 0.0
    %340 = vmatpush1.msra.mxu0 0.0
    %341 = vmatprep.subr.mxu0 0.0
    %342 = vmatpush1.msra.mxu0 0.0
    %343 = vmatprep.subr.mxu0 0.0
    %344 = vmatpush1.msra.mxu0 0.0
    %345 = vmatprep.subr.mxu0 0.0
    %346 = vmatpush1.msra.mxu0 0.0
    %347 = vmatprep.subr.mxu0 0.0
    %348 = vmatpush1.msra.mxu0 0.0
    %349 = vmatprep.subr.mxu0 0.0
    %350 = vmatpush1.msra.mxu0 0.0
    %351 = vmatprep.subr.mxu0 0.0
    %352 = vmatpush1.msra.mxu0 0.0
    %353 = vmatprep.subr.mxu0 0.0
    %354 = vmatpush1.msra.mxu0 0.0
    %355 = vmatprep.subr.mxu0 0.0
    %356 = vmatpush1.msra.mxu0 0.0
    %357 = vmatprep.subr.mxu0 0.0
    %358 = vmatpush1.msra.mxu0 0.0
    %359 = vmatprep.subr.mxu0 0.0
    %360 = vmatpush1.msra.mxu0 0.0
    %361 = vmatprep.subr.mxu0 0.0
    %362 = vmatpush1.msra.mxu0 0.0
    %363 = vmatprep.mubr.f32.mxu0 0.0
    %364 = vmatmul.mubr.f32.gmra.mrb[0].mxu0 %v292
    %v365 = vpop.f32.mrb[0].mxu0
    %v366 = vadd.f32 0.0, %v365
    %v367 = vpop.f32.mrb[0].mxu0
    %v368 = vadd.f32 0.0, %v367
    %369 = vdwg.mxu0
    %370 = vmatprep.subr.mxu0 %v52
    %371 = vmatpush1.msra.mxu0 %v51
    %372 = vmatprep.subr.mxu0 %v56
    %373 = vmatpush1.msra.mxu0 %v55
    %374 = vmatprep.subr.mxu0 %v60
    %375 = vmatpush1.msra.mxu0 %v59
    %376 = vmatprep.subr.mxu0 %v64
    %377 = vmatpush1.msra.mxu0 %v63
    %378 = vmatprep.subr.mxu0 %v68
    %379 = vmatpush1.msra.mxu0 %v67
    %380 = vmatprep.subr.mxu0 %v72
    %381 = vmatpush1.msra.mxu0 %v71
    %382 = vmatprep.subr.mxu0 %v76
    %383 = vmatpush1.msra.mxu0 %v75
    %384 = vmatprep.subr.mxu0 %v80
    %385 = vmatpush1.msra.mxu0 %v79
    %386 = vmatprep.subr.mxu0 %v84
    %387 = vmatpush1.msra.mxu0 %v83
    %388 = vmatprep.subr.mxu0 %v88
    %389 = vmatpush1.msra.mxu0 %v87
    %390 = vmatprep.subr.mxu0 %v92
    %391 = vmatpush1.msra.mxu0 %v91
    %392 = vmatprep.subr.mxu0 %v96
    %393 = vmatpush1.msra.mxu0 %v95
    %394 = vmatprep.subr.mxu0 %v100
    %395 = vmatpush1.msra.mxu0 %v99
    %396 = vmatprep.subr.mxu0 %v104
    %397 = vmatpush1.msra.mxu0 %v103
    %398 = vmatprep.subr.mxu0 %v108
    %399 = vmatpush1.msra.mxu0 %v107
    %400 = vmatprep.subr.mxu0 %v112
    %401 = vmatpush1.msra.mxu0 %v111
    %402 = vmatprep.subr.mxu0 0.0
    %403 = vmatpush1.msra.mxu0 0.0
    %404 = vmatprep.subr.mxu0 0.0
    %405 = vmatpush1.msra.mxu0 0.0
    %406 = vmatprep.subr.mxu0 0.0
    %407 = vmatpush1.msra.mxu0 0.0
    %408 = vmatprep.subr.mxu0 0.0
    %409 = vmatpush1.msra.mxu0 0.0
    %410 = vmatprep.subr.mxu0 0.0
    %411 = vmatpush1.msra.mxu0 0.0
    %412 = vmatprep.subr.mxu0 0.0
    %413 = vmatpush1.msra.mxu0 0.0
    %414 = vmatprep.subr.mxu0 0.0
    %415 = vmatpush1.msra.mxu0 0.0
    %416 = vmatprep.subr.mxu0 0.0
    %417 = vmatpush1.msra.mxu0 0.0
    %418 = vmatprep.subr.mxu0 0.0
    %419 = vmatpush1.msra.mxu0 0.0
    %420 = vmatprep.subr.mxu0 0.0
    %421 = vmatpush1.msra.mxu0 0.0
    %422 = vmatprep.subr.mxu0 0.0
    %423 = vmatpush1.msra.mxu0 0.0
    %424 = vmatprep.subr.mxu0 0.0
    %425 = vmatpush1.msra.mxu0 0.0
    %426 = vmatprep.subr.mxu0 0.0
    %427 = vmatpush1.msra.mxu0 0.0
    %428 = vmatprep.subr.mxu0 0.0
    %429 = vmatpush1.msra.mxu0 0.0
    %430 = vmatprep.subr.mxu0 0.0
    %431 = vmatpush1.msra.mxu0 0.0
    %432 = vmatprep.subr.mxu0 0.0
    %433 = vmatpush1.msra.mxu0 0.0
    %434 = vmatprep.mubr.f32.mxu0 0.0
    %435 = vmatmul.mubr.f32.gmra.mrb[0].mxu0 %v292
    %v436 = vpop.f32.mrb[0].mxu0
    %v437 = vadd.f32 0.0, %v436
    %v438 = vpop.f32.mrb[0].mxu0
    %v439 = vadd.f32 0.0, %v438
    %440 = vdwg.mxu0
    %v441 = vadd.f32 %v295, %v366
    %v442 = vadd.f32 %v296, %v368
    %v443 = vadd.f32 %v297, %v437
    %v444 = vadd.f32 %v298, %v439
    %v445 = vxor.u32 %v441, 2147483648
    %v446 = vxor.u32 %v442, 2147483648
    %v447 = vxor.u32 %v443, 2147483648
    %v448 = vmul.f32 %v445, 1.442695
    %v449 = vpow.pop %v448
    %v450 = vmul.f32 %v446, 1.442695
    %v451 = vpow.pop %v450
    %v452 = vmul.f32 %v447, 1.442695
    %v453 = vpow.pop %v452
    %v454 = vadd.f32 %v449, 1.0
    %v455 = vadd.f32 %v451, 1.0
    %v456 = vadd.f32 %v453, 1.0
    %v457 = vrcp.pop %v454
    %v458 = vmul.f32 1.0, %v457
    %v459 = vrcp.pop %v455
    %v460 = vmul.f32 1.0, %v459
    %v461 = vrcp.pop %v456
    %v462 = vmul.f32 1.0, %v461
    %v463 = vtanh.pop %v444
    %v464 = vmul.f32 %v460, %v293
    %v465 = vmul.f32 %v458, %v463
    %v466 = vadd.f32 %v464, %v465
    %v467 = vtanh.pop %v466
    %v468 = vmul.f32 %v462, %v467
    %469 = vst [vmem:[#allocation2] sm:$0xff] %v468
    %470 = vst [vmem:[#allocation3] sm:$0xff] %v466
    %s471 = scalar_lea.vmem [#allocation9], 8
    %472 = vst [vmem:[%s471] sm:$0xff] %v468
    %v473 = vld [vmem:[#allocation2] sm:$0xff]
    %v474 = vld [vmem:[#allocation3] sm:$0xff]
    %s475 = scalar_lea.vmem [#allocation4], 64
    %v476 = vld [vmem:[%s475] sm:$0xff]
    %v477 = vld [vmem:[%s475 + $0x8] sm:$0xff]
    %v478 = vld [vmem:[%s475 + $0x10] sm:$0xff]
    %v479 = vld [vmem:[%s475 + $0x18] sm:$0xff]
    %480 = vmatprep.subr.mxu0 %v50
    %481 = vmatpush1.msra.mxu0 %v49
    %482 = vmatprep.subr.mxu0 %v54
    %483 = vmatpush1.msra.mxu0 %v53
    %484 = vmatprep.subr.mxu0 %v58
    %485 = vmatpush1.msra.mxu0 %v57
    %486 = vmatprep.subr.mxu0 %v62
    %487 = vmatpush1.msra.mxu0 %v61
    %488 = vmatprep.subr.mxu0 %v66
    %489 = vmatpush1.msra.mxu0 %v65
    %490 = vmatprep.subr.mxu0 %v70
    %491 = vmatpush1.msra.mxu0 %v69
    %492 = vmatprep.subr.mxu0 %v74
    %493 = vmatpush1.msra.mxu0 %v73
    %494 = vmatprep.subr.mxu0 %v78
    %495 = vmatpush1.msra.mxu0 %v77
    %496 = vmatprep.subr.mxu0 %v82
    %497 = vmatpush1.msra.mxu0 %v81
    %498 = vmatprep.subr.mxu0 %v86
    %499 = vmatpush1.msra.mxu0 %v85
    %500 = vmatprep.subr.mxu0 %v90
    %501 = vmatpush1.msra.mxu0 %v89
    %502 = vmatprep.subr.mxu0 %v94
    %503 = vmatpush1.msra.mxu0 %v93
    %504 = vmatprep.subr.mxu0 %v98
    %505 = vmatpush1.msra.mxu0 %v97
    %506 = vmatprep.subr.mxu0 %v102
    %507 = vmatpush1.msra.mxu0 %v101
    %508 = vmatprep.subr.mxu0 %v106
    %509 = vmatpush1.msra.mxu0 %v105
    %510 = vmatprep.subr.mxu0 %v110
    %511 = vmatpush1.msra.mxu0 %v109
    %512 = vmatprep.subr.mxu0 0.0
    %513 = vmatpush1.msra.mxu0 0.0
    %514 = vmatprep.subr.mxu0 0.0
    %515 = vmatpush1.msra.mxu0 0.0
    %516 = vmatprep.subr.mxu0 0.0
    %517 = vmatpush1.msra.mxu0 0.0
    %518 = vmatprep.subr.mxu0 0.0
    %519 = vmatpush1.msra.mxu0 0.0
    %520 = vmatprep.subr.mxu0 0.0
    %521 = vmatpush1.msra.mxu0 0.0
    %522 = vmatprep.subr.mxu0 0.0
    %523 = vmatpush1.msra.mxu0 0.0
    %524 = vmatprep.subr.mxu0 0.0
    %525 = vmatpush1.msra.mxu0 0.0
    %526 = vmatprep.subr.mxu0 0.0
    %527 = vmatpush1.msra.mxu0 0.0
    %528 = vmatprep.subr.mxu0 0.0
    %529 = vmatpush1.msra.mxu0 0.0
    %530 = vmatprep.subr.mxu0 0.0
    %531 = vmatpush1.msra.mxu0 0.0
    %532 = vmatprep.subr.mxu0 0.0
    %533 = vmatpush1.msra.mxu0 0.0
    %534 = vmatprep.subr.mxu0 0.0
    %535 = vmatpush1.msra.mxu0 0.0
    %536 = vmatprep.subr.mxu0 0.0
    %537 = vmatpush1.msra.mxu0 0.0
    %538 = vmatprep.subr.mxu0 0.0
    %539 = vmatpush1.msra.mxu0 0.0
    %540 = vmatprep.subr.mxu0 0.0
    %541 = vmatpush1.msra.mxu0 0.0
    %542 = vmatprep.subr.mxu0 0.0
    %543 = vmatpush1.msra.mxu0 0.0
    %544 = vmatprep.mubr.f32.mxu0 0.0
    %545 = vmatmul.mubr.f32.gmra.mrb[0].mxu0 %v473
    %v546 = vpop.f32.mrb[0].mxu0
    %v547 = vadd.f32 0.0, %v546
    %v548 = vpop.f32.mrb[0].mxu0
    %v549 = vadd.f32 0.0, %v548
    %550 = vdwg.mxu0
    %551 = vmatprep.subr.mxu0 %v52
    %552 = vmatpush1.msra.mxu0 %v51
    %553 = vmatprep.subr.mxu0 %v56
    %554 = vmatpush1.msra.mxu0 %v55
    %555 = vmatprep.subr.mxu0 %v60
    %556 = vmatpush1.msra.mxu0 %v59
    %557 = vmatprep.subr.mxu0 %v64
    %558 = vmatpush1.msra.mxu0 %v63
    %559 = vmatprep.subr.mxu0 %v68
    %560 = vmatpush1.msra.mxu0 %v67
    %561 = vmatprep.subr.mxu0 %v72
    %562 = vmatpush1.msra.mxu0 %v71
    %563 = vmatprep.subr.mxu0 %v76
    %564 = vmatpush1.msra.mxu0 %v75
    %565 = vmatprep.subr.mxu0 %v80
    %566 = vmatpush1.msra.mxu0 %v79
    %567 = vmatprep.subr.mxu0 %v84
    %568 = vmatpush1.msra.mxu0 %v83
    %569 = vmatprep.subr.mxu0 %v88
    %570 = vmatpush1.msra.mxu0 %v87
    %571 = vmatprep.subr.mxu0 %v92
    %572 = vmatpush1.msra.mxu0 %v91
    %573 = vmatprep.subr.mxu0 %v96
    %574 = vmatpush1.msra.mxu0 %v95
    %575 = vmatprep.subr.mxu0 %v100
    %576 = vmatpush1.msra.mxu0 %v99
    %577 = vmatprep.subr.mxu0 %v104
    %578 = vmatpush1.msra.mxu0 %v103
    %579 = vmatprep.subr.mxu0 %v108
    %580 = vmatpush1.msra.mxu0 %v107
    %581 = vmatprep.subr.mxu0 %v112
    %582 = vmatpush1.msra.mxu0 %v111
    %583 = vmatprep.subr.mxu0 0.0
    %584 = vmatpush1.msra.mxu0 0.0
    %585 = vmatprep.subr.mxu0 0.0
    %586 = vmatpush1.msra.mxu0 0.0
    %587 = vmatprep.subr.mxu0 0.0
    %588 = vmatpush1.msra.mxu0 0.0
    %589 = vmatprep.subr.mxu0 0.0
    %590 = vmatpush1.msra.mxu0 0.0
    %591 = vmatprep.subr.mxu0 0.0
    %592 = vmatpush1.msra.mxu0 0.0
    %593 = vmatprep.subr.mxu0 0.0
    %594 = vmatpush1.msra.mxu0 0.0
    %595 = vmatprep.subr.mxu0 0.0
    %596 = vmatpush1.msra.mxu0 0.0
    %597 = vmatprep.subr.mxu0 0.0
    %598 = vmatpush1.msra.mxu0 0.0
    %599 = vmatprep.subr.mxu0 0.0
    %600 = vmatpush1.msra.mxu0 0.0
    %601 = vmatprep.subr.mxu0 0.0
    %602 = vmatpush1.msra.mxu0 0.0
    %603 = vmatprep.subr.mxu0 0.0
    %604 = vmatpush1.msra.mxu0 0.0
    %605 = vmatprep.subr.mxu0 0.0
    %606 = vmatpush1.msra.mxu0 0.0
    %607 = vmatprep.subr.mxu0 0.0
    %608 = vmatpush1.msra.mxu0 0.0
    %609 = vmatprep.subr.mxu0 0.0
    %610 = vmatpush1.msra.mxu0 0.0
    %611 = vmatprep.subr.mxu0 0.0
    %612 = vmatpush1.msra.mxu0 0.0
    %613 = vmatprep.subr.mxu0 0.0
    %614 = vmatpush1.msra.mxu0 0.0
    %615 = vmatprep.mubr.f32.mxu0 0.0
    %616 = vmatmul.mubr.f32.gmra.mrb[0].mxu0 %v473
    %v617 = vpop.f32.mrb[0].mxu0
    %v618 = vadd.f32 0.0, %v617
    %v619 = vpop.f32.mrb[0].mxu0
    %v620 = vadd.f32 0.0, %v619
    %621 = vdwg.mxu0
    %v622 = vadd.f32 %v476, %v547
    %v623 = vadd.f32 %v477, %v549
    %v624 = vadd.f32 %v478, %v618
    %v625 = vadd.f32 %v479, %v620
    %v626 = vxor.u32 %v622, 2147483648
    %v627 = vxor.u32 %v623, 2147483648
    %v628 = vxor.u32 %v624, 2147483648
    %v629 = vmul.f32 %v626, 1.442695
    %v630 = vpow.pop %v629
    %v631 = vmul.f32 %v627, 1.442695
    %v632 = vpow.pop %v631
    %v633 = vmul.f32 %v628, 1.442695
    %v634 = vpow.pop %v633
    %v635 = vadd.f32 %v630, 1.0
    %v636 = vadd.f32 %v632, 1.0
    %v637 = vadd.f32 %v634, 1.0
    %v638 = vrcp.pop %v635
    %v639 = vmul.f32 1.0, %v638
    %v640 = vrcp.pop %v636
    %v641 = vmul.f32 1.0, %v640
    %v642 = vrcp.pop %v637
    %v643 = vmul.f32 1.0, %v642
    %v644 = vtanh.pop %v625
    %v645 = vmul.f32 %v641, %v474
    %v646 = vmul.f32 %v639, %v644
    %v647 = vadd.f32 %v645, %v646
    %v648 = vtanh.pop %v647
    %v649 = vmul.f32 %v643, %v648
    %650 = vst [vmem:[#allocation2] sm:$0xff] %v649
    %651 = vst [vmem:[#allocation3] sm:$0xff] %v647
    %s652 = scalar_lea.vmem [#allocation9], 16
    %653 = vst [vmem:[%s652] sm:$0xff] %v649
    %v654 = vld [vmem:[#allocation2] sm:$0xff]
    %v655 = vld [vmem:[#allocation3] sm:$0xff]
    %s656 = scalar_lea.vmem [#allocation4], 96
    %v657 = vld [vmem:[%s656] sm:$0xff]
    %v658 = vld [vmem:[%s656 + $0x8] sm:$0xff]
    %v659 = vld [vmem:[%s656 + $0x10] sm:$0xff]
    %v660 = vld [vmem:[%s656 + $0x18] sm:$0xff]
    %661 = vmatprep.subr.mxu0 %v50
    %662 = vmatpush1.msra.mxu0 %v49
    %663 = vmatprep.subr.mxu0 %v54
    %664 = vmatpush1.msra.mxu0 %v53
    %665 = vmatprep.subr.mxu0 %v58
    %666 = vmatpush1.msra.mxu0 %v57
    %667 = vmatprep.subr.mxu0 %v62
    %668 = vmatpush1.msra.mxu0 %v61
    %669 = vmatprep.subr.mxu0 %v66
    %670 = vmatpush1.msra.mxu0 %v65
    %671 = vmatprep.subr.mxu0 %v70
    %672 = vmatpush1.msra.mxu0 %v69
    %673 = vmatprep.subr.mxu0 %v74
    %674 = vmatpush1.msra.mxu0 %v73
    %675 = vmatprep.subr.mxu0 %v78
    %676 = vmatpush1.msra.mxu0 %v77
    %677 = vmatprep.subr.mxu0 %v82
    %678 = vmatpush1.msra.mxu0 %v81
    %679 = vmatprep.subr.mxu0 %v86
    %680 = vmatpush1.msra.mxu0 %v85
    %681 = vmatprep.subr.mxu0 %v90
    %682 = vmatpush1.msra.mxu0 %v89
    %683 = vmatprep.subr.mxu0 %v94
    %684 = vmatpush1.msra.mxu0 %v93
    %685 = vmatprep.subr.mxu0 %v98
    %686 = vmatpush1.msra.mxu0 %v97
    %687 = vmatprep.subr.mxu0 %v102
    %688 = vmatpush1.msra.mxu0 %v101
    %689 = vmatprep.subr.mxu0 %v106
    %690 = vmatpush1.msra.mxu0 %v105
    %691 = vmatprep.subr.mxu0 %v110
    %692 = vmatpush1.msra.mxu0 %v109
    %693 = vmatprep.subr.mxu0 0.0
    %694 = vmatpush1.msra.mxu0 0.0
    %695 = vmatprep.subr.mxu0 0.0
    %696 = vmatpush1.msra.mxu0 0.0
    %697 = vmatprep.subr.mxu0 0.0
    %698 = vmatpush1.msra.mxu0 0.0
    %699 = vmatprep.subr.mxu0 0.0
    %700 = vmatpush1.msra.mxu0 0.0
    %701 = vmatprep.subr.mxu0 0.0
    %702 = vmatpush1.msra.mxu0 0.0
    %703 = vmatprep.subr.mxu0 0.0
    %704 = vmatpush1.msra.mxu0 0.0
    %705 = vmatprep.subr.mxu0 0.0
    %706 = vmatpush1.msra.mxu0 0.0
    %707 = vmatprep.subr.mxu0 0.0
    %708 = vmatpush1.msra.mxu0 0.0
    %709 = vmatprep.subr.mxu0 0.0
    %710 = vmatpush1.msra.mxu0 0.0
    %711 = vmatprep.subr.mxu0 0.0
    %712 = vmatpush1.msra.mxu0 0.0
    %713 = vmatprep.subr.mxu0 0.0
    %714 = vmatpush1.msra.mxu0 0.0
    %715 = vmatprep.subr.mxu0 0.0
    %716 = vmatpush1.msra.mxu0 0.0
    %717 = vmatprep.subr.mxu0 0.0
    %718 = vmatpush1.msra.mxu0 0.0
    %719 = vmatprep.subr.mxu0 0.0
    %720 = vmatpush1.msra.mxu0 0.0
    %721 = vmatprep.subr.mxu0 0.0
    %722 = vmatpush1.msra.mxu0 0.0
    %723 = vmatprep.subr.mxu0 0.0
    %724 = vmatpush1.msra.mxu0 0.0
    %725 = vmatprep.mubr.f32.mxu0 0.0
    %726 = vmatmul.mubr.f32.gmra.mrb[0].mxu0 %v654
    %v727 = vpop.f32.mrb[0].mxu0
    %v728 = vadd.f32 0.0, %v727
    %v729 = vpop.f32.mrb[0].mxu0
    %v730 = vadd.f32 0.0, %v729
    %731 = vdwg.mxu0
    %732 = vmatprep.subr.mxu0 %v52
    %733 = vmatpush1.msra.mxu0 %v51
    %734 = vmatprep.subr.mxu0 %v56
    %735 = vmatpush1.msra.mxu0 %v55
    %736 = vmatprep.subr.mxu0 %v60
    %737 = vmatpush1.msra.mxu0 %v59
    %738 = vmatprep.subr.mxu0 %v64
    %739 = vmatpush1.msra.mxu0 %v63
    %740 = vmatprep.subr.mxu0 %v68
    %741 = vmatpush1.msra.mxu0 %v67
    %742 = vmatprep.subr.mxu0 %v72
    %743 = vmatpush1.msra.mxu0 %v71
    %744 = vmatprep.subr.mxu0 %v76
    %745 = vmatpush1.msra.mxu0 %v75
    %746 = vmatprep.subr.mxu0 %v80
    %747 = vmatpush1.msra.mxu0 %v79
    %748 = vmatprep.subr.mxu0 %v84
    %749 = vmatpush1.msra.mxu0 %v83
    %750 = vmatprep.subr.mxu0 %v88
    %751 = vmatpush1.msra.mxu0 %v87
    %752 = vmatprep.subr.mxu0 %v92
    %753 = vmatpush1.msra.mxu0 %v91
    %754 = vmatprep.subr.mxu0 %v96
    %755 = vmatpush1.msra.mxu0 %v95
    %756 = vmatprep.subr.mxu0 %v100
    %757 = vmatpush1.msra.mxu0 %v99
    %758 = vmatprep.subr.mxu0 %v104
    %759 = vmatpush1.msra.mxu0 %v103
    %760 = vmatprep.subr.mxu0 %v108
    %761 = vmatpush1.msra.mxu0 %v107
    %762 = vmatprep.subr.mxu0 %v112
    %763 = vmatpush1.msra.mxu0 %v111
    %764 = vmatprep.subr.mxu0 0.0
    %765 = vmatpush1.msra.mxu0 0.0
    %766 = vmatprep.subr.mxu0 0.0
    %767 = vmatpush1.msra.mxu0 0.0
    %768 = vmatprep.subr.mxu0 0.0
    %769 = vmatpush1.msra.mxu0 0.0
    %770 = vmatprep.subr.mxu0 0.0
    %771 = vmatpush1.msra.mxu0 0.0
    %772 = vmatprep.subr.mxu0 0.0
    %773 = vmatpush1.msra.mxu0 0.0
    %774 = vmatprep.subr.mxu0 0.0
    %775 = vmatpush1.msra.mxu0 0.0
    %776 = vmatprep.subr.mxu0 0.0
    %777 = vmatpush1.msra.mxu0 0.0
    %778 = vmatprep.subr.mxu0 0.0
    %779 = vmatpush1.msra.mxu0 0.0
    %780 = vmatprep.subr.mxu0 0.0
    %781 = vmatpush1.msra.mxu0 0.0
    %782 = vmatprep.subr.mxu0 0.0
    %783 = vmatpush1.msra.mxu0 0.0
    %784 = vmatprep.subr.mxu0 0.0
    %785 = vmatpush1.msra.mxu0 0.0
    %786 = vmatprep.subr.mxu0 0.0
    %787 = vmatpush1.msra.mxu0 0.0
    %788 = vmatprep.subr.mxu0 0.0
    %789 = vmatpush1.msra.mxu0 0.0
    %790 = vmatprep.subr.mxu0 0.0
    %791 = vmatpush1.msra.mxu0 0.0
    %792 = vmatprep.subr.mxu0 0.0
    %793 = vmatpush1.msra.mxu0 0.0
    %794 = vmatprep.subr.mxu0 0.0
    %795 = vmatpush1.msra.mxu0 0.0
    %796 = vmatprep.mubr.f32.mxu0 0.0
    %797 = vmatmul.mubr.f32.gmra.mrb[0].mxu0 %v654
    %v798 = vpop.f32.mrb[0].mxu0
    %v799 = vadd.f32 0.0, %v798
    %v800 = vpop.f32.mrb[0].mxu0
    %v801 = vadd.f32 0.0, %v800
    %802 = vdwg.mxu0
    %v803 = vadd.f32 %v657, %v728
    %v804 = vadd.f32 %v658, %v730
    %v805 = vadd.f32 %v659, %v799
    %v806 = vadd.f32 %v660, %v801
    %v807 = vxor.u32 %v803, 2147483648
    %v808 = vxor.u32 %v804, 2147483648
    %v809 = vxor.u32 %v805, 2147483648
    %v810 = vmul.f32 %v807, 1.442695
    %v811 = vpow.pop %v810
    %v812 = vmul.f32 %v808, 1.442695
    %v813 = vpow.pop %v812
    %v814 = vmul.f32 %v809, 1.442695
    %v815 = vpow.pop %v814
    %v816 = vadd.f32 %v811, 1.0
    %v817 = vadd.f32 %v813, 1.0
    %v818 = vadd.f32 %v815, 1.0
    %v819 = vrcp.pop %v816
    %v820 = vmul.f32 1.0, %v819
    %v821 = vrcp.pop %v817
    %v822 = vmul.f32 1.0, %v821
    %v823 = vrcp.pop %v818
    %v824 = vmul.f32 1.0, %v823
    %v825 = vtanh.pop %v806
    %v826 = vmul.f32 %v822, %v655
    %v827 = vmul.f32 %v820, %v825
    %v828 = vadd.f32 %v826, %v827
    %v829 = vtanh.pop %v828
    %v830 = vmul.f32 %v824, %v829
    %831 = vst [vmem:[#allocation2] sm:$0xff] %v830
    %832 = vst [vmem:[#allocation3] sm:$0xff] %v828
    %s833 = scalar_lea.vmem [#allocation9], 24
    %834 = vst [vmem:[%s833] sm:$0xff] %v830
    %v835 = vld [vmem:[#allocation2] sm:$0xff]
    %v836 = vld [vmem:[#allocation3] sm:$0xff]
    %s837 = scalar_lea.vmem [#allocation4], 128
    %v838 = vld [vmem:[%s837] sm:$0xff]
    %v839 = vld [vmem:[%s837 + $0x8] sm:$0xff]
    %v840 = vld [vmem:[%s837 + $0x10] sm:$0xff]
    %v841 = vld [vmem:[%s837 + $0x18] sm:$0xff]
    %842 = vmatprep.subr.mxu0 %v50
    %843 = vmatpush1.msra.mxu0 %v49
    %844 = vmatprep.subr.mxu0 %v54
    %845 = vmatpush1.msra.mxu0 %v53
    %846 = vmatprep.subr.mxu0 %v58
    %847 = vmatpush1.msra.mxu0 %v57
    %848 = vmatprep.subr.mxu0 %v62
    %849 = vmatpush1.msra.mxu0 %v61
    %850 = vmatprep.subr.mxu0 %v66
    %851 = vmatpush1.msra.mxu0 %v65
    %852 = vmatprep.subr.mxu0 %v70
    %853 = vmatpush1.msra.mxu0 %v69
    %854 = vmatprep.subr.mxu0 %v74
    %855 = vmatpush1.msra.mxu0 %v73
    %856 = vmatprep.subr.mxu0 %v78
    %857 = vmatpush1.msra.mxu0 %v77
    %858 = vmatprep.subr.mxu0 %v82
    %859 = vmatpush1.msra.mxu0 %v81
    %860 = vmatprep.subr.mxu0 %v86
    %861 = vmatpush1.msra.mxu0 %v85
    %862 = vmatprep.subr.mxu0 %v90
    %863 = vmatpush1.msra.mxu0 %v89
    %864 = vmatprep.subr.mxu0 %v94
    %865 = vmatpush1.msra.mxu0 %v93
    %866 = vmatprep.subr.mxu0 %v98
    %867 = vmatpush1.msra.mxu0 %v97
    %868 = vmatprep.subr.mxu0 %v102
    %869 = vmatpush1.msra.mxu0 %v101
    %870 = vmatprep.subr.mxu0 %v106
    %871 = vmatpush1.msra.mxu0 %v105
    %872 = vmatprep.subr.mxu0 %v110
    %873 = vmatpush1.msra.mxu0 %v109
    %874 = vmatprep.subr.mxu0 0.0
    %875 = vmatpush1.msra.mxu0 0.0
    %876 = vmatprep.subr.mxu0 0.0
    %877 = vmatpush1.msra.mxu0 0.0
    %878 = vmatprep.subr.mxu0 0.0
    %879 = vmatpush1.msra.mxu0 0.0
    %880 = vmatprep.subr.mxu0 0.0
    %881 = vmatpush1.msra.mxu0 0.0
    %882 = vmatprep.subr.mxu0 0.0
    %883 = vmatpush1.msra.mxu0 0.0
    %884 = vmatprep.subr.mxu0 0.0
    %885 = vmatpush1.msra.mxu0 0.0
    %886 = vmatprep.subr.mxu0 0.0
    %887 = vmatpush1.msra.mxu0 0.0
    %888 = vmatprep.subr.mxu0 0.0
    %889 = vmatpush1.msra.mxu0 0.0
    %890 = vmatprep.subr.mxu0 0.0
    %891 = vmatpush1.msra.mxu0 0.0
    %892 = vmatprep.subr.mxu0 0.0
    %893 = vmatpush1.msra.mxu0 0.0
    %894 = vmatprep.subr.mxu0 0.0
    %895 = vmatpush1.msra.mxu0 0.0
    %896 = vmatprep.subr.mxu0 0.0
    %897 = vmatpush1.msra.mxu0 0.0
    %898 = vmatprep.subr.mxu0 0.0
    %899 = vmatpush1.msra.mxu0 0.0
    %900 = vmatprep.subr.mxu0 0.0
    %901 = vmatpush1.msra.mxu0 0.0
    %902 = vmatprep.subr.mxu0 0.0
    %903 = vmatpush1.msra.mxu0 0.0
    %904 = vmatprep.subr.mxu0 0.0
    %905 = vmatpush1.msra.mxu0 0.0
    %906 = vmatprep.mubr.f32.mxu0 0.0
    %907 = vmatmul.mubr.f32.gmra.mrb[0].mxu0 %v835
    %v908 = vpop.f32.mrb[0].mxu0
    %v909 = vadd.f32 0.0, %v908
    %v910 = vpop.f32.mrb[0].mxu0
    %v911 = vadd.f32 0.0, %v910
    %912 = vdwg.mxu0
    %913 = vmatprep.subr.mxu0 %v52
    %914 = vmatpush1.msra.mxu0 %v51
    %915 = vmatprep.subr.mxu0 %v56
    %916 = vmatpush1.msra.mxu0 %v55
    %917 = vmatprep.subr.mxu0 %v60
    %918 = vmatpush1.msra.mxu0 %v59
    %919 = vmatprep.subr.mxu0 %v64
    %920 = vmatpush1.msra.mxu0 %v63
    %921 = vmatprep.subr.mxu0 %v68
    %922 = vmatpush1.msra.mxu0 %v67
    %923 = vmatprep.subr.mxu0 %v72
    %924 = vmatpush1.msra.mxu0 %v71
    %925 = vmatprep.subr.mxu0 %v76
    %926 = vmatpush1.msra.mxu0 %v75
    %927 = vmatprep.subr.mxu0 %v80
    %928 = vmatpush1.msra.mxu0 %v79
    %929 = vmatprep.subr.mxu0 %v84
    %930 = vmatpush1.msra.mxu0 %v83
    %931 = vmatprep.subr.mxu0 %v88
    %932 = vmatpush1.msra.mxu0 %v87
    %933 = vmatprep.subr.mxu0 %v92
    %934 = vmatpush1.msra.mxu0 %v91
    %935 = vmatprep.subr.mxu0 %v96
    %936 = vmatpush1.msra.mxu0 %v95
    %937 = vmatprep.subr.mxu0 %v100
    %938 = vmatpush1.msra.mxu0 %v99
    %939 = vmatprep.subr.mxu0 %v104
    %940 = vmatpush1.msra.mxu0 %v103
    %941 = vmatprep.subr.mxu0 %v108
    %942 = vmatpush1.msra.mxu0 %v107
    %943 = vmatprep.subr.mxu0 %v112
    %944 = vmatpush1.msra.mxu0 %v111
    %945 = vmatprep.subr.mxu0 0.0
    %946 = vmatpush1.msra.mxu0 0.0
    %947 = vmatprep.subr.mxu0 0.0
    %948 = vmatpush1.msra.mxu0 0.0
    %949 = vmatprep.subr.mxu0 0.0
    %950 = vmatpush1.msra.mxu0 0.0
    %951 = vmatprep.subr.mxu0 0.0
    %952 = vmatpush1.msra.mxu0 0.0
    %953 = vmatprep.subr.mxu0 0.0
    %954 = vmatpush1.msra.mxu0 0.0
    %955 = vmatprep.subr.mxu0 0.0
    %956 = vmatpush1.msra.mxu0 0.0
    %957 = vmatprep.subr.mxu0 0.0
    %958 = vmatpush1.msra.mxu0 0.0
    %959 = vmatprep.subr.mxu0 0.0
    %960 = vmatpush1.msra.mxu0 0.0
    %961 = vmatprep.subr.mxu0 0.0
    %962 = vmatpush1.msra.mxu0 0.0
    %963 = vmatprep.subr.mxu0 0.0
    %964 = vmatpush1.msra.mxu0 0.0
    %965 = vmatprep.subr.mxu0 0.0
    %966 = vmatpush1.msra.mxu0 0.0
    %967 = vmatprep.subr.mxu0 0.0
    %968 = vmatpush1.msra.mxu0 0.0
    %969 = vmatprep.subr.mxu0 0.0
    %970 = vmatpush1.msra.mxu0 0.0
    %971 = vmatprep.subr.mxu0 0.0
    %972 = vmatpush1.msra.mxu0 0.0
    %973 = vmatprep.subr.mxu0 0.0
    %974 = vmatpush1.msra.mxu0 0.0
    %975 = vmatprep.subr.mxu0 0.0
    %976 = vmatpush1.msra.mxu0 0.0
    %977 = vmatprep.mubr.f32.mxu0 0.0
    %978 = vmatmul.mubr.f32.gmra.mrb[0].mxu0 %v835
    %v979 = vpop.f32.mrb[0].mxu0
    %v980 = vadd.f32 0.0, %v979
    %v981 = vpop.f32.mrb[0].mxu0
    %v982 = vadd.f32 0.0, %v981
    %983 = vdwg.mxu0
    %v984 = vadd.f32 %v838, %v909
    %v985 = vadd.f32 %v839, %v911
    %v986 = vadd.f32 %v840, %v980
    %v987 = vadd.f32 %v841, %v982
    %v988 = vxor.u32 %v984, 2147483648
    %v989 = vxor.u32 %v985, 2147483648
    %v990 = vxor.u32 %v986, 2147483648
    %v991 = vmul.f32 %v988, 1.442695
    %v992 = vpow.pop %v991
    %v993 = vmul.f32 %v989, 1.442695
    %v994 = vpow.pop %v993
    %v995 = vmul.f32 %v990, 1.442695
    %v996 = vpow.pop %v995
    %v997 = vadd.f32 %v992, 1.0
    %v998 = vadd.f32 %v994, 1.0
    %v999 = vadd.f32 %v996, 1.0
    %v1000 = vrcp.pop %v997
    %v1001 = vmul.f32 1.0, %v1000
    %v1002 = vrcp.pop %v998
    %v1003 = vmul.f32 1.0, %v1002
    %v1004 = vrcp.pop %v999
    %v1005 = vmul.f32 1.0, %v1004
    %v1006 = vtanh.pop %v987
    %v1007 = vmul.f32 %v1003, %v836
    %v1008 = vmul.f32 %v1001, %v1006
    %v1009 = vadd.f32 %v1007, %v1008
    %v1010 = vtanh.pop %v1009
    %v1011 = vmul.f32 %v1005, %v1010
    %1012 = vst [vmem:[#allocation2] sm:$0xff] %v1011
    %1013 = vst [vmem:[#allocation3] sm:$0xff] %v1009
    %s1014 = scalar_lea.vmem [#allocation9], 32
    %1015 = vst [vmem:[%s1014] sm:$0xff] %v1011
    %v1016 = vld [vmem:[#allocation2] sm:$0xff]
    %v1017 = vld [vmem:[#allocation3] sm:$0xff]
    %s1018 = scalar_lea.vmem [#allocation4], 160
    %v1019 = vld [vmem:[%s1018] sm:$0xff]
    %v1020 = vld [vmem:[%s1018 + $0x8] sm:$0xff]
    %v1021 = vld [vmem:[%s1018 + $0x10] sm:$0xff]
    %v1022 = vld [vmem:[%s1018 + $0x18] sm:$0xff]
    %1023 = vmatprep.subr.mxu0 %v50
    %1024 = vmatpush1.msra.mxu0 %v49
    %1025 = vmatprep.subr.mxu0 %v54
    %1026 = vmatpush1.msra.mxu0 %v53
    %1027 = vmatprep.subr.mxu0 %v58
    %1028 = vmatpush1.msra.mxu0 %v57
    %1029 = vmatprep.subr.mxu0 %v62
    %1030 = vmatpush1.msra.mxu0 %v61
    %1031 = vmatprep.subr.mxu0 %v66
    %1032 = vmatpush1.msra.mxu0 %v65
    %1033 = vmatprep.subr.mxu0 %v70
    %1034 = vmatpush1.msra.mxu0 %v69
    %1035 = vmatprep.subr.mxu0 %v74
    %1036 = vmatpush1.msra.mxu0 %v73
    %1037 = vmatprep.subr.mxu0 %v78
    %1038 = vmatpush1.msra.mxu0 %v77
    %1039 = vmatprep.subr.mxu0 %v82
    %1040 = vmatpush1.msra.mxu0 %v81
    %1041 = vmatprep.subr.mxu0 %v86
    %1042 = vmatpush1.msra.mxu0 %v85
    %1043 = vmatprep.subr.mxu0 %v90
    %1044 = vmatpush1.msra.mxu0 %v89
    %1045 = vmatprep.subr.mxu0 %v94
    %1046 = vmatpush1.msra.mxu0 %v93
    %1047 = vmatprep.subr.mxu0 %v98
    %1048 = vmatpush1.msra.mxu0 %v97
    %1049 = vmatprep.subr.mxu0 %v102
    %1050 = vmatpush1.msra.mxu0 %v101
    %1051 = vmatprep.subr.mxu0 %v106
    %1052 = vmatpush1.msra.mxu0 %v105
    %1053 = vmatprep.subr.mxu0 %v110
    %1054 = vmatpush1.msra.mxu0 %v109
    %1055 = vmatprep.subr.mxu0 0.0
    %1056 = vmatpush1.msra.mxu0 0.0
    %1057 = vmatprep.subr.mxu0 0.0
    %1058 = vmatpush1.msra.mxu0 0.0
    %1059 = vmatprep.subr.mxu0 0.0
    %1060 = vmatpush1.msra.mxu0 0.0
    %1061 = vmatprep.subr.mxu0 0.0
    %1062 = vmatpush1.msra.mxu0 0.0
    %1063 = vmatprep.subr.mxu0 0.0
    %1064 = vmatpush1.msra.mxu0 0.0
    %1065 = vmatprep.subr.mxu0 0.0
    %1066 = vmatpush1.msra.mxu0 0.0
    %1067 = vmatprep.subr.mxu0 0.0
    %1068 = vmatpush1.msra.mxu0 0.0
    %1069 = vmatprep.subr.mxu0 0.0
    %1070 = vmatpush1.msra.mxu0 0.0
    %1071 = vmatprep.subr.mxu0 0.0
    %1072 = vmatpush1.msra.mxu0 0.0
    %1073 = vmatprep.subr.mxu0 0.0
    %1074 = vmatpush1.msra.mxu0 0.0
    %1075 = vmatprep.subr.mxu0 0.0
    %1076 = vmatpush1.msra.mxu0 0.0
    %1077 = vmatprep.subr.mxu0 0.0
    %1078 = vmatpush1.msra.mxu0 0.0
    %1079 = vmatprep.subr.mxu0 0.0
    %1080 = vmatpush1.msra.mxu0 0.0
    %1081 = vmatprep.subr.mxu0 0.0
    %1082 = vmatpush1.msra.mxu0 0.0
    %1083 = vmatprep.subr.mxu0 0.0
    %1084 = vmatpush1.msra.mxu0 0.0
    %1085 = vmatprep.subr.mxu0 0.0
    %1086 = vmatpush1.msra.mxu0 0.0
    %1087 = vmatprep.mubr.f32.mxu0 0.0
    %1088 = vmatmul.mubr.f32.gmra.mrb[0].mxu0 %v1016
    %v1089 = vpop.f32.mrb[0].mxu0
    %v1090 = vadd.f32 0.0, %v1089
    %v1091 = vpop.f32.mrb[0].mxu0
    %v1092 = vadd.f32 0.0, %v1091
    %1093 = vdwg.mxu0
    %1094 = vmatprep.subr.mxu0 %v52
    %1095 = vmatpush1.msra.mxu0 %v51
    %1096 = vmatprep.subr.mxu0 %v56
    %1097 = vmatpush1.msra.mxu0 %v55
    %1098 = vmatprep.subr.mxu0 %v60
    %1099 = vmatpush1.msra.mxu0 %v59
    %1100 = vmatprep.subr.mxu0 %v64
    %1101 = vmatpush1.msra.mxu0 %v63
    %1102 = vmatprep.subr.mxu0 %v68
    %1103 = vmatpush1.msra.mxu0 %v67
    %1104 = vmatprep.subr.mxu0 %v72
    %1105 = vmatpush1.msra.mxu0 %v71
    %1106 = vmatprep.subr.mxu0 %v76
    %1107 = vmatpush1.msra.mxu0 %v75
    %1108 = vmatprep.subr.mxu0 %v80
    %1109 = vmatpush1.msra.mxu0 %v79
    %1110 = vmatprep.subr.mxu0 %v84
    %1111 = vmatpush1.msra.mxu0 %v83
    %1112 = vmatprep.subr.mxu0 %v88
    %1113 = vmatpush1.msra.mxu0 %v87
    %1114 = vmatprep.subr.mxu0 %v92
    %1115 = vmatpush1.msra.mxu0 %v91
    %1116 = vmatprep.subr.mxu0 %v96
    %1117 = vmatpush1.msra.mxu0 %v95
    %1118 = vmatprep.subr.mxu0 %v100
    %1119 = vmatpush1.msra.mxu0 %v99
    %1120 = vmatprep.subr.mxu0 %v104
    %1121 = vmatpush1.msra.mxu0 %v103
    %1122 = vmatprep.subr.mxu0 %v108
    %1123 = vmatpush1.msra.mxu0 %v107
    %1124 = vmatprep.subr.mxu0 %v112
    %1125 = vmatpush1.msra.mxu0 %v111
    %1126 = vmatprep.subr.mxu0 0.0
    %1127 = vmatpush1.msra.mxu0 0.0
    %1128 = vmatprep.subr.mxu0 0.0
    %1129 = vmatpush1.msra.mxu0 0.0
    %1130 = vmatprep.subr.mxu0 0.0
    %1131 = vmatpush1.msra.mxu0 0.0
    %1132 = vmatprep.subr.mxu0 0.0
    %1133 = vmatpush1.msra.mxu0 0.0
    %1134 = vmatprep.subr.mxu0 0.0
    %1135 = vmatpush1.msra.mxu0 0.0
    %1136 = vmatprep.subr.mxu0 0.0
    %1137 = vmatpush1.msra.mxu0 0.0
    %1138 = vmatprep.subr.mxu0 0.0
    %1139 = vmatpush1.msra.mxu0 0.0
    %1140 = vmatprep.subr.mxu0 0.0
    %1141 = vmatpush1.msra.mxu0 0.0
    %1142 = vmatprep.subr.mxu0 0.0
    %1143 = vmatpush1.msra.mxu0 0.0
    %1144 = vmatprep.subr.mxu0 0.0
    %1145 = vmatpush1.msra.mxu0 0.0
    %1146 = vmatprep.subr.mxu0 0.0
    %1147 = vmatpush1.msra.mxu0 0.0
    %1148 = vmatprep.subr.mxu0 0.0
    %1149 = vmatpush1.msra.mxu0 0.0
    %1150 = vmatprep.subr.mxu0 0.0
    %1151 = vmatpush1.msra.mxu0 0.0
    %1152 = vmatprep.subr.mxu0 0.0
    %1153 = vmatpush1.msra.mxu0 0.0
    %1154 = vmatprep.subr.mxu0 0.0
    %1155 = vmatpush1.msra.mxu0 0.0
    %1156 = vmatprep.subr.mxu0 0.0
    %1157 = vmatpush1.msra.mxu0 0.0
    %1158 = vmatprep.mubr.f32.mxu0 0.0
    %1159 = vmatmul.mubr.f32.gmra.mrb[0].mxu0 %v1016
    %v1160 = vpop.f32.mrb[0].mxu0
    %v1161 = vadd.f32 0.0, %v1160
    %v1162 = vpop.f32.mrb[0].mxu0
    %v1163 = vadd.f32 0.0, %v1162
    %1164 = vdwg.mxu0
    %v1165 = vadd.f32 %v1019, %v1090
    %v1166 = vadd.f32 %v1020, %v1092
    %v1167 = vadd.f32 %v1021, %v1161
    %v1168 = vadd.f32 %v1022, %v1163
    %v1169 = vxor.u32 %v1165, 2147483648
    %v1170 = vxor.u32 %v1166, 2147483648
    %v1171 = vxor.u32 %v1167, 2147483648
    %v1172 = vmul.f32 %v1169, 1.442695
    %v1173 = vpow.pop %v1172
    %v1174 = vmul.f32 %v1170, 1.442695
    %v1175 = vpow.pop %v1174
    %v1176 = vmul.f32 %v1171, 1.442695
    %v1177 = vpow.pop %v1176
    %v1178 = vadd.f32 %v1173, 1.0
    %v1179 = vadd.f32 %v1175, 1.0
    %v1180 = vadd.f32 %v1177, 1.0
    %v1181 = vrcp.pop %v1178
    %v1182 = vmul.f32 1.0, %v1181
    %v1183 = vrcp.pop %v1179
    %v1184 = vmul.f32 1.0, %v1183
    %v1185 = vrcp.pop %v1180
    %v1186 = vmul.f32 1.0, %v1185
    %v1187 = vtanh.pop %v1168
    %v1188 = vmul.f32 %v1184, %v1017
    %v1189 = vmul.f32 %v1182, %v1187
    %v1190 = vadd.f32 %v1188, %v1189
    %v1191 = vtanh.pop %v1190
    %v1192 = vmul.f32 %v1186, %v1191
    %1193 = vst [vmem:[#allocation2] sm:$0xff] %v1192
    %1194 = vst [vmem:[#allocation3] sm:$0xff] %v1190
    %s1195 = scalar_lea.vmem [#allocation9], 40
    %1196 = vst [vmem:[%s1195] sm:$0xff] %v1192
    %v1197 = vld [vmem:[#allocation2] sm:$0xff]
    %v1198 = vld [vmem:[#allocation3] sm:$0xff]
    %s1199 = scalar_lea.vmem [#allocation4], 192
    %v1200 = vld [vmem:[%s1199] sm:$0xff]
    %v1201 = vld [vmem:[%s1199 + $0x8] sm:$0xff]
    %v1202 = vld [vmem:[%s1199 + $0x10] sm:$0xff]
    %v1203 = vld [vmem:[%s1199 + $0x18] sm:$0xff]
    %1204 = vmatprep.subr.mxu0 %v50
    %1205 = vmatpush1.msra.mxu0 %v49
    %1206 = vmatprep.subr.mxu0 %v54
    %1207 = vmatpush1.msra.mxu0 %v53
    %1208 = vmatprep.subr.mxu0 %v58
    %1209 = vmatpush1.msra.mxu0 %v57
    %1210 = vmatprep.subr.mxu0 %v62
    %1211 = vmatpush1.msra.mxu0 %v61
    %1212 = vmatprep.subr.mxu0 %v66
    %1213 = vmatpush1.msra.mxu0 %v65
    %1214 = vmatprep.subr.mxu0 %v70
    %1215 = vmatpush1.msra.mxu0 %v69
    %1216 = vmatprep.subr.mxu0 %v74
    %1217 = vmatpush1.msra.mxu0 %v73
    %1218 = vmatprep.subr.mxu0 %v78
    %1219 = vmatpush1.msra.mxu0 %v77
    %1220 = vmatprep.subr.mxu0 %v82
    %1221 = vmatpush1.msra.mxu0 %v81
    %1222 = vmatprep.subr.mxu0 %v86
    %1223 = vmatpush1.msra.mxu0 %v85
    %1224 = vmatprep.subr.mxu0 %v90
    %1225 = vmatpush1.msra.mxu0 %v89
    %1226 = vmatprep.subr.mxu0 %v94
    %1227 = vmatpush1.msra.mxu0 %v93
    %1228 = vmatprep.subr.mxu0 %v98
    %1229 = vmatpush1.msra.mxu0 %v97
    %1230 = vmatprep.subr.mxu0 %v102
    %1231 = vmatpush1.msra.mxu0 %v101
    %1232 = vmatprep.subr.mxu0 %v106
    %1233 = vmatpush1.msra.mxu0 %v105
    %1234 = vmatprep.subr.mxu0 %v110
    %1235 = vmatpush1.msra.mxu0 %v109
    %1236 = vmatprep.subr.mxu0 0.0
    %1237 = vmatpush1.msra.mxu0 0.0
    %1238 = vmatprep.subr.mxu0 0.0
    %1239 = vmatpush1.msra.mxu0 0.0
    %1240 = vmatprep.subr.mxu0 0.0
    %1241 = vmatpush1.msra.mxu0 0.0
    %1242 = vmatprep.subr.mxu0 0.0
    %1243 = vmatpush1.msra.mxu0 0.0
    %1244 = vmatprep.subr.mxu0 0.0
    %1245 = vmatpush1.msra.mxu0 0.0
    %1246 = vmatprep.subr.mxu0 0.0
    %1247 = vmatpush1.msra.mxu0 0.0
    %1248 = vmatprep.subr.mxu0 0.0
    %1249 = vmatpush1.msra.mxu0 0.0
    %1250 = vmatprep.subr.mxu0 0.0
    %1251 = vmatpush1.msra.mxu0 0.0
    %1252 = vmatprep.subr.mxu0 0.0
    %1253 = vmatpush1.msra.mxu0 0.0
    %1254 = vmatprep.subr.mxu0 0.0
    %1255 = vmatpush1.msra.mxu0 0.0
    %1256 = vmatprep.subr.mxu0 0.0
    %1257 = vmatpush1.msra.mxu0 0.0
    %1258 = vmatprep.subr.mxu0 0.0
    %1259 = vmatpush1.msra.mxu0 0.0
    %1260 = vmatprep.subr.mxu0 0.0
    %1261 = vmatpush1.msra.mxu0 0.0
    %1262 = vmatprep.subr.mxu0 0.0
    %1263 = vmatpush1.msra.mxu0 0.0
    %1264 = vmatprep.subr.mxu0 0.0
    %1265 = vmatpush1.msra.mxu0 0.0
    %1266 = vmatprep.subr.mxu0 0.0
    %1267 = vmatpush1.msra.mxu0 0.0
    %1268 = vmatprep.mubr.f32.mxu0 0.0
    %1269 = vmatmul.mubr.f32.gmra.mrb[0].mxu0 %v1197
    %v1270 = vpop.f32.mrb[0].mxu0
    %v1271 = vadd.f32 0.0, %v1270
    %v1272 = vpop.f32.mrb[0].mxu0
    %v1273 = vadd.f32 0.0, %v1272
    %1274 = vdwg.mxu0
    %1275 = vmatprep.subr.mxu0 %v52
    %1276 = vmatpush1.msra.mxu0 %v51
    %1277 = vmatprep.subr.mxu0 %v56
    %1278 = vmatpush1.msra.mxu0 %v55
    %1279 = vmatprep.subr.mxu0 %v60
    %1280 = vmatpush1.msra.mxu0 %v59
    %1281 = vmatprep.subr.mxu0 %v64
    %1282 = vmatpush1.msra.mxu0 %v63
    %1283 = vmatprep.subr.mxu0 %v68
    %1284 = vmatpush1.msra.mxu0 %v67
    %1285 = vmatprep.subr.mxu0 %v72
    %1286 = vmatpush1.msra.mxu0 %v71
    %1287 = vmatprep.subr.mxu0 %v76
    %1288 = vmatpush1.msra.mxu0 %v75
    %1289 = vmatprep.subr.mxu0 %v80
    %1290 = vmatpush1.msra.mxu0 %v79
    %1291 = vmatprep.subr.mxu0 %v84
    %1292 = vmatpush1.msra.mxu0 %v83
    %1293 = vmatprep.subr.mxu0 %v88
    %1294 = vmatpush1.msra.mxu0 %v87
    %1295 = vmatprep.subr.mxu0 %v92
    %1296 = vmatpush1.msra.mxu0 %v91
    %1297 = vmatprep.subr.mxu0 %v96
    %1298 = vmatpush1.msra.mxu0 %v95
    %1299 = vmatprep.subr.mxu0 %v100
    %1300 = vmatpush1.msra.mxu0 %v99
    %1301 = vmatprep.subr.mxu0 %v104
    %1302 = vmatpush1.msra.mxu0 %v103
    %1303 = vmatprep.subr.mxu0 %v108
    %1304 = vmatpush1.msra.mxu0 %v107
    %1305 = vmatprep.subr.mxu0 %v112
    %1306 = vmatpush1.msra.mxu0 %v111
    %1307 = vmatprep.subr.mxu0 0.0
    %1308 = vmatpush1.msra.mxu0 0.0
    %1309 = vmatprep.subr.mxu0 0.0
    %1310 = vmatpush1.msra.mxu0 0.0
    %1311 = vmatprep.subr.mxu0 0.0
    %1312 = vmatpush1.msra.mxu0 0.0
    %1313 = vmatprep.subr.mxu0 0.0
    %1314 = vmatpush1.msra.mxu0 0.0
    %1315 = vmatprep.subr.mxu0 0.0
    %1316 = vmatpush1.msra.mxu0 0.0
    %1317 = vmatprep.subr.mxu0 0.0
    %1318 = vmatpush1.msra.mxu0 0.0
    %1319 = vmatprep.subr.mxu0 0.0
    %1320 = vmatpush1.msra.mxu0 0.0
    %1321 = vmatprep.subr.mxu0 0.0
    %1322 = vmatpush1.msra.mxu0 0.0
    %1323 = vmatprep.subr.mxu0 0.0
    %1324 = vmatpush1.msra.mxu0 0.0
    %1325 = vmatprep.subr.mxu0 0.0
    %1326 = vmatpush1.msra.mxu0 0.0
    %1327 = vmatprep.subr.mxu0 0.0
    %1328 = vmatpush1.msra.mxu0 0.0
    %1329 = vmatprep.subr.mxu0 0.0
    %1330 = vmatpush1.msra.mxu0 0.0
    %1331 = vmatprep.subr.mxu0 0.0
    %1332 = vmatpush1.msra.mxu0 0.0
    %1333 = vmatprep.subr.mxu0 0.0
    %1334 = vmatpush1.msra.mxu0 0.0
    %1335 = vmatprep.subr.mxu0 0.0
    %1336 = vmatpush1.msra.mxu0 0.0
    %1337 = vmatprep.subr.mxu0 0.0
    %1338 = vmatpush1.msra.mxu0 0.0
    %1339 = vmatprep.mubr.f32.mxu0 0.0
    %1340 = vmatmul.mubr.f32.gmra.mrb[0].mxu0 %v1197
    %v1341 = vpop.f32.mrb[0].mxu0
    %v1342 = vadd.f32 0.0, %v1341
    %v1343 = vpop.f32.mrb[0].mxu0
    %v1344 = vadd.f32 0.0, %v1343
    %1345 = vdwg.mxu0
    %v1346 = vadd.f32 %v1200, %v1271
    %v1347 = vadd.f32 %v1201, %v1273
    %v1348 = vadd.f32 %v1202, %v1342
    %v1349 = vadd.f32 %v1203, %v1344
    %v1350 = vxor.u32 %v1346, 2147483648
    %v1351 = vxor.u32 %v1347, 2147483648
    %v1352 = vxor.u32 %v1348, 2147483648
    %v1353 = vmul.f32 %v1350, 1.442695
    %v1354 = vpow.pop %v1353
    %v1355 = vmul.f32 %v1351, 1.442695
    %v1356 = vpow.pop %v1355
    %v1357 = vmul.f32 %v1352, 1.442695
    %v1358 = vpow.pop %v1357
    %v1359 = vadd.f32 %v1354, 1.0
    %v1360 = vadd.f32 %v1356, 1.0
    %v1361 = vadd.f32 %v1358, 1.0
    %v1362 = vrcp.pop %v1359
    %v1363 = vmul.f32 1.0, %v1362
    %v1364 = vrcp.pop %v1360
    %v1365 = vmul.f32 1.0, %v1364
    %v1366 = vrcp.pop %v1361
    %v1367 = vmul.f32 1.0, %v1366
    %v1368 = vtanh.pop %v1349
    %v1369 = vmul.f32 %v1365, %v1198
    %v1370 = vmul.f32 %v1363, %v1368
    %v1371 = vadd.f32 %v1369, %v1370
    %v1372 = vtanh.pop %v1371
    %v1373 = vmul.f32 %v1367, %v1372
    %1374 = vst [vmem:[#allocation2] sm:$0xff] %v1373
    %1375 = vst [vmem:[#allocation3] sm:$0xff] %v1371
    %s1376 = scalar_lea.vmem [#allocation9], 48
    %1377 = vst [vmem:[%s1376] sm:$0xff] %v1373
    %v1378 = vld [vmem:[#allocation2] sm:$0xff]
    %v1379 = vld [vmem:[#allocation3] sm:$0xff]
    %s1380 = scalar_lea.vmem [#allocation4], 224
    %v1381 = vld [vmem:[%s1380] sm:$0xff]
    %v1382 = vld [vmem:[%s1380 + $0x8] sm:$0xff]
    %v1383 = vld [vmem:[%s1380 + $0x10] sm:$0xff]
    %v1384 = vld [vmem:[%s1380 + $0x18] sm:$0xff]
    %1385 = vmatprep.subr.mxu0 %v50
    %1386 = vmatpush1.msra.mxu0 %v49
    %1387 = vmatprep.subr.mxu0 %v54
    %1388 = vmatpush1.msra.mxu0 %v53
    %1389 = vmatprep.subr.mxu0 %v58
    %1390 = vmatpush1.msra.mxu0 %v57
    %1391 = vmatprep.subr.mxu0 %v62
    %1392 = vmatpush1.msra.mxu0 %v61
    %1393 = vmatprep.subr.mxu0 %v66
    %1394 = vmatpush1.msra.mxu0 %v65
    %1395 = vmatprep.subr.mxu0 %v70
    %1396 = vmatpush1.msra.mxu0 %v69
    %1397 = vmatprep.subr.mxu0 %v74
    %1398 = vmatpush1.msra.mxu0 %v73
    %1399 = vmatprep.subr.mxu0 %v78
    %1400 = vmatpush1.msra.mxu0 %v77
    %1401 = vmatprep.subr.mxu0 %v82
    %1402 = vmatpush1.msra.mxu0 %v81
    %1403 = vmatprep.subr.mxu0 %v86
    %1404 = vmatpush1.msra.mxu0 %v85
    %1405 = vmatprep.subr.mxu0 %v90
    %1406 = vmatpush1.msra.mxu0 %v89
    %1407 = vmatprep.subr.mxu0 %v94
    %1408 = vmatpush1.msra.mxu0 %v93
    %1409 = vmatprep.subr.mxu0 %v98
    %1410 = vmatpush1.msra.mxu0 %v97
    %1411 = vmatprep.subr.mxu0 %v102
    %1412 = vmatpush1.msra.mxu0 %v101
    %1413 = vmatprep.subr.mxu0 %v106
    %1414 = vmatpush1.msra.mxu0 %v105
    %1415 = vmatprep.subr.mxu0 %v110
    %1416 = vmatpush1.msra.mxu0 %v109
    %1417 = vmatprep.subr.mxu0 0.0
    %1418 = vmatpush1.msra.mxu0 0.0
    %1419 = vmatprep.subr.mxu0 0.0
    %1420 = vmatpush1.msra.mxu0 0.0
    %1421 = vmatprep.subr.mxu0 0.0
    %1422 = vmatpush1.msra.mxu0 0.0
    %1423 = vmatprep.subr.mxu0 0.0
    %1424 = vmatpush1.msra.mxu0 0.0
    %1425 = vmatprep.subr.mxu0 0.0
    %1426 = vmatpush1.msra.mxu0 0.0
    %1427 = vmatprep.subr.mxu0 0.0
    %1428 = vmatpush1.msra.mxu0 0.0
    %1429 = vmatprep.subr.mxu0 0.0
    %1430 = vmatpush1.msra.mxu0 0.0
    %1431 = vmatprep.subr.mxu0 0.0
    %1432 = vmatpush1.msra.mxu0 0.0
    %1433 = vmatprep.subr.mxu0 0.0
    %1434 = vmatpush1.msra.mxu0 0.0
    %1435 = vmatprep.subr.mxu0 0.0
    %1436 = vmatpush1.msra.mxu0 0.0
    %1437 = vmatprep.subr.mxu0 0.0
    %1438 = vmatpush1.msra.mxu0 0.0
    %1439 = vmatprep.subr.mxu0 0.0
    %1440 = vmatpush1.msra.mxu0 0.0
    %1441 = vmatprep.subr.mxu0 0.0
    %1442 = vmatpush1.msra.mxu0 0.0
    %1443 = vmatprep.subr.mxu0 0.0
    %1444 = vmatpush1.msra.mxu0 0.0
    %1445 = vmatprep.subr.mxu0 0.0
    %1446 = vmatpush1.msra.mxu0 0.0
    %1447 = vmatprep.subr.mxu0 0.0
    %1448 = vmatpush1.msra.mxu0 0.0
    %1449 = vmatprep.mubr.f32.mxu0 0.0
    %1450 = vmatmul.mubr.f32.gmra.mrb[0].mxu0 %v1378
    %v1451 = vpop.f32.mrb[0].mxu0
    %v1452 = vadd.f32 0.0, %v1451
    %v1453 = vpop.f32.mrb[0].mxu0
    %v1454 = vadd.f32 0.0, %v1453
    %1455 = vdwg.mxu0
    %1456 = vmatprep.subr.mxu0 %v52
    %1457 = vmatpush1.msra.mxu0 %v51
    %1458 = vmatprep.subr.mxu0 %v56
    %1459 = vmatpush1.msra.mxu0 %v55
    %1460 = vmatprep.subr.mxu0 %v60
    %1461 = vmatpush1.msra.mxu0 %v59
    %1462 = vmatprep.subr.mxu0 %v64
    %1463 = vmatpush1.msra.mxu0 %v63
    %1464 = vmatprep.subr.mxu0 %v68
    %1465 = vmatpush1.msra.mxu0 %v67
    %1466 = vmatprep.subr.mxu0 %v72
    %1467 = vmatpush1.msra.mxu0 %v71
    %1468 = vmatprep.subr.mxu0 %v76
    %1469 = vmatpush1.msra.mxu0 %v75
    %1470 = vmatprep.subr.mxu0 %v80
    %1471 = vmatpush1.msra.mxu0 %v79
    %1472 = vmatprep.subr.mxu0 %v84
    %1473 = vmatpush1.msra.mxu0 %v83
    %1474 = vmatprep.subr.mxu0 %v88
    %1475 = vmatpush1.msra.mxu0 %v87
    %1476 = vmatprep.subr.mxu0 %v92
    %1477 = vmatpush1.msra.mxu0 %v91
    %1478 = vmatprep.subr.mxu0 %v96
    %1479 = vmatpush1.msra.mxu0 %v95
    %1480 = vmatprep.subr.mxu0 %v100
    %1481 = vmatpush1.msra.mxu0 %v99
    %1482 = vmatprep.subr.mxu0 %v104
    %1483 = vmatpush1.msra.mxu0 %v103
    %1484 = vmatprep.subr.mxu0 %v108
    %1485 = vmatpush1.msra.mxu0 %v107
    %1486 = vmatprep.subr.mxu0 %v112
    %1487 = vmatpush1.msra.mxu0 %v111
    %1488 = vmatprep.subr.mxu0 0.0
    %1489 = vmatpush1.msra.mxu0 0.0
    %1490 = vmatprep.subr.mxu0 0.0
    %1491 = vmatpush1.msra.mxu0 0.0
    %1492 = vmatprep.subr.mxu0 0.0
    %1493 = vmatpush1.msra.mxu0 0.0
    %1494 = vmatprep.subr.mxu0 0.0
    %1495 = vmatpush1.msra.mxu0 0.0
    %1496 = vmatprep.subr.mxu0 0.0
    %1497 = vmatpush1.msra.mxu0 0.0
    %1498 = vmatprep.subr.mxu0 0.0
    %1499 = vmatpush1.msra.mxu0 0.0
    %1500 = vmatprep.subr.mxu0 0.0
    %1501 = vmatpush1.msra.mxu0 0.0
    %1502 = vmatprep.subr.mxu0 0.0
    %1503 = vmatpush1.msra.mxu0 0.0
    %1504 = vmatprep.subr.mxu0 0.0
    %1505 = vmatpush1.msra.mxu0 0.0
    %1506 = vmatprep.subr.mxu0 0.0
    %1507 = vmatpush1.msra.mxu0 0.0
    %1508 = vmatprep.subr.mxu0 0.0
    %1509 = vmatpush1.msra.mxu0 0.0
    %1510 = vmatprep.subr.mxu0 0.0
    %1511 = vmatpush1.msra.mxu0 0.0
    %1512 = vmatprep.subr.mxu0 0.0
    %1513 = vmatpush1.msra.mxu0 0.0
    %1514 = vmatprep.subr.mxu0 0.0
    %1515 = vmatpush1.msra.mxu0 0.0
    %1516 = vmatprep.subr.mxu0 0.0
    %1517 = vmatpush1.msra.mxu0 0.0
    %1518 = vmatprep.subr.mxu0 0.0
    %1519 = vmatpush1.msra.mxu0 0.0
    %1520 = vmatprep.mubr.f32.mxu0 0.0
    %1521 = vmatmul.mubr.f32.gmra.mrb[0].mxu0 %v1378
    %v1522 = vpop.f32.mrb[0].mxu0
    %v1523 = vadd.f32 0.0, %v1522
    %v1524 = vpop.f32.mrb[0].mxu0
    %v1525 = vadd.f32 0.0, %v1524
    %1526 = vdwg.mxu0
    %v1527 = vadd.f32 %v1381, %v1452
    %v1528 = vadd.f32 %v1382, %v1454
    %v1529 = vadd.f32 %v1383, %v1523
    %v1530 = vadd.f32 %v1384, %v1525
    %v1531 = vxor.u32 %v1527, 2147483648
    %v1532 = vxor.u32 %v1528, 2147483648
    %v1533 = vxor.u32 %v1529, 2147483648
    %v1534 = vmul.f32 %v1531, 1.442695
    %v1535 = vpow.pop %v1534
    %v1536 = vmul.f32 %v1532, 1.442695
    %v1537 = vpow.pop %v1536
    %v1538 = vmul.f32 %v1533, 1.442695
    %v1539 = vpow.pop %v1538
    %v1540 = vadd.f32 %v1535, 1.0
    %v1541 = vadd.f32 %v1537, 1.0
    %v1542 = vadd.f32 %v1539, 1.0
    %v1543 = vrcp.pop %v1540
    %v1544 = vmul.f32 1.0, %v1543
    %v1545 = vrcp.pop %v1541
    %v1546 = vmul.f32 1.0, %v1545
    %v1547 = vrcp.pop %v1542
    %v1548 = vmul.f32 1.0, %v1547
    %v1549 = vtanh.pop %v1530
    %v1550 = vmul.f32 %v1546, %v1379
    %v1551 = vmul.f32 %v1544, %v1549
    %v1552 = vadd.f32 %v1550, %v1551
    %v1553 = vtanh.pop %v1552
    %v1554 = vmul.f32 %v1548, %v1553
    %1555 = vst [vmem:[#allocation2] sm:$0xff] %v1554
    %1556 = vst [vmem:[#allocation3] sm:$0xff] %v1552
    %s1557 = scalar_lea.vmem [#allocation9], 56
    %1558 = vst [vmem:[%s1557] sm:$0xff] %v1554
    // Predicated region
    $region22: #{tpu_custom_call.1} parent=1 // pred_check
      %p1559 = pneg %p43
    $region23: #{tpu_custom_call.1} parent=1 // pred_check_branch
      %1561 = sbr.rel (%p1559) target = $region25
    $region24: #{tpu_custom_call.1} parent=1 // pred_region
      %v1562 = vld [vmem:[#allocation3] sm:$0xff]
      %1563 = vst [vmem:[#allocation10] sm:$0xff] %v1562
    $region25: #{tpu_custom_call.1} parent=1 // pred_fallthru
      _
    // Predicated region
    $region26: #{tpu_custom_call.1} parent=1 // pred_check
      _
    $region27: #{tpu_custom_call.1} parent=1 // pred_check_branch
      %1565 = sbr.rel (0) target = $region29
    $region28: #{tpu_custom_call.1} parent=1 // pred_region
      %s1567 = ssub.s32 1024, 1024
      %1568 = vsyncadd [#allocation6], %s1567
      %s1569 = sshll.u32 [#allocation9], 4
      %s1570 = int_to_ptr.vmem [resolvable:$true] %s1569
      %1575 = dma.vmem_to_hbm [thread:$0]  %s1570, 1024, %s2, [#allocation6], 128, 128, 8
    $region29: #{tpu_custom_call.1} parent=1 // pred_fallthru
      _
    // Predicated region
    $region30: #{tpu_custom_call.1} parent=1 // pred_check
      _
    $region31: #{tpu_custom_call.1} parent=1 // pred_check_branch
      %1577 = sbr.rel (0) target = $region33
    $region32: #{tpu_custom_call.1} parent=1 // pred_region
      %s1579 = ssub.s32 128, 128
      %1580 = vsyncadd [#allocation11], %s1579
      %s1582 = sshll.u32 [#allocation10], 4
      %s1583 = int_to_ptr.vmem [resolvable:$true] %s1582
      %1585 = dma.vmem_to_hbm [thread:$0]  %s1583, 128, %s3, [#allocation11]
    $region33: #{tpu_custom_call.1} parent=1 // pred_fallthru
      _
    // Predicated region
    $region34: #{tpu_custom_call.1} parent=1 // pred_check
      _
    $region35: #{tpu_custom_call.1} parent=1 // pred_check_branch
      %1587 = sbr.rel (0) target = $region37
    $region36: #{tpu_custom_call.1} parent=1 // pred_region
      %1588 = dma.done [#allocation6], 1024
    $region37: #{tpu_custom_call.1} parent=1 // pred_fallthru
      _
    // Predicated region
    $region38: #{tpu_custom_call.1} parent=1 // pred_check
      _
    $region39: #{tpu_custom_call.1} parent=1 // pred_check_branch
      %1590 = sbr.rel (0) target = $region41
    $region40: #{tpu_custom_call.1} parent=1 // pred_region
      %1591 = dma.done [#allocation11], 128
    $region41: #{tpu_custom_call.1} parent=1 // pred_fallthru
      _
    %1592 = vsyncpa [#allocation5], 1
    %1593 = vsyncpa [#allocation8], 1
    %1594 = vsyncpa [#allocation6], 1
    %1595 = vsyncpa [#allocation11], 1

</llo_original>
